<compile_context>
chip_gen: v6e
topology: v6e:2x2x1
jax: 0.10.0
libtpu: 0.0.40
codegen_flags: <defaults>
</compile_context>

<pallas_src>
import functools

import jax
import jax.numpy as jnp
from jax import lax
from jax.experimental import pallas as pl
from jax.experimental.pallas import tpu as pltpu


K1, K2, K3 = 8, 5, 3          # conv kernel sizes
C1, C2, C3 = 128, 256, 128    # conv output channels
HALO = (K2 - 1) + (K3 - 1)    # layer-1 rows recomputed per seq chunk (= 6)

MAX_B_TILE = 16               # batch rows per grid step (sublane dim of all tiles)
SEQ_TILE_MAX = 256            # seq positions processed per in-kernel chunk


def _fcn_fused_kernel(x_ref, w1_ref, s1_ref, h1_ref, w2_ref, s2_ref, h2_ref,
                      w3_ref, s3_ref, h3_ref, o_ref, a1_ref, a2_ref, *,
                      seq_len, seq_tile):
    """x_ref: (L, B, K1*C_in) f32; w*: (k*C_in, C_out) bf16; s*/h*: (1, C_out) f32.

    a1_ref: (seq_tile+6, B, C1) bf16 and a2_ref: (seq_tile+2, B, C2) bf16 scratch.
    o_ref: (B, C3) f32 pooled output.
    """
    b = o_ref.shape[0]
    bf16, f32 = jnp.bfloat16, jnp.float32

    # Hoist the tiny per-channel scale/shift loads out of the chunk loop.
    s1, h1 = s1_ref[...], h1_ref[...]
    s2, h2 = s2_ref[...], h2_ref[...]
    s3, h3 = s3_ref[...], h3_ref[...]

    def mm(lhs_bf16, w_ref, lo, hi):      # bf16 MXU matmul, f32 accumulate
        return jnp.dot(lhs_bf16, w_ref[lo:hi, :], preferred_element_type=f32)

    pool = jnp.zeros((b, C3), f32)
    n_chunks = -(-seq_len // seq_tile)

    for c in range(n_chunks):             # static unroll; every slice is static
        cs = c * seq_tile
        tc = min(seq_tile, seq_len - cs)

        # ---- layer 1: one matmul, K = K1*C_in. The K1 'same' halo is already
        # folded into the wrapper im2col; only the rows needed for this chunk's
        # layer-2/3 halos are (re)computed.  a1 row r <-> global position cs-3+r.
        glo1, ghi1 = max(cs - 3, 0), min(cs + tc + 3, seq_len)
        n1, o1 = ghi1 - glo1, glo1 - (cs - 3)
        xs = x_ref[glo1:ghi1, :, :].astype(bf16).reshape(n1 * b, -1)
        y1 = jnp.maximum(mm(xs, w1_ref, 0, w1_ref.shape[0]) * s1 + h1, 0.0)
        if o1 > 0:                                         # left sequence edge
            a1_ref[0:o1, :, :] = jnp.zeros((o1, b, C1), bf16)
        a1_ref[o1:o1 + n1, :, :] = y1.astype(bf16).reshape(n1, b, C1)
        if o1 + n1 < tc + HALO:                            # right sequence edge
            a1_ref[o1 + n1:tc + HALO, :, :] = jnp.zeros(
                (tc + HALO - o1 - n1, b, C1), bf16)

        # ---- layer 2: tap-pair matmuls (K = 256, 256, 128) accumulated in f32.
        # a2 row r <-> global position cs-1+r.
        glo2, ghi2 = max(cs - 1, 0), min(cs + tc + 1, seq_len)
        n2, o2 = ghi2 - glo2, glo2 - (cs - 1)

        def tap1(t):                                       # (n2, b, C1) bf16
            return a1_ref[o2 + t:o2 + t + n2, :, :]

        p01 = jnp.concatenate([tap1(0), tap1(1)], axis=-1).reshape(n2 * b, 2 * C1)
        p23 = jnp.concatenate([tap1(2), tap1(3)], axis=-1).reshape(n2 * b, 2 * C1)
        t4 = tap1(4).reshape(n2 * b, C1)
        y2 = (mm(p01, w2_ref, 0, 2 * C1) + mm(p23, w2_ref, 2 * C1, 4 * C1)
              + mm(t4, w2_ref, 4 * C1, 5 * C1))
        y2 = jnp.maximum(y2 * s2 + h2, 0.0)
        if o2 > 0:
            a2_ref[0:o2, :, :] = jnp.zeros((o2, b, C2), bf16)
        a2_ref[o2:o2 + n2, :, :] = y2.astype(bf16).reshape(n2, b, C2)
        if o2 + n2 < tc + (K3 - 1):
            a2_ref[o2 + n2:tc + (K3 - 1), :, :] = jnp.zeros(
                (tc + (K3 - 1) - o2 - n2, b, C2), bf16)

        # ---- layer 3: per-tap matmuls (K = C2 = 256, MXU-native) + pool partial sum.
        y3 = (mm(a2_ref[0:tc, :, :].reshape(tc * b, C2), w3_ref, 0, C2)
              + mm(a2_ref[1:tc + 1, :, :].reshape(tc * b, C2), w3_ref, C2, 2 * C2)
              + mm(a2_ref[2:tc + 2, :, :].reshape(tc * b, C2), w3_ref, 2 * C2, 3 * C2))
        y3 = jnp.maximum(y3 * s3 + h3, 0.0)
        pool = pool + y3.reshape(tc, b, C3).sum(axis=0)

    # AdaptiveAvgPool1d(1) + squeeze(2): lane/sublane-dense (B, 128) f32 store.
    o_ref[...] = pool * (1.0 / seq_len)


def _im2col_layer1(x_nlc, k):
    """(N, L, C) -> (N, L, k*C); 'same' zero padding folded in; tap-major order."""
    _, seq_len, _ = x_nlc.shape
    pad_l = (k - 1) // 2
    xp = jnp.pad(x_nlc, ((0, 0), (pad_l, k - 1 - pad_l), (0, 0)))
    return jnp.concatenate([xp[:, t:t + seq_len, :] for t in range(k)], axis=-1)


def fcn_forward(x_nlc, w1, s1, h1, w2, s2, h2, w3, s3, h3, *,
                max_b_tile=MAX_B_TILE, seq_tile_max=SEQ_TILE_MAX):
    """x_nlc: (N, L, C_in) f32; w*: (k*C_in, C_out) bf16; s*/h*: (1, C_out) f32."""
    n, seq_len, c_in = x_nlc.shape
    kc = K1 * c_in

    # Layer-1 im2col in the wrapper; (seq, batch, feat) layout puts batch on
    # sublanes inside the kernel, making the tap slices vreg-aligned.
    cols = jnp.transpose(_im2col_layer1(x_nlc, K1), (1, 0, 2))   # (L, N, kc)

    if n <= max_b_tile:
        b_tile, n_pad = n, n
    else:
        b_tile = max_b_tile
        n_pad = pl.cdiv(n, b_tile) * b_tile
        if n_pad != n:
            # TODO(synk): handle the ragged last batch tile with a masked store
            #             instead of zero-padding the (small) packed input.
            cols = jnp.pad(cols, ((0, 0), (0, n_pad - n), (0, 0)))

    seq_tile = min(seq_len, seq_tile_max)
    kernel = functools.partial(_fcn_fused_kernel, seq_len=seq_len,
                               seq_tile=seq_tile)

    out = pl.pallas_call(
        kernel,
        out_shape=jax.ShapeDtypeStruct((n_pad, C3), jnp.float32),
        grid_spec=pltpu.PrefetchScalarGridSpec(
            num_scalar_prefetch=0,
            grid=(n_pad // b_tile,),
            in_specs=[
                pl.BlockSpec((seq_len, b_tile, kc), lambda i: (0, i, 0)),
                # Grid-constant operands: fetched once (constant index_map).
                # TODO(synk): single-buffer them (pipeline_mode=pl.Buffered(1))
                #             to shave ~1 MiB of VMEM on v7x.
                pl.BlockSpec((kc, C1), lambda i: (0, 0)),
                pl.BlockSpec((1, C1), lambda i: (0, 0)),
                pl.BlockSpec((1, C1), lambda i: (0, 0)),
                pl.BlockSpec((K2 * C1, C2), lambda i: (0, 0)),
                pl.BlockSpec((1, C2), lambda i: (0, 0)),
                pl.BlockSpec((1, C2), lambda i: (0, 0)),
                pl.BlockSpec((K3 * C2, C3), lambda i: (0, 0)),
                pl.BlockSpec((1, C3), lambda i: (0, 0)),
                pl.BlockSpec((1, C3), lambda i: (0, 0)),
            ],
            out_specs=pl.BlockSpec((b_tile, C3), lambda i: (i, 0)),
            scratch_shapes=[
                pltpu.VMEM((seq_tile + HALO, b_tile, C1), jnp.bfloat16),
                pltpu.VMEM((seq_tile + (K3 - 1), b_tile, C2), jnp.bfloat16),
            ]),
        compiler_params=pltpu.CompilerParams(
            dimension_semantics=("parallel",),
            vmem_limit_bytes=48 * 1024 * 1024),
    )(cols, w1, s1, h1, w2, s2, h2, w3, s3, h3)
    return out[:n]


def _init_conv(key, c_in, c_out, k):
    # PyTorch Conv1d default init: U(-1/sqrt(fan_in), 1/sqrt(fan_in))
    kw, kb = jax.random.split(key)
    bound = 1.0 / (c_in * k) ** 0.5
    w = jax.random.uniform(kw, (k, c_in, c_out), jnp.float32, -bound, bound)
    b = jax.random.uniform(kb, (c_out,), jnp.float32, -bound, bound)
    return w, b


def _fold_bn(conv_bias, c_out, eps=1e-5):
    # BN eval mode with default buffers: mean=0, var=1, gamma=1, beta=0.
    gamma = jnp.ones((c_out,), jnp.float32)
    beta = jnp.zeros((c_out,), jnp.float32)
    mean = jnp.zeros((c_out,), jnp.float32)
    var = jnp.ones((c_out,), jnp.float32)
    scale = gamma / jnp.sqrt(var + eps)
    shift = beta + (conv_bias - mean) * scale
    return scale.reshape(1, c_out), shift.reshape(1, c_out)


class FCNPallas:
    def __init__(self, input_size, num_classes, key):
        self.num_classes = num_classes  # unused in forward (matches PyTorch FCN)
        k1, k2, k3 = jax.random.split(key, 3)
        self.w1, b1 = _init_conv(k1, input_size, C1, K1)
        self.s1, self.h1 = _fold_bn(b1, C1)
        self.w2, b2 = _init_conv(k2, C1, C2, K2)
        self.s2, self.h2 = _fold_bn(b2, C2)
        self.w3, b3 = _init_conv(k3, C2, C3, K3)
        self.s3, self.h3 = _fold_bn(b3, C3)
        # (k, C_in, C_out) -> (k*C_in, C_out), row = tap*C_in + chan, matching the
        # in-kernel tap-slice / im2col ordering.  bf16 copies feed the MXU.
        self.w1_2d = self.w1.reshape(K1 * input_size, C1).astype(jnp.bfloat16)
        self.w2_2d = self.w2.reshape(K2 * C1, C2).astype(jnp.bfloat16)
        self.w3_2d = self.w3.reshape(K3 * C2, C3).astype(jnp.bfloat16)

    def __call__(self, x_ncl, **tile_kwargs):
        x = jnp.transpose(x_ncl, (0, 2, 1))  # NCL -> NLC (channels on lanes)
        return fcn_forward(x, self.w1_2d, self.s1, self.h1,
                           self.w2_2d, self.s2, self.h2,
                           self.w3_2d, self.s3, self.h3, **tile_kwargs)  # (N, 128)


def _reference_forward(model, x_ncl):
    """Pure-JAX f32 reference (lax conv, NCL layout) for validation."""
    def block(x, w, scale, shift, k):
        w_oik = jnp.transpose(w, (2, 1, 0))  # (k,Cin,Cout) -> (Cout,Cin,k)
        pad_l = (k - 1) // 2
        y = lax.conv_general_dilated(
            x, w_oik, window_strides=(1,), padding=[(pad_l, k - 1 - pad_l)],
            dimension_numbers=("NCH", "OIH", "NCH"))
        y = y * scale.reshape(1, -1, 1) + shift.reshape(1, -1, 1)
        return jnp.maximum(y, 0.0)

    y = block(x_ncl, model.w1, model.s1, model.h1, K1)
    y = block(y, model.w2, model.s2, model.h2, K2)
    y = block(y, model.w3, model.s3, model.h3, K3)
    return jnp.mean(y, axis=2)  # adaptive avg pool to 1 + squeeze


if __name__ == "__main__":
    key = jax.random.PRNGKey(0)
    k_param, k_x, k_x2 = jax.random.split(key, 3)

    batch, input_size, seq_len, num_classes = 2, 4, 16, 10
    model = FCNPallas(input_size, num_classes, k_param)

    x = jax.random.normal(k_x, (batch, input_size, seq_len), jnp.float32)  # NCL
    out = jax.block_until_ready(model(x))
    assert out.shape == (batch, C3), out.shape
    ref = jax.block_until_ready(_reference_forward(model, x))
    err = float(jnp.max(jnp.abs(out - ref)))
    # bf16 MXU operands with f32 accumulation -> tolerance loosened vs pure f32.
    assert jnp.allclose(out, ref, rtol=2e-2, atol=2e-2), err

    # Second (still small) shape exercising batch tiling + the multi-chunk seq path.
    x2 = jax.random.normal(k_x2, (10, input_size, 20), jnp.float32)
    out2 = jax.block_until_ready(model(x2, max_b_tile=8, seq_tile_max=8))
    assert out2.shape == (10, C3), out2.shape
    ref2 = jax.block_until_ready(_reference_forward(model, x2))
    err2 = float(jnp.max(jnp.abs(out2 - ref2)))
    assert jnp.allclose(out2, ref2, rtol=2e-2, atol=2e-2), err2

    print("KERNEL_OK")
</pallas_src>

<mosaic_0001>
module attributes {stable_mosaic.version = 11 : i64} {
  func.func @_fcn_fused_kernel(%arg0: i32, %arg1: memref<16x2x32xf32, #tpu.memory_space<vmem>>, %arg2: memref<32x128xbf16, #tpu.memory_space<vmem>>, %arg3: memref<1x128xf32, #tpu.memory_space<vmem>>, %arg4: memref<1x128xf32, #tpu.memory_space<vmem>>, %arg5: memref<640x256xbf16, #tpu.memory_space<vmem>>, %arg6: memref<1x256xf32, #tpu.memory_space<vmem>>, %arg7: memref<1x256xf32, #tpu.memory_space<vmem>>, %arg8: memref<768x128xbf16, #tpu.memory_space<vmem>>, %arg9: memref<1x128xf32, #tpu.memory_space<vmem>>, %arg10: memref<1x128xf32, #tpu.memory_space<vmem>>, %arg11: memref<2x128xf32, #tpu.memory_space<vmem>>, %arg12: memref<22x2x128xbf16, #tpu.memory_space<vmem>>, %arg13: memref<18x2x256xbf16, #tpu.memory_space<vmem>>) attributes {dimension_semantics = [#tpu.dimension_semantics<parallel>], iteration_bounds = array<i64: 1>, scalar_prefetch = 0 : i64, scratch_operands = 2 : i64, tpu.core_type = #tpu.core_type<tc>, window_params = [{transform_indices = @transform_0, window_bounds = array<i64: 16, 2, 32>}, {pipeline_mode = #tpu.pipeline_mode<synchronous>, transform_indices = @transform_1, window_bounds = array<i64: 32, 128>}, {pipeline_mode = #tpu.pipeline_mode<synchronous>, transform_indices = @transform_2, window_bounds = array<i64: 1, 128>}, {pipeline_mode = #tpu.pipeline_mode<synchronous>, transform_indices = @transform_3, window_bounds = array<i64: 1, 128>}, {pipeline_mode = #tpu.pipeline_mode<synchronous>, transform_indices = @transform_4, window_bounds = array<i64: 640, 256>}, {pipeline_mode = #tpu.pipeline_mode<synchronous>, transform_indices = @transform_5, window_bounds = array<i64: 1, 256>}, {pipeline_mode = #tpu.pipeline_mode<synchronous>, transform_indices = @transform_6, window_bounds = array<i64: 1, 256>}, {pipeline_mode = #tpu.pipeline_mode<synchronous>, transform_indices = @transform_7, window_bounds = array<i64: 768, 128>}, {pipeline_mode = #tpu.pipeline_mode<synchronous>, transform_indices = @transform_8, window_bounds = array<i64: 1, 128>}, {pipeline_mode = #tpu.pipeline_mode<synchronous>, transform_indices = @transform_9, window_bounds = array<i64: 1, 128>}, {transform_indices = @transform_10, window_bounds = array<i64: 2, 128>}]} {
    %c0 = arith.constant 0 : index
    %c0_0 = arith.constant 0 : index
    %0 = vector.load %arg3[%c0, %c0_0] : memref<1x128xf32, #tpu.memory_space<vmem>>, vector<1x128xf32>
    %c0_1 = arith.constant 0 : index
    %c0_2 = arith.constant 0 : index
    %1 = vector.load %arg4[%c0_1, %c0_2] : memref<1x128xf32, #tpu.memory_space<vmem>>, vector<1x128xf32>
    %c0_3 = arith.constant 0 : index
    %c0_4 = arith.constant 0 : index
    %2 = vector.load %arg6[%c0_3, %c0_4] : memref<1x256xf32, #tpu.memory_space<vmem>>, vector<1x256xf32>
    %c0_5 = arith.constant 0 : index
    %c0_6 = arith.constant 0 : index
    %3 = vector.load %arg7[%c0_5, %c0_6] : memref<1x256xf32, #tpu.memory_space<vmem>>, vector<1x256xf32>
    %c0_7 = arith.constant 0 : index
    %c0_8 = arith.constant 0 : index
    %4 = vector.load %arg9[%c0_7, %c0_8] : memref<1x128xf32, #tpu.memory_space<vmem>>, vector<1x128xf32>
    %c0_9 = arith.constant 0 : index
    %c0_10 = arith.constant 0 : index
    %5 = vector.load %arg10[%c0_9, %c0_10] : memref<1x128xf32, #tpu.memory_space<vmem>>, vector<1x128xf32>
    %cst = arith.constant 0.000000e+00 : f32
    %6 = vector.broadcast %cst : f32 to vector<2x128xf32>
    %c0_11 = arith.constant 0 : index
    %c0_12 = arith.constant 0 : index
    %c0_13 = arith.constant 0 : index
    %7 = vector.load %arg1[%c0_11, %c0_12, %c0_13] : memref<16x2x32xf32, #tpu.memory_space<vmem>>, vector<16x2x32xf32>
    %8 = arith.truncf %7 : vector<16x2x32xf32> to vector<16x2x32xbf16>
    %9 = vector.shape_cast %8 : vector<16x2x32xbf16> to vector<32x32xbf16>
    %c0_14 = arith.constant 0 : index
    %c0_15 = arith.constant 0 : index
    %10 = vector.load %arg2[%c0_14, %c0_15] : memref<32x128xbf16, #tpu.memory_space<vmem>>, vector<32x128xbf16>
    %cst_16 = arith.constant dense<0.000000e+00> : vector<32x128xf32>
    %11 = tpu.matmul %9, %10, %cst_16 {dimension_numbers = #tpu.dot_dimension_numbers<[1], [0], [0], [1], [0, 0, 1, 1], [], []>} : vector<32x32xbf16>, vector<32x128xbf16>, vector<32x128xf32> -> vector<32x128xf32>
    %12 = vector.broadcast %0 : vector<1x128xf32> to vector<32x128xf32>
    %13 = arith.mulf %11, %12 : vector<32x128xf32>
    %14 = vector.broadcast %1 : vector<1x128xf32> to vector<32x128xf32>
    %15 = arith.addf %13, %14 : vector<32x128xf32>
    %cst_17 = arith.constant 0.000000e+00 : f32
    %16 = vector.broadcast %cst_17 : f32 to vector<32x128xf32>
    %17 = arith.maximumf %15, %16 : vector<32x128xf32>
    %cst_18 = arith.constant 0.000000e+00 : bf16
    %18 = vector.broadcast %cst_18 : bf16 to vector<3x2x128xbf16>
    %c0_19 = arith.constant 0 : index
    %c0_20 = arith.constant 0 : index
    %c0_21 = arith.constant 0 : index
    %19 = vector.load %arg12[%c0_19, %c0_20, %c0_21] : memref<22x2x128xbf16, #tpu.memory_space<vmem>>, vector<3x2x128xbf16>
    tpu.vector_store %arg12[%c0_19, %c0_20, %c0_21], %18 {strides = array<i32>} : memref<22x2x128xbf16, #tpu.memory_space<vmem>>, vector<3x2x128xbf16>,
    %20 = arith.truncf %17 : vector<32x128xf32> to vector<32x128xbf16>
    %21 = vector.shape_cast %20 : vector<32x128xbf16> to vector<16x2x128xbf16>
    %c3 = arith.constant 3 : index
    %c0_22 = arith.constant 0 : index
    %c0_23 = arith.constant 0 : index
    %22 = vector.load %arg12[%c3, %c0_22, %c0_23] : memref<22x2x128xbf16, #tpu.memory_space<vmem>>, vector<16x2x128xbf16>
    tpu.vector_store %arg12[%c3, %c0_22, %c0_23], %21 {strides = array<i32>} : memref<22x2x128xbf16, #tpu.memory_space<vmem>>, vector<16x2x128xbf16>,
    %cst_24 = arith.constant 0.000000e+00 : bf16
    %23 = vector.broadcast %cst_24 : bf16 to vector<3x2x128xbf16>
    %c19 = arith.constant 19 : index
    %c0_25 = arith.constant 0 : index
    %c0_26 = arith.constant 0 : index
    %24 = vector.load %arg12[%c19, %c0_25, %c0_26] : memref<22x2x128xbf16, #tpu.memory_space<vmem>>, vector<3x2x128xbf16>
    tpu.vector_store %arg12[%c19, %c0_25, %c0_26], %23 {strides = array<i32>} : memref<22x2x128xbf16, #tpu.memory_space<vmem>>, vector<3x2x128xbf16>,
    %c1 = arith.constant 1 : index
    %c0_27 = arith.constant 0 : index
    %c0_28 = arith.constant 0 : index
    %25 = vector.load %arg12[%c1, %c0_27, %c0_28] : memref<22x2x128xbf16, #tpu.memory_space<vmem>>, vector<16x2x128xbf16>
    %c2 = arith.constant 2 : index
    %c0_29 = arith.constant 0 : index
    %c0_30 = arith.constant 0 : index
    %26 = vector.load %arg12[%c2, %c0_29, %c0_30] : memref<22x2x128xbf16, #tpu.memory_space<vmem>>, vector<16x2x128xbf16>
    %27 = tpu.concatenate %25, %26 in 2 : vector<16x2x128xbf16>, vector<16x2x128xbf16> -> vector<16x2x256xbf16>
    %28 = vector.shape_cast %27 : vector<16x2x256xbf16> to vector<32x256xbf16>
    %c3_31 = arith.constant 3 : index
    %c0_32 = arith.constant 0 : index
    %c0_33 = arith.constant 0 : index
    %29 = vector.load %arg12[%c3_31, %c0_32, %c0_33] : memref<22x2x128xbf16, #tpu.memory_space<vmem>>, vector<16x2x128xbf16>
    %c4 = arith.constant 4 : index
    %c0_34 = arith.constant 0 : index
    %c0_35 = arith.constant 0 : index
    %30 = vector.load %arg12[%c4, %c0_34, %c0_35] : memref<22x2x128xbf16, #tpu.memory_space<vmem>>, vector<16x2x128xbf16>
    %31 = tpu.concatenate %29, %30 in 2 : vector<16x2x128xbf16>, vector<16x2x128xbf16> -> vector<16x2x256xbf16>
    %32 = vector.shape_cast %31 : vector<16x2x256xbf16> to vector<32x256xbf16>
    %c5 = arith.constant 5 : index
    %c0_36 = arith.constant 0 : index
    %c0_37 = arith.constant 0 : index
    %33 = vector.load %arg12[%c5, %c0_36, %c0_37] : memref<22x2x128xbf16, #tpu.memory_space<vmem>>, vector<16x2x128xbf16>
    %34 = vector.shape_cast %33 : vector<16x2x128xbf16> to vector<32x128xbf16>
    %c0_38 = arith.constant 0 : index
    %c0_39 = arith.constant 0 : index
    %35 = vector.load %arg5[%c0_38, %c0_39] : memref<640x256xbf16, #tpu.memory_space<vmem>>, vector<256x256xbf16>
    %cst_40 = arith.constant dense<0.000000e+00> : vector<32x256xf32>
    %36 = tpu.matmul %28, %35, %cst_40 {dimension_numbers = #tpu.dot_dimension_numbers<[1], [0], [0], [1], [0, 0, 1, 1], [], []>} : vector<32x256xbf16>, vector<256x256xbf16>, vector<32x256xf32> -> vector<32x256xf32>
    %c256 = arith.constant 256 : index
    %c0_41 = arith.constant 0 : index
    %37 = vector.load %arg5[%c256, %c0_41] : memref<640x256xbf16, #tpu.memory_space<vmem>>, vector<256x256xbf16>
    %cst_42 = arith.constant dense<0.000000e+00> : vector<32x256xf32>
    %38 = tpu.matmul %32, %37, %cst_42 {dimension_numbers = #tpu.dot_dimension_numbers<[1], [0], [0], [1], [0, 0, 1, 1], [], []>} : vector<32x256xbf16>, vector<256x256xbf16>, vector<32x256xf32> -> vector<32x256xf32>
    %39 = arith.addf %36, %38 : vector<32x256xf32>
    %c512 = arith.constant 512 : index
    %c0_43 = arith.constant 0 : index
    %40 = vector.load %arg5[%c512, %c0_43] : memref<640x256xbf16, #tpu.memory_space<vmem>>, vector<128x256xbf16>
    %cst_44 = arith.constant dense<0.000000e+00> : vector<32x256xf32>
    %41 = tpu.matmul %34, %40, %cst_44 {dimension_numbers = #tpu.dot_dimension_numbers<[1], [0], [0], [1], [0, 0, 1, 1], [], []>} : vector<32x128xbf16>, vector<128x256xbf16>, vector<32x256xf32> -> vector<32x256xf32>
    %42 = arith.addf %39, %41 : vector<32x256xf32>
    %43 = vector.broadcast %2 : vector<1x256xf32> to vector<32x256xf32>
    %44 = arith.mulf %42, %43 : vector<32x256xf32>
    %45 = vector.broadcast %3 : vector<1x256xf32> to vector<32x256xf32>
    %46 = arith.addf %44, %45 : vector<32x256xf32>
    %cst_45 = arith.constant 0.000000e+00 : f32
    %47 = vector.broadcast %cst_45 : f32 to vector<32x256xf32>
    %48 = arith.maximumf %46, %47 : vector<32x256xf32>
    %cst_46 = arith.constant 0.000000e+00 : bf16
    %49 = vector.broadcast %cst_46 : bf16 to vector<1x2x256xbf16>
    %c0_47 = arith.constant 0 : index
    %c0_48 = arith.constant 0 : index
    %c0_49 = arith.constant 0 : index
    %50 = vector.load %arg13[%c0_47, %c0_48, %c0_49] : memref<18x2x256xbf16, #tpu.memory_space<vmem>>, vector<1x2x256xbf16>
    tpu.vector_store %arg13[%c0_47, %c0_48, %c0_49], %49 {strides = array<i32>} : memref<18x2x256xbf16, #tpu.memory_space<vmem>>, vector<1x2x256xbf16>,
    %51 = arith.truncf %48 : vector<32x256xf32> to vector<32x256xbf16>
    %52 = vector.shape_cast %51 : vector<32x256xbf16> to vector<16x2x256xbf16>
    %c1_50 = arith.constant 1 : index
    %c0_51 = arith.constant 0 : index
    %c0_52 = arith.constant 0 : index
    %53 = vector.load %arg13[%c1_50, %c0_51, %c0_52] : memref<18x2x256xbf16, #tpu.memory_space<vmem>>, vector<16x2x256xbf16>
    tpu.vector_store %arg13[%c1_50, %c0_51, %c0_52], %52 {strides = array<i32>} : memref<18x2x256xbf16, #tpu.memory_space<vmem>>, vector<16x2x256xbf16>,
    %cst_53 = arith.constant 0.000000e+00 : bf16
    %54 = vector.broadcast %cst_53 : bf16 to vector<1x2x256xbf16>
    %c17 = arith.constant 17 : index
    %c0_54 = arith.constant 0 : index
    %c0_55 = arith.constant 0 : index
    %55 = vector.load %arg13[%c17, %c0_54, %c0_55] : memref<18x2x256xbf16, #tpu.memory_space<vmem>>, vector<1x2x256xbf16>
    tpu.vector_store %arg13[%c17, %c0_54, %c0_55], %54 {strides = array<i32>} : memref<18x2x256xbf16, #tpu.memory_space<vmem>>, vector<1x2x256xbf16>,
    %c0_56 = arith.constant 0 : index
    %c0_57 = arith.constant 0 : index
    %c0_58 = arith.constant 0 : index
    %56 = vector.load %arg13[%c0_56, %c0_57, %c0_58] : memref<18x2x256xbf16, #tpu.memory_space<vmem>>, vector<16x2x256xbf16>
    %57 = vector.shape_cast %56 : vector<16x2x256xbf16> to vector<32x256xbf16>
    %c0_59 = arith.constant 0 : index
    %c0_60 = arith.constant 0 : index
    %58 = vector.load %arg8[%c0_59, %c0_60] : memref<768x128xbf16, #tpu.memory_space<vmem>>, vector<256x128xbf16>
    %cst_61 = arith.constant dense<0.000000e+00> : vector<32x128xf32>
    %59 = tpu.matmul %57, %58, %cst_61 {dimension_numbers = #tpu.dot_dimension_numbers<[1], [0], [0], [1], [0, 0, 1, 1], [], []>} : vector<32x256xbf16>, vector<256x128xbf16>, vector<32x128xf32> -> vector<32x128xf32>
    %c1_62 = arith.constant 1 : index
    %c0_63 = arith.constant 0 : index
    %c0_64 = arith.constant 0 : index
    %60 = vector.load %arg13[%c1_62, %c0_63, %c0_64] : memref<18x2x256xbf16, #tpu.memory_space<vmem>>, vector<16x2x256xbf16>
    %61 = vector.shape_cast %60 : vector<16x2x256xbf16> to vector<32x256xbf16>
    %c256_65 = arith.constant 256 : index
    %c0_66 = arith.constant 0 : index
    %62 = vector.load %arg8[%c256_65, %c0_66] : memref<768x128xbf16, #tpu.memory_space<vmem>>, vector<256x128xbf16>
    %cst_67 = arith.constant dense<0.000000e+00> : vector<32x128xf32>
    %63 = tpu.matmul %61, %62, %cst_67 {dimension_numbers = #tpu.dot_dimension_numbers<[1], [0], [0], [1], [0, 0, 1, 1], [], []>} : vector<32x256xbf16>, vector<256x128xbf16>, vector<32x128xf32> -> vector<32x128xf32>
    %64 = arith.addf %59, %63 : vector<32x128xf32>
    %c2_68 = arith.constant 2 : index
    %c0_69 = arith.constant 0 : index
    %c0_70 = arith.constant 0 : index
    %65 = vector.load %arg13[%c2_68, %c0_69, %c0_70] : memref<18x2x256xbf16, #tpu.memory_space<vmem>>, vector<16x2x256xbf16>
    %66 = vector.shape_cast %65 : vector<16x2x256xbf16> to vector<32x256xbf16>
    %c512_71 = arith.constant 512 : index
    %c0_72 = arith.constant 0 : index
    %67 = vector.load %arg8[%c512_71, %c0_72] : memref<768x128xbf16, #tpu.memory_space<vmem>>, vector<256x128xbf16>
    %cst_73 = arith.constant dense<0.000000e+00> : vector<32x128xf32>
    %68 = tpu.matmul %66, %67, %cst_73 {dimension_numbers = #tpu.dot_dimension_numbers<[1], [0], [0], [1], [0, 0, 1, 1], [], []>} : vector<32x256xbf16>, vector<256x128xbf16>, vector<32x128xf32> -> vector<32x128xf32>
    %69 = arith.addf %64, %68 : vector<32x128xf32>
    %70 = vector.broadcast %4 : vector<1x128xf32> to vector<32x128xf32>
    %71 = arith.mulf %69, %70 : vector<32x128xf32>
    %72 = vector.broadcast %5 : vector<1x128xf32> to vector<32x128xf32>
    %73 = arith.addf %71, %72 : vector<32x128xf32>
    %cst_74 = arith.constant 0.000000e+00 : f32
    %74 = vector.broadcast %cst_74 : f32 to vector<32x128xf32>
    %75 = arith.maximumf %73, %74 : vector<32x128xf32>
    %76 = vector.shape_cast %75 : vector<32x128xf32> to vector<16x2x128xf32>
    %cst_75 = arith.constant dense<0.000000e+00> : vector<2x128xf32>
    %77 = vector.multi_reduction <add>, %76, %cst_75 [0] : vector<16x2x128xf32> to vector<2x128xf32>
    %78 = arith.addf %6, %77 : vector<2x128xf32>
    %cst_76 = arith.constant 6.250000e-02 : f32
    %79 = vector.broadcast %cst_76 : f32 to vector<2x128xf32>
    %80 = arith.mulf %78, %79 : vector<2x128xf32>
    %c0_77 = arith.constant 0 : index
    %c0_78 = arith.constant 0 : index
    %81 = vector.load %arg11[%c0_77, %c0_78] : memref<2x128xf32, #tpu.memory_space<vmem>>, vector<2x128xf32>
    tpu.vector_store %arg11[%c0_77, %c0_78], %80 {strides = array<i32>} : memref<2x128xf32, #tpu.memory_space<vmem>>, vector<2x128xf32>,
    return
  }
  func.func @transform_0(%arg0: i32) -> (i32, i32, i32) {
    %c0_i32 = arith.constant 0 : i32
    %c0_i32_0 = arith.constant 0 : i32
    %c0_i32_1 = arith.constant 0 : i32
    return %c0_i32, %arg0, %c0_i32_0 : i32, i32, i32
  }
  func.func @transform_1(%arg0: i32) -> (i32, i32) {
    %c0_i32 = arith.constant 0 : i32
    %c0_i32_0 = arith.constant 0 : i32
    %c0_i32_1 = arith.constant 0 : i32
    return %c0_i32, %c0_i32_0 : i32, i32
  }
  func.func @transform_2(%arg0: i32) -> (i32, i32) {
    %c0_i32 = arith.constant 0 : i32
    %c0_i32_0 = arith.constant 0 : i32
    %c0_i32_1 = arith.constant 0 : i32
    return %c0_i32, %c0_i32_0 : i32, i32
  }
  func.func @transform_3(%arg0: i32) -> (i32, i32) {
    %c0_i32 = arith.constant 0 : i32
    %c0_i32_0 = arith.constant 0 : i32
    %c0_i32_1 = arith.constant 0 : i32
    return %c0_i32, %c0_i32_0 : i32, i32
  }
  func.func @transform_4(%arg0: i32) -> (i32, i32) {
    %c0_i32 = arith.constant 0 : i32
    %c0_i32_0 = arith.constant 0 : i32
    %c0_i32_1 = arith.constant 0 : i32
    return %c0_i32, %c0_i32_0 : i32, i32
  }
  func.func @transform_5(%arg0: i32) -> (i32, i32) {
    %c0_i32 = arith.constant 0 : i32
    %c0_i32_0 = arith.constant 0 : i32
    %c0_i32_1 = arith.constant 0 : i32
    return %c0_i32, %c0_i32_0 : i32, i32
  }
  func.func @transform_6(%arg0: i32) -> (i32, i32) {
    %c0_i32 = arith.constant 0 : i32
    %c0_i32_0 = arith.constant 0 : i32
    %c0_i32_1 = arith.constant 0 : i32
    return %c0_i32, %c0_i32_0 : i32, i32
  }
  func.func @transform_7(%arg0: i32) -> (i32, i32) {
    %c0_i32 = arith.constant 0 : i32
    %c0_i32_0 = arith.constant 0 : i32
    %c0_i32_1 = arith.constant 0 : i32
    return %c0_i32, %c0_i32_0 : i32, i32
  }
  func.func @transform_8(%arg0: i32) -> (i32, i32) {
    %c0_i32 = arith.constant 0 : i32
    %c0_i32_0 = arith.constant 0 : i32
    %c0_i32_1 = arith.constant 0 : i32
    return %c0_i32, %c0_i32_0 : i32, i32
  }
  func.func @transform_9(%arg0: i32) -> (i32, i32) {
    %c0_i32 = arith.constant 0 : i32
    %c0_i32_0 = arith.constant 0 : i32
    %c0_i32_1 = arith.constant 0 : i32
    return %c0_i32, %c0_i32_0 : i32, i32
  }
  func.func @transform_10(%arg0: i32) -> (i32, i32) {
    %c0_i32 = arith.constant 0 : i32
    %c0_i32_0 = arith.constant 0 : i32
    return %arg0, %c0_i32 : i32, i32
  }
}

</mosaic_0001>

<llo_original>
// kernel: tpu_custom_call.1
$region0: #{tpu_custom_call.1}
  #allocation0 [shape = 'u32[]', space=smem, size = 0x4, offset = 0x4, fixed_abs, tag = 'smem constant byte address 0x4 - core index']
  #allocation1 [shape = 'u32[144,128]{1,0:T(1,128)}', space=vmem, size = 0x12000, scoped, tag = 'internal scratch']
  #allocation2 [shape = 'bf16[22,2,128]{2,1,0:T(2,128)(2,1)}', space=vmem, size = 0x2c00, scoped, tag = 'scratch operand']
  #allocation3 [shape = 'bf16[18,2,256]{2,1,0:T(2,128)(2,1)}', space=vmem, size = 0x4800, scoped, tag = 'scratch operand']
  %s0 = inlined_call_operand.hbm [shape: f32[16,2,32], index: 0, kind: input, shape index: {}]
  %s1 = inlined_call_operand.hbm [shape: bf16[32,128], index: 1, kind: input, shape index: {}]
  %s2 = inlined_call_operand.vmem [shape: f32[1,128], index: 2, kind: input, shape index: {}]
  %s3 = inlined_call_operand.hbm [shape: f32[1,128], index: 3, kind: input, shape index: {}]
  %s4 = inlined_call_operand.hbm [shape: bf16[640,256], index: 4, kind: input, shape index: {}]
  %s5 = inlined_call_operand.vmem [shape: f32[1,256], index: 5, kind: input, shape index: {}]
  %s6 = inlined_call_operand.vmem [shape: f32[1,256], index: 6, kind: input, shape index: {}]
  %s7 = inlined_call_operand.hbm [shape: bf16[768,128], index: 7, kind: input, shape index: {}]
  %s8 = inlined_call_operand.vmem [shape: f32[1,128], index: 8, kind: input, shape index: {}]
  %s9 = inlined_call_operand.vmem [shape: f32[1,128], index: 9, kind: input, shape index: {}]
  %s10 = inlined_call_operand.hbm [shape: f32[2,128], index: 10, kind: output, shape index: {}]
  %s11 = sld [smem:[#allocation0]]
  $region70: #{tpu_custom_call.1} parent=0
    _
  %s13 = ssub.s32 1, %s11
  %s14 = scalar_select 0, %s13, %s11
  $region1: #{tpu_custom_call.1} parent=0
    #allocation4 [shape = 'u8[16384]{0}', space=vmem, size = 0x4000, scoped, tag = 'input window, operand 0, single buffered']
    #allocation5 [shape = 's32[1]{0}', space=sflag, size = 0x4, scoped, tag = 'scoped memory for tpu_custom_call.1']
    #allocation6 [shape = 's32[1]{0}', space=sflag, size = 0x4, scoped, tag = 'scoped memory for tpu_custom_call.1']
    #allocation7 [shape = 'u8[8192]{0}', space=vmem, size = 0x2000, scoped, tag = 'input window, operand 1, single buffered']
    #allocation8 [shape = 's32[1]{0}', space=sflag, size = 0x4, scoped, tag = 'scoped memory for tpu_custom_call.1']
    #allocation9 [shape = 'u8[512]{0}', space=vmem, size = 0x400, scoped, tag = 'input window, operand 3, single buffered']
    #allocation10 [shape = 'u8[327680]{0}', space=vmem, size = 0x50000, scoped, tag = 'input window, operand 4, single buffered']
    #allocation11 [shape = 's32[1]{0}', space=sflag, size = 0x4, scoped, tag = 'scoped memory for tpu_custom_call.1']
    #allocation12 [shape = 'u8[196608]{0}', space=vmem, size = 0x30000, scoped, tag = 'input window, operand 7, single buffered']
    #allocation13 [shape = 'u8[1024]{0}', space=vmem, size = 0x400, scoped, tag = 'output window, operand 0, single buffered']
    %15 = vsyncpa [#allocation5], 0
    %16 = vsyncpa [#allocation8], 0
    %17 = vsyncpa [#allocation11], 0
    %18 = vsyncpa [#allocation6], 0
    // Predicated region
    $region2: #{tpu_custom_call.1} parent=1 // pred_check
      _
    $region3: #{tpu_custom_call.1} parent=1 // pred_check_branch
      %20 = sbr.rel (0) target = $region5
    $region4: #{tpu_custom_call.1} parent=1 // pred_region
      %s22 = ssub.s32 512, 512
      %23 = vsyncadd [#allocation5], %s22
      %s24 = sshll.u32 [#allocation4], 4
      %s25 = int_to_ptr.vmem [resolvable:$true] %s24
      %30 = dma.hbm_to_vmem [thread:$0]  %s0, 512, %s25, [#allocation5], 32, 32, 2
    $region5: #{tpu_custom_call.1} parent=1 // pred_fallthru
      _
    // Predicated region
    $region6: #{tpu_custom_call.1} parent=1 // pred_check
      _
    $region7: #{tpu_custom_call.1} parent=1 // pred_check_branch
      %32 = sbr.rel (0) target = $region9
    $region8: #{tpu_custom_call.1} parent=1 // pred_region
      %s34 = ssub.s32 256, 256
      %35 = vsyncadd [#allocation8], %s34
      %s36 = sshll.u32 [#allocation7], 4
      %s37 = int_to_ptr.vmem [resolvable:$true] %s36
      %42 = dma.hbm_to_vmem [thread:$0]  %s1, 256, %s37, [#allocation8], 64, 64, 4
    $region9: #{tpu_custom_call.1} parent=1 // pred_fallthru
      _
    // Predicated region
    $region10: #{tpu_custom_call.1} parent=1 // pred_check
      _
    $region11: #{tpu_custom_call.1} parent=1 // pred_check_branch
      %44 = sbr.rel (0) target = $region13
    $region12: #{tpu_custom_call.1} parent=1 // pred_region
      _
    $region13: #{tpu_custom_call.1} parent=1 // pred_fallthru
      _
    // Predicated region
    $region14: #{tpu_custom_call.1} parent=1 // pred_check
      _
    $region15: #{tpu_custom_call.1} parent=1 // pred_check_branch
      %46 = sbr.rel (0) target = $region17
    $region16: #{tpu_custom_call.1} parent=1 // pred_region
      %s48 = ssub.s32 16, 16
      %49 = vsyncadd [#allocation8], %s48
      %s51 = sshll.u32 [#allocation9], 4
      %s52 = int_to_ptr.vmem [resolvable:$true] %s51
      %54 = dma.hbm_to_vmem [thread:$0]  %s3, 16, %s52, [#allocation8]
    $region17: #{tpu_custom_call.1} parent=1 // pred_fallthru
      _
    // Predicated region
    $region18: #{tpu_custom_call.1} parent=1 // pred_check
      _
    $region19: #{tpu_custom_call.1} parent=1 // pred_check_branch
      %56 = sbr.rel (0) target = $region21
    $region20: #{tpu_custom_call.1} parent=1 // pred_region
      %s58 = ssub.s32 10240, 10240
      %59 = vsyncadd [#allocation11], %s58
      %s60 = sshll.u32 [#allocation10], 4
      %s61 = int_to_ptr.vmem [resolvable:$true] %s60
      %66 = dma.hbm_to_vmem [thread:$0]  %s4, 10240, %s61, [#allocation11], 128, 128, 8
    $region21: #{tpu_custom_call.1} parent=1 // pred_fallthru
      _
    // Predicated region
    $region22: #{tpu_custom_call.1} parent=1 // pred_check
      _
    $region23: #{tpu_custom_call.1} parent=1 // pred_check_branch
      %68 = sbr.rel (0) target = $region25
    $region24: #{tpu_custom_call.1} parent=1 // pred_region
      _
    $region25: #{tpu_custom_call.1} parent=1 // pred_fallthru
      _
    // Predicated region
    $region26: #{tpu_custom_call.1} parent=1 // pred_check
      _
    $region27: #{tpu_custom_call.1} parent=1 // pred_check_branch
      %70 = sbr.rel (0) target = $region29
    $region28: #{tpu_custom_call.1} parent=1 // pred_region
      _
    $region29: #{tpu_custom_call.1} parent=1 // pred_fallthru
      _
    // Predicated region
    $region30: #{tpu_custom_call.1} parent=1 // pred_check
      _
    $region31: #{tpu_custom_call.1} parent=1 // pred_check_branch
      %72 = sbr.rel (0) target = $region33
    $region32: #{tpu_custom_call.1} parent=1 // pred_region
      %s74 = ssub.s32 6144, 6144
      %75 = vsyncadd [#allocation11], %s74
      %s76 = sshll.u32 [#allocation12], 4
      %s77 = int_to_ptr.vmem [resolvable:$true] %s76
      %82 = dma.hbm_to_vmem [thread:$0]  %s7, 6144, %s77, [#allocation11], 64, 64, 4
    $region33: #{tpu_custom_call.1} parent=1 // pred_fallthru
      _
    // Predicated region
    $region34: #{tpu_custom_call.1} parent=1 // pred_check
      _
    $region35: #{tpu_custom_call.1} parent=1 // pred_check_branch
      %84 = sbr.rel (0) target = $region37
    $region36: #{tpu_custom_call.1} parent=1 // pred_region
      _
    $region37: #{tpu_custom_call.1} parent=1 // pred_fallthru
      _
    // Predicated region
    $region38: #{tpu_custom_call.1} parent=1 // pred_check
      _
    $region39: #{tpu_custom_call.1} parent=1 // pred_check_branch
      %86 = sbr.rel (0) target = $region41
    $region40: #{tpu_custom_call.1} parent=1 // pred_region
      _
    $region41: #{tpu_custom_call.1} parent=1 // pred_fallthru
      _
    // Predicated region
    $region42: #{tpu_custom_call.1} parent=1 // pred_check
      _
    $region43: #{tpu_custom_call.1} parent=1 // pred_check_branch
      %88 = sbr.rel (0) target = $region45
    $region44: #{tpu_custom_call.1} parent=1 // pred_region
      %89 = dma.done [#allocation5], 512
    $region45: #{tpu_custom_call.1} parent=1 // pred_fallthru
      _
    // Predicated region
    $region46: #{tpu_custom_call.1} parent=1 // pred_check
      _
    $region47: #{tpu_custom_call.1} parent=1 // pred_check_branch
      %91 = sbr.rel (0) target = $region49
    $region48: #{tpu_custom_call.1} parent=1 // pred_region
      %92 = dma.done [#allocation8], 256
    $region49: #{tpu_custom_call.1} parent=1 // pred_fallthru
      _
    // Predicated region
    $region50: #{tpu_custom_call.1} parent=1 // pred_check
      _
    $region51: #{tpu_custom_call.1} parent=1 // pred_check_branch
      %94 = sbr.rel (0) target = $region53
    $region52: #{tpu_custom_call.1} parent=1 // pred_region
      %95 = dma.done [#allocation8], 16
    $region53: #{tpu_custom_call.1} parent=1 // pred_fallthru
      _
    // Predicated region
    $region54: #{tpu_custom_call.1} parent=1 // pred_check
      _
    $region55: #{tpu_custom_call.1} parent=1 // pred_check_branch
      %97 = sbr.rel (0) target = $region57
    $region56: #{tpu_custom_call.1} parent=1 // pred_region
      %98 = dma.done [#allocation11], 10240
    $region57: #{tpu_custom_call.1} parent=1 // pred_fallthru
      _
    // Predicated region
    $region58: #{tpu_custom_call.1} parent=1 // pred_check
      _
    $region59: #{tpu_custom_call.1} parent=1 // pred_check_branch
      %100 = sbr.rel (0) target = $region61
    $region60: #{tpu_custom_call.1} parent=1 // pred_region
      %101 = dma.done [#allocation11], 6144
    $region61: #{tpu_custom_call.1} parent=1 // pred_fallthru
      _
    %v103 = vld [vmem:[%s2] sm:$0x1]
    %v104 = vld [vmem:[#allocation9] sm:$0x1]
    %v105 = vld [vmem:[%s5] sm:$0x3]
    %v106 = vld [vmem:[%s6] sm:$0x3]
    %v107 = vld [vmem:[%s8] sm:$0x1]
    %v108 = vld [vmem:[%s9] sm:$0x1]
    %v109 = vld [vmem:[#allocation4] sm:$0x3]
    %v110 = vld [vmem:[#allocation4 + $0x2] sm:$0x3]
    %v111 = vld [vmem:[#allocation4 + $0x4] sm:$0x3]
    %v112 = vld [vmem:[#allocation4 + $0x6] sm:$0x3]
    %v113 = vld [vmem:[#allocation4 + $0x8] sm:$0x3]
    %v114 = vld [vmem:[#allocation4 + $0xa] sm:$0x3]
    %v115 = vld [vmem:[#allocation4 + $0xc] sm:$0x3]
    %v116 = vld [vmem:[#allocation4 + $0xe] sm:$0x3]
    %v117 = vld [vmem:[#allocation4 + $0x10] sm:$0x3]
    %v118 = vld [vmem:[#allocation4 + $0x12] sm:$0x3]
    %v119 = vld [vmem:[#allocation4 + $0x14] sm:$0x3]
    %v120 = vld [vmem:[#allocation4 + $0x16] sm:$0x3]
    %v121 = vld [vmem:[#allocation4 + $0x18] sm:$0x3]
    %v122 = vld [vmem:[#allocation4 + $0x1a] sm:$0x3]
    %v123 = vld [vmem:[#allocation4 + $0x1c] sm:$0x3]
    %v124 = vld [vmem:[#allocation4 + $0x1e] sm:$0x3]
    %v125 = vpack.c.bf16 %v109, %v109
    %v126 = vpack.c.bf16 %v110, %v110
    %v127 = vpack.c.bf16 %v111, %v111
    %v128 = vpack.c.bf16 %v112, %v112
    %v129 = vpack.c.bf16 %v113, %v113
    %v130 = vpack.c.bf16 %v114, %v114
    %v131 = vpack.c.bf16 %v115, %v115
    %v132 = vpack.c.bf16 %v116, %v116
    %v133 = vpack.c.bf16 %v117, %v117
    %v134 = vpack.c.bf16 %v118, %v118
    %v135 = vpack.c.bf16 %v119, %v119
    %v136 = vpack.c.bf16 %v120, %v120
    %v137 = vpack.c.bf16 %v121, %v121
    %v138 = vpack.c.bf16 %v122, %v122
    %v139 = vpack.c.bf16 %v123, %v123
    %v140 = vpack.c.bf16 %v124, %v124
    %v141 = vld [vmem:[#allocation7] sm:$0xf]
    %v142 = vld [vmem:[#allocation7 + $0x4] sm:$0xf]
    %v143 = vld [vmem:[#allocation7 + $0x8] sm:$0xf]
    %v144 = vld [vmem:[#allocation7 + $0xc] sm:$0xf]
    %v161 = vcombine.low %v125, %v126
    %v162 = vcombine.low %v127, %v128
    %v163 = vcombine.low %v129, %v130
    %v164 = vcombine.low %v131, %v132
    %v166 = vunpack.c.l.s4 1966171168
    %v167 = vunpack.c.0.s8 %v166
    %v168 = vlaneseq
    %v169 = vshrl.u32 %v168, 7
    %v170 = vsub.s32 %v167, %v169
    %v171 = vrot.slane %v161, %v170
    %v173 = vunpack.c.l.s4 1966171168
    %v174 = vunpack.c.0.s8 %v173
    %v175 = vlaneseq
    %v176 = vshrl.u32 %v175, 7
    %v177 = vsub.s32 %v174, %v176
    %v178 = vrot.slane %v162, %v177
    %v180 = vunpack.c.l.s4 1966171168
    %v181 = vunpack.c.0.s8 %v180
    %v182 = vlaneseq
    %v183 = vshrl.u32 %v182, 7
    %v184 = vsub.s32 %v181, %v183
    %v185 = vrot.slane %v163, %v184
    %v187 = vunpack.c.l.s4 1966171168
    %v188 = vunpack.c.0.s8 %v187
    %v189 = vlaneseq
    %v190 = vshrl.u32 %v189, 7
    %v191 = vsub.s32 %v188, %v190
    %v192 = vrot.slane %v164, %v191
    %v193 = vcombine.low %v171, %v178
    %v194 = vcombine.low %v185, %v192
    %v196 = vunpack.c.l.s4 1966171168
    %v197 = vunpack.c.0.s8 %v196
    %v198 = vlaneseq
    %v199 = vshrl.u32 %v198, 7
    %v200 = vsub.s32 %v197, %v199
    %v201 = vrot.slane %v193, %v200
    %v203 = vunpack.c.l.s4 1966171168
    %v204 = vunpack.c.0.s8 %v203
    %v205 = vlaneseq
    %v206 = vshrl.u32 %v205, 7
    %v207 = vsub.s32 %v204, %v206
    %v208 = vrot.slane %v194, %v207
    %v209 = vcombine.low %v201, %v208
    %v210 = vcombine.low %v133, %v134
    %v211 = vcombine.low %v135, %v136
    %v212 = vcombine.low %v137, %v138
    %v213 = vcombine.low %v139, %v140
    %v215 = vunpack.c.l.s4 1966171168
    %v216 = vunpack.c.0.s8 %v215
    %v217 = vlaneseq
    %v218 = vshrl.u32 %v217, 7
    %v219 = vsub.s32 %v216, %v218
    %v220 = vrot.slane %v210, %v219
    %v222 = vunpack.c.l.s4 1966171168
    %v223 = vunpack.c.0.s8 %v222
    %v224 = vlaneseq
    %v225 = vshrl.u32 %v224, 7
    %v226 = vsub.s32 %v223, %v225
    %v227 = vrot.slane %v211, %v226
    %v229 = vunpack.c.l.s4 1966171168
    %v230 = vunpack.c.0.s8 %v229
    %v231 = vlaneseq
    %v232 = vshrl.u32 %v231, 7
    %v233 = vsub.s32 %v230, %v232
    %v234 = vrot.slane %v212, %v233
    %v236 = vunpack.c.l.s4 1966171168
    %v237 = vunpack.c.0.s8 %v236
    %v238 = vlaneseq
    %v239 = vshrl.u32 %v238, 7
    %v240 = vsub.s32 %v237, %v239
    %v241 = vrot.slane %v213, %v240
    %v242 = vcombine.low %v220, %v227
    %v243 = vcombine.low %v234, %v241
    %v245 = vunpack.c.l.s4 1966171168
    %v246 = vunpack.c.0.s8 %v245
    %v247 = vlaneseq
    %v248 = vshrl.u32 %v247, 7
    %v249 = vsub.s32 %v246, %v248
    %v250 = vrot.slane %v242, %v249
    %v252 = vunpack.c.l.s4 1966171168
    %v253 = vunpack.c.0.s8 %v252
    %v254 = vlaneseq
    %v255 = vshrl.u32 %v254, 7
    %v256 = vsub.s32 %v253, %v255
    %v257 = vrot.slane %v243, %v256
    %v258 = vcombine.low %v250, %v257
    %v263 = vunpack.c.l.b16 %v141
    %v264 = vunpack.c.l.b16 %v142
    %v265 = vunpack.c.l.b16 %v143
    %v266 = vunpack.c.l.b16 %v144
    %v267 = vpack.c.b16 %v264, %v263
    %v268 = vpack.c.b16 %v266, %v265
    %vm271 = vcmask 261120
    %v273 = vsel %vm271, %v209, 0
    %v276 = vsel %vm271, %v258, 0
    %278 = vmatprep.subr.bf16.mxu0 0
    %279 = vmatpush1.bf16.msra.mxu0 0
    %280 = vmatprep.subr.bf16.mxu0 0
    %281 = vmatpush1.bf16.msra.mxu0 0
    %282 = vmatprep.subr.bf16.mxu0 0
    %283 = vmatpush1.bf16.msra.mxu0 0
    %284 = vmatprep.subr.bf16.mxu0 0
    %285 = vmatpush1.bf16.msra.mxu0 0
    %286 = vmatprep.subr.bf16.mxu0 0
    %287 = vmatpush1.bf16.msra.mxu0 0
    %288 = vmatprep.subr.bf16.mxu0 0
    %289 = vmatpush1.bf16.msra.mxu0 0
    %290 = vmatprep.subr.bf16.mxu0 0
    %291 = vmatpush1.bf16.msra.mxu0 %v268
    %292 = vmatprep.subr.bf16.mxu0 0
    %293 = vmatpush1.bf16.msra.mxu0 %v267
    %294 = vmatprep.subr.bf16.mxu0 0
    %295 = vmatpush2.bf16.msra.mxu0 0
    %296 = vmatprep.subr.bf16.mxu0 0
    %297 = vmatpush2.bf16.msra.mxu0 0
    %298 = vmatprep.subr.bf16.mxu0 0
    %299 = vmatpush2.bf16.msra.mxu0 0
    %300 = vmatprep.subr.bf16.mxu0 0
    %301 = vmatpush2.bf16.msra.mxu0 0
    %302 = vmatprep.subr.bf16.mxu0 0
    %303 = vmatpush2.bf16.msra.mxu0 0
    %304 = vmatprep.subr.bf16.mxu0 0
    %305 = vmatpush2.bf16.msra.mxu0 0
    %306 = vmatprep.subr.bf16.mxu0 0
    %307 = vmatpush2.bf16.msra.mxu0 0
    %308 = vmatprep.subr.bf16.mxu0 0
    %309 = vmatpush2.bf16.msra.mxu0 0
    %310 = vmatprep.mubr.bf16.mxu0 0
    %311 = vmatmul.mubr.bf16.gmra.mxu0 %v273
    %v312 = vpop.f32.mrf.mxu0
    %v313 = vadd.f32 0.0, %v312
    %v314 = vpop.f32.mrf.mxu0
    %v315 = vpop.f32.mrf.mxu0
    %v316 = vadd.f32 0.0, %v315
    %v317 = vpop.f32.mrf.mxu0
    %318 = vmatprep.mubr.bf16.mxu0 0
    %319 = vmatmul.mubr.bf16.gmra.mxu0 %v276
    %v320 = vpop.f32.mrf.mxu0
    %v321 = vadd.f32 0.0, %v320
    %v322 = vpop.f32.mrf.mxu0
    %v323 = vpop.f32.mrf.mxu0
    %v324 = vadd.f32 0.0, %v323
    %v325 = vpop.f32.mrf.mxu0
    %326 = vdwg.mxu0
    %v328 = vlaneseq
    %v329 = vshrl.u32 %v328, 7
    %v330 = vsub.s32 0, %v329
    %v331 = vrot.slane %v103, %v330
    %v333 = vmul.f32 %v313, %v331
    %v334 = vmul.f32 %v316, %v331
    %v335 = vmul.f32 %v321, %v331
    %v336 = vmul.f32 %v324, %v331
    %v338 = vlaneseq
    %v339 = vshrl.u32 %v338, 7
    %v340 = vsub.s32 0, %v339
    %v341 = vrot.slane %v104, %v340
    %v343 = vadd.f32 %v333, %v341
    %v344 = vadd.f32 %v334, %v341
    %v345 = vadd.f32 %v335, %v341
    %v346 = vadd.f32 %v336, %v341
    %v347 = vmax.f32 %v343, 0.0
    %v348 = vmax.f32 %v344, 0.0
    %v349 = vmax.f32 %v345, 0.0
    %v350 = vmax.f32 %v346, 0.0
    %351 = vst [vmem:[#allocation2] sm:$0x1] 0
    %352 = vst [vmem:[#allocation2 + $0x1] sm:$0x1] 0
    %353 = vst [vmem:[#allocation2 + $0x2] sm:$0x1] 0
    %v354 = vpack.c.bf16 %v348, %v347
    %v355 = vpack.c.bf16 %v350, %v349
    %v358 = vcombine.high %v354, %v354
    %v360 = vunpack.c.l.s4 1966171168
    %v361 = vunpack.c.0.s8 %v360
    %v362 = vlaneseq
    %v363 = vshrl.u32 %v362, 7
    %v364 = vsub.s32 %v361, %v363
    %v365 = vrot.slane %v354, %v364
    %v367 = vunpack.c.l.s4 1966171168
    %v368 = vunpack.c.0.s8 %v367
    %v369 = vlaneseq
    %v370 = vshrl.u32 %v369, 7
    %v371 = vsub.s32 %v368, %v370
    %v372 = vrot.slane %v358, %v371
    %v373 = vcombine.high %v365, %v365
    %v374 = vcombine.high %v372, %v372
    %v376 = vunpack.c.l.s4 1966171168
    %v377 = vunpack.c.0.s8 %v376
    %v378 = vlaneseq
    %v379 = vshrl.u32 %v378, 7
    %v380 = vsub.s32 %v377, %v379
    %v381 = vrot.slane %v365, %v380
    %v383 = vunpack.c.l.s4 1966171168
    %v384 = vunpack.c.0.s8 %v383
    %v385 = vlaneseq
    %v386 = vshrl.u32 %v385, 7
    %v387 = vsub.s32 %v384, %v386
    %v388 = vrot.slane %v372, %v387
    %v390 = vunpack.c.l.s4 1966171168
    %v391 = vunpack.c.0.s8 %v390
    %v392 = vlaneseq
    %v393 = vshrl.u32 %v392, 7
    %v394 = vsub.s32 %v391, %v393
    %v395 = vrot.slane %v373, %v394
    %v397 = vunpack.c.l.s4 1966171168
    %v398 = vunpack.c.0.s8 %v397
    %v399 = vlaneseq
    %v400 = vshrl.u32 %v399, 7
    %v401 = vsub.s32 %v398, %v400
    %v402 = vrot.slane %v374, %v401
    %v403 = vcombine.high %v381, %v381
    %v404 = vcombine.high %v388, %v388
    %v405 = vcombine.high %v395, %v395
    %v406 = vcombine.high %v402, %v402
    %v407 = vcombine.high %v355, %v355
    %v409 = vunpack.c.l.s4 1966171168
    %v410 = vunpack.c.0.s8 %v409
    %v411 = vlaneseq
    %v412 = vshrl.u32 %v411, 7
    %v413 = vsub.s32 %v410, %v412
    %v414 = vrot.slane %v355, %v413
    %v416 = vunpack.c.l.s4 1966171168
    %v417 = vunpack.c.0.s8 %v416
    %v418 = vlaneseq
    %v419 = vshrl.u32 %v418, 7
    %v420 = vsub.s32 %v417, %v419
    %v421 = vrot.slane %v407, %v420
    %v422 = vcombine.high %v414, %v414
    %v423 = vcombine.high %v421, %v421
    %v425 = vunpack.c.l.s4 1966171168
    %v426 = vunpack.c.0.s8 %v425
    %v427 = vlaneseq
    %v428 = vshrl.u32 %v427, 7
    %v429 = vsub.s32 %v426, %v428
    %v430 = vrot.slane %v414, %v429
    %v432 = vunpack.c.l.s4 1966171168
    %v433 = vunpack.c.0.s8 %v432
    %v434 = vlaneseq
    %v435 = vshrl.u32 %v434, 7
    %v436 = vsub.s32 %v433, %v435
    %v437 = vrot.slane %v421, %v436
    %v439 = vunpack.c.l.s4 1966171168
    %v440 = vunpack.c.0.s8 %v439
    %v441 = vlaneseq
    %v442 = vshrl.u32 %v441, 7
    %v443 = vsub.s32 %v440, %v442
    %v444 = vrot.slane %v422, %v443
    %v446 = vunpack.c.l.s4 1966171168
    %v447 = vunpack.c.0.s8 %v446
    %v448 = vlaneseq
    %v449 = vshrl.u32 %v448, 7
    %v450 = vsub.s32 %v447, %v449
    %v451 = vrot.slane %v423, %v450
    %v452 = vcombine.high %v430, %v430
    %v453 = vcombine.high %v437, %v437
    %v454 = vcombine.high %v444, %v444
    %v455 = vcombine.high %v451, %v451
    %s472 = scalar_lea.vmem [#allocation2], 3
    %473 = vst [vmem:[%s472] sm:$0x1] %v381
    %474 = vst [vmem:[%s472 + $0x1] sm:$0x1] %v395
    %475 = vst [vmem:[%s472 + $0x2] sm:$0x1] %v403
    %476 = vst [vmem:[%s472 + $0x3] sm:$0x1] %v405
    %477 = vst [vmem:[%s472 + $0x4] sm:$0x1] %v388
    %478 = vst [vmem:[%s472 + $0x5] sm:$0x1] %v402
    %479 = vst [vmem:[%s472 + $0x6] sm:$0x1] %v404
    %480 = vst [vmem:[%s472 + $0x7] sm:$0x1] %v406
    %481 = vst [vmem:[%s472 + $0x8] sm:$0x1] %v430
    %482 = vst [vmem:[%s472 + $0x9] sm:$0x1] %v444
    %483 = vst [vmem:[%s472 + $0xa] sm:$0x1] %v452
    %484 = vst [vmem:[%s472 + $0xb] sm:$0x1] %v454
    %485 = vst [vmem:[%s472 + $0xc] sm:$0x1] %v437
    %486 = vst [vmem:[%s472 + $0xd] sm:$0x1] %v451
    %487 = vst [vmem:[%s472 + $0xe] sm:$0x1] %v453
    %488 = vst [vmem:[%s472 + $0xf] sm:$0x1] %v455
    %s489 = scalar_lea.vmem [#allocation2], 19
    %490 = vst [vmem:[%s489] sm:$0x1] 0
    %491 = vst [vmem:[%s489 + $0x1] sm:$0x1] 0
    %492 = vst [vmem:[%s489 + $0x2] sm:$0x1] 0
    %s493 = scalar_lea.vmem [#allocation2], 1
    %v494 = vld [vmem:[%s493] sm:$0x1]
    %v495 = vld [vmem:[%s493 + $0x1] sm:$0x1]
    %v496 = vld [vmem:[%s493 + $0x2] sm:$0x1]
    %v497 = vld [vmem:[%s493 + $0x3] sm:$0x1]
    %v498 = vld [vmem:[%s493 + $0x4] sm:$0x1]
    %v499 = vld [vmem:[%s493 + $0x5] sm:$0x1]
    %v500 = vld [vmem:[%s493 + $0x6] sm:$0x1]
    %v501 = vld [vmem:[%s493 + $0x7] sm:$0x1]
    %v502 = vld [vmem:[%s493 + $0x8] sm:$0x1]
    %v503 = vld [vmem:[%s493 + $0x9] sm:$0x1]
    %v504 = vld [vmem:[%s493 + $0xa] sm:$0x1]
    %v505 = vld [vmem:[%s493 + $0xb] sm:$0x1]
    %v506 = vld [vmem:[%s493 + $0xc] sm:$0x1]
    %v507 = vld [vmem:[%s493 + $0xd] sm:$0x1]
    %v508 = vld [vmem:[%s493 + $0xe] sm:$0x1]
    %v509 = vld [vmem:[%s493 + $0xf] sm:$0x1]
    %s510 = scalar_lea.vmem [#allocation2], 2
    %v511 = vld [vmem:[%s510] sm:$0x1]
    %v512 = vld [vmem:[%s510 + $0x1] sm:$0x1]
    %v513 = vld [vmem:[%s510 + $0x2] sm:$0x1]
    %v514 = vld [vmem:[%s510 + $0x3] sm:$0x1]
    %v515 = vld [vmem:[%s510 + $0x4] sm:$0x1]
    %v516 = vld [vmem:[%s510 + $0x5] sm:$0x1]
    %v517 = vld [vmem:[%s510 + $0x6] sm:$0x1]
    %v518 = vld [vmem:[%s510 + $0x7] sm:$0x1]
    %v519 = vld [vmem:[%s510 + $0x8] sm:$0x1]
    %v520 = vld [vmem:[%s510 + $0x9] sm:$0x1]
    %v521 = vld [vmem:[%s510 + $0xa] sm:$0x1]
    %v522 = vld [vmem:[%s510 + $0xb] sm:$0x1]
    %v523 = vld [vmem:[%s510 + $0xc] sm:$0x1]
    %v524 = vld [vmem:[%s510 + $0xd] sm:$0x1]
    %v525 = vld [vmem:[%s510 + $0xe] sm:$0x1]
    %v526 = vld [vmem:[%s510 + $0xf] sm:$0x1]
    %v559 = vcombine.low %v494, %v511
    %v561 = vunpack.c.l.s4 1966171168
    %v562 = vunpack.c.0.s8 %v561
    %v563 = vlaneseq
    %v564 = vshrl.u32 %v563, 7
    %v565 = vsub.s32 %v562, %v564
    %v566 = vrot.slane %v559, %v565
    %v568 = vunpack.c.l.s4 1966171168
    %v569 = vunpack.c.0.s8 %v568
    %v570 = vlaneseq
    %v571 = vshrl.u32 %v570, 7
    %v572 = vsub.s32 %v569, %v571
    %v573 = vrot.slane %v566, %v572
    %v574 = vcombine.low %v495, %v512
    %v576 = vunpack.c.l.s4 1966171168
    %v577 = vunpack.c.0.s8 %v576
    %v578 = vlaneseq
    %v579 = vshrl.u32 %v578, 7
    %v580 = vsub.s32 %v577, %v579
    %v581 = vrot.slane %v574, %v580
    %v583 = vunpack.c.l.s4 1966171168
    %v584 = vunpack.c.0.s8 %v583
    %v585 = vlaneseq
    %v586 = vshrl.u32 %v585, 7
    %v587 = vsub.s32 %v584, %v586
    %v588 = vrot.slane %v581, %v587
    %v589 = vcombine.low %v496, %v513
    %v591 = vunpack.c.l.s4 1966171168
    %v592 = vunpack.c.0.s8 %v591
    %v593 = vlaneseq
    %v594 = vshrl.u32 %v593, 7
    %v595 = vsub.s32 %v592, %v594
    %v596 = vrot.slane %v589, %v595
    %v598 = vunpack.c.l.s4 1966171168
    %v599 = vunpack.c.0.s8 %v598
    %v600 = vlaneseq
    %v601 = vshrl.u32 %v600, 7
    %v602 = vsub.s32 %v599, %v601
    %v603 = vrot.slane %v596, %v602
    %v604 = vcombine.low %v497, %v514
    %v606 = vunpack.c.l.s4 1966171168
    %v607 = vunpack.c.0.s8 %v606
    %v608 = vlaneseq
    %v609 = vshrl.u32 %v608, 7
    %v610 = vsub.s32 %v607, %v609
    %v611 = vrot.slane %v604, %v610
    %v613 = vunpack.c.l.s4 1966171168
    %v614 = vunpack.c.0.s8 %v613
    %v615 = vlaneseq
    %v616 = vshrl.u32 %v615, 7
    %v617 = vsub.s32 %v614, %v616
    %v618 = vrot.slane %v611, %v617
    %v619 = vcombine.low %v498, %v515
    %v621 = vunpack.c.l.s4 1966171168
    %v622 = vunpack.c.0.s8 %v621
    %v623 = vlaneseq
    %v624 = vshrl.u32 %v623, 7
    %v625 = vsub.s32 %v622, %v624
    %v626 = vrot.slane %v619, %v625
    %v628 = vunpack.c.l.s4 1966171168
    %v629 = vunpack.c.0.s8 %v628
    %v630 = vlaneseq
    %v631 = vshrl.u32 %v630, 7
    %v632 = vsub.s32 %v629, %v631
    %v633 = vrot.slane %v626, %v632
    %v634 = vcombine.low %v499, %v516
    %v636 = vunpack.c.l.s4 1966171168
    %v637 = vunpack.c.0.s8 %v636
    %v638 = vlaneseq
    %v639 = vshrl.u32 %v638, 7
    %v640 = vsub.s32 %v637, %v639
    %v641 = vrot.slane %v634, %v640
    %v643 = vunpack.c.l.s4 1966171168
    %v644 = vunpack.c.0.s8 %v643
    %v645 = vlaneseq
    %v646 = vshrl.u32 %v645, 7
    %v647 = vsub.s32 %v644, %v646
    %v648 = vrot.slane %v641, %v647
    %v649 = vcombine.low %v500, %v517
    %v651 = vunpack.c.l.s4 1966171168
    %v652 = vunpack.c.0.s8 %v651
    %v653 = vlaneseq
    %v654 = vshrl.u32 %v653, 7
    %v655 = vsub.s32 %v652, %v654
    %v656 = vrot.slane %v649, %v655
    %v658 = vunpack.c.l.s4 1966171168
    %v659 = vunpack.c.0.s8 %v658
    %v660 = vlaneseq
    %v661 = vshrl.u32 %v660, 7
    %v662 = vsub.s32 %v659, %v661
    %v663 = vrot.slane %v656, %v662
    %v664 = vcombine.low %v501, %v518
    %v666 = vunpack.c.l.s4 1966171168
    %v667 = vunpack.c.0.s8 %v666
    %v668 = vlaneseq
    %v669 = vshrl.u32 %v668, 7
    %v670 = vsub.s32 %v667, %v669
    %v671 = vrot.slane %v664, %v670
    %v673 = vunpack.c.l.s4 1966171168
    %v674 = vunpack.c.0.s8 %v673
    %v675 = vlaneseq
    %v676 = vshrl.u32 %v675, 7
    %v677 = vsub.s32 %v674, %v676
    %v678 = vrot.slane %v671, %v677
    %v679 = vcombine.low %v502, %v519
    %v681 = vunpack.c.l.s4 1966171168
    %v682 = vunpack.c.0.s8 %v681
    %v683 = vlaneseq
    %v684 = vshrl.u32 %v683, 7
    %v685 = vsub.s32 %v682, %v684
    %v686 = vrot.slane %v679, %v685
    %v688 = vunpack.c.l.s4 1966171168
    %v689 = vunpack.c.0.s8 %v688
    %v690 = vlaneseq
    %v691 = vshrl.u32 %v690, 7
    %v692 = vsub.s32 %v689, %v691
    %v693 = vrot.slane %v686, %v692
    %v694 = vcombine.low %v503, %v520
    %v696 = vunpack.c.l.s4 1966171168
    %v697 = vunpack.c.0.s8 %v696
    %v698 = vlaneseq
    %v699 = vshrl.u32 %v698, 7
    %v700 = vsub.s32 %v697, %v699
    %v701 = vrot.slane %v694, %v700
    %v703 = vunpack.c.l.s4 1966171168
    %v704 = vunpack.c.0.s8 %v703
    %v705 = vlaneseq
    %v706 = vshrl.u32 %v705, 7
    %v707 = vsub.s32 %v704, %v706
    %v708 = vrot.slane %v701, %v707
    %v709 = vcombine.low %v504, %v521
    %v711 = vunpack.c.l.s4 1966171168
    %v712 = vunpack.c.0.s8 %v711
    %v713 = vlaneseq
    %v714 = vshrl.u32 %v713, 7
    %v715 = vsub.s32 %v712, %v714
    %v716 = vrot.slane %v709, %v715
    %v718 = vunpack.c.l.s4 1966171168
    %v719 = vunpack.c.0.s8 %v718
    %v720 = vlaneseq
    %v721 = vshrl.u32 %v720, 7
    %v722 = vsub.s32 %v719, %v721
    %v723 = vrot.slane %v716, %v722
    %v724 = vcombine.low %v505, %v522
    %v726 = vunpack.c.l.s4 1966171168
    %v727 = vunpack.c.0.s8 %v726
    %v728 = vlaneseq
    %v729 = vshrl.u32 %v728, 7
    %v730 = vsub.s32 %v727, %v729
    %v731 = vrot.slane %v724, %v730
    %v733 = vunpack.c.l.s4 1966171168
    %v734 = vunpack.c.0.s8 %v733
    %v735 = vlaneseq
    %v736 = vshrl.u32 %v735, 7
    %v737 = vsub.s32 %v734, %v736
    %v738 = vrot.slane %v731, %v737
    %v739 = vcombine.low %v506, %v523
    %v741 = vunpack.c.l.s4 1966171168
    %v742 = vunpack.c.0.s8 %v741
    %v743 = vlaneseq
    %v744 = vshrl.u32 %v743, 7
    %v745 = vsub.s32 %v742, %v744
    %v746 = vrot.slane %v739, %v745
    %v748 = vunpack.c.l.s4 1966171168
    %v749 = vunpack.c.0.s8 %v748
    %v750 = vlaneseq
    %v751 = vshrl.u32 %v750, 7
    %v752 = vsub.s32 %v749, %v751
    %v753 = vrot.slane %v746, %v752
    %v754 = vcombine.low %v507, %v524
    %v756 = vunpack.c.l.s4 1966171168
    %v757 = vunpack.c.0.s8 %v756
    %v758 = vlaneseq
    %v759 = vshrl.u32 %v758, 7
    %v760 = vsub.s32 %v757, %v759
    %v761 = vrot.slane %v754, %v760
    %v763 = vunpack.c.l.s4 1966171168
    %v764 = vunpack.c.0.s8 %v763
    %v765 = vlaneseq
    %v766 = vshrl.u32 %v765, 7
    %v767 = vsub.s32 %v764, %v766
    %v768 = vrot.slane %v761, %v767
    %v769 = vcombine.low %v508, %v525
    %v771 = vunpack.c.l.s4 1966171168
    %v772 = vunpack.c.0.s8 %v771
    %v773 = vlaneseq
    %v774 = vshrl.u32 %v773, 7
    %v775 = vsub.s32 %v772, %v774
    %v776 = vrot.slane %v769, %v775
    %v778 = vunpack.c.l.s4 1966171168
    %v779 = vunpack.c.0.s8 %v778
    %v780 = vlaneseq
    %v781 = vshrl.u32 %v780, 7
    %v782 = vsub.s32 %v779, %v781
    %v783 = vrot.slane %v776, %v782
    %v784 = vcombine.low %v509, %v526
    %v786 = vunpack.c.l.s4 1966171168
    %v787 = vunpack.c.0.s8 %v786
    %v788 = vlaneseq
    %v789 = vshrl.u32 %v788, 7
    %v790 = vsub.s32 %v787, %v789
    %v791 = vrot.slane %v784, %v790
    %v793 = vunpack.c.l.s4 1966171168
    %v794 = vunpack.c.0.s8 %v793
    %v795 = vlaneseq
    %v796 = vshrl.u32 %v795, 7
    %v797 = vsub.s32 %v794, %v796
    %v798 = vrot.slane %v791, %v797
    %v799 = vld [vmem:[%s472] sm:$0x1]
    %v800 = vld [vmem:[%s472 + $0x1] sm:$0x1]
    %v801 = vld [vmem:[%s472 + $0x2] sm:$0x1]
    %v802 = vld [vmem:[%s472 + $0x3] sm:$0x1]
    %v803 = vld [vmem:[%s472 + $0x4] sm:$0x1]
    %v804 = vld [vmem:[%s472 + $0x5] sm:$0x1]
    %v805 = vld [vmem:[%s472 + $0x6] sm:$0x1]
    %v806 = vld [vmem:[%s472 + $0x7] sm:$0x1]
    %v807 = vld [vmem:[%s472 + $0x8] sm:$0x1]
    %v808 = vld [vmem:[%s472 + $0x9] sm:$0x1]
    %v809 = vld [vmem:[%s472 + $0xa] sm:$0x1]
    %v810 = vld [vmem:[%s472 + $0xb] sm:$0x1]
    %v811 = vld [vmem:[%s472 + $0xc] sm:$0x1]
    %v812 = vld [vmem:[%s472 + $0xd] sm:$0x1]
    %v813 = vld [vmem:[%s472 + $0xe] sm:$0x1]
    %v814 = vld [vmem:[%s472 + $0xf] sm:$0x1]
    %s815 = scalar_lea.vmem [#allocation2], 4
    %v816 = vld [vmem:[%s815] sm:$0x1]
    %v817 = vld [vmem:[%s815 + $0x1] sm:$0x1]
    %v818 = vld [vmem:[%s815 + $0x2] sm:$0x1]
    %v819 = vld [vmem:[%s815 + $0x3] sm:$0x1]
    %v820 = vld [vmem:[%s815 + $0x4] sm:$0x1]
    %v821 = vld [vmem:[%s815 + $0x5] sm:$0x1]
    %v822 = vld [vmem:[%s815 + $0x6] sm:$0x1]
    %v823 = vld [vmem:[%s815 + $0x7] sm:$0x1]
    %v824 = vld [vmem:[%s815 + $0x8] sm:$0x1]
    %v825 = vld [vmem:[%s815 + $0x9] sm:$0x1]
    %v826 = vld [vmem:[%s815 + $0xa] sm:$0x1]
    %v827 = vld [vmem:[%s815 + $0xb] sm:$0x1]
    %v828 = vld [vmem:[%s815 + $0xc] sm:$0x1]
    %v829 = vld [vmem:[%s815 + $0xd] sm:$0x1]
    %v830 = vld [vmem:[%s815 + $0xe] sm:$0x1]
    %v831 = vld [vmem:[%s815 + $0xf] sm:$0x1]
    %v864 = vcombine.low %v799, %v816
    %v866 = vunpack.c.l.s4 1966171168
    %v867 = vunpack.c.0.s8 %v866
    %v868 = vlaneseq
    %v869 = vshrl.u32 %v868, 7
    %v870 = vsub.s32 %v867, %v869
    %v871 = vrot.slane %v864, %v870
    %v873 = vunpack.c.l.s4 1966171168
    %v874 = vunpack.c.0.s8 %v873
    %v875 = vlaneseq
    %v876 = vshrl.u32 %v875, 7
    %v877 = vsub.s32 %v874, %v876
    %v878 = vrot.slane %v871, %v877
    %v879 = vcombine.low %v800, %v817
    %v881 = vunpack.c.l.s4 1966171168
    %v882 = vunpack.c.0.s8 %v881
    %v883 = vlaneseq
    %v884 = vshrl.u32 %v883, 7
    %v885 = vsub.s32 %v882, %v884
    %v886 = vrot.slane %v879, %v885
    %v888 = vunpack.c.l.s4 1966171168
    %v889 = vunpack.c.0.s8 %v888
    %v890 = vlaneseq
    %v891 = vshrl.u32 %v890, 7
    %v892 = vsub.s32 %v889, %v891
    %v893 = vrot.slane %v886, %v892
    %v894 = vcombine.low %v801, %v818
    %v896 = vunpack.c.l.s4 1966171168
    %v897 = vunpack.c.0.s8 %v896
    %v898 = vlaneseq
    %v899 = vshrl.u32 %v898, 7
    %v900 = vsub.s32 %v897, %v899
    %v901 = vrot.slane %v894, %v900
    %v903 = vunpack.c.l.s4 1966171168
    %v904 = vunpack.c.0.s8 %v903
    %v905 = vlaneseq
    %v906 = vshrl.u32 %v905, 7
    %v907 = vsub.s32 %v904, %v906
    %v908 = vrot.slane %v901, %v907
    %v909 = vcombine.low %v802, %v819
    %v911 = vunpack.c.l.s4 1966171168
    %v912 = vunpack.c.0.s8 %v911
    %v913 = vlaneseq
    %v914 = vshrl.u32 %v913, 7
    %v915 = vsub.s32 %v912, %v914
    %v916 = vrot.slane %v909, %v915
    %v918 = vunpack.c.l.s4 1966171168
    %v919 = vunpack.c.0.s8 %v918
    %v920 = vlaneseq
    %v921 = vshrl.u32 %v920, 7
    %v922 = vsub.s32 %v919, %v921
    %v923 = vrot.slane %v916, %v922
    %v924 = vcombine.low %v803, %v820
    %v926 = vunpack.c.l.s4 1966171168
    %v927 = vunpack.c.0.s8 %v926
    %v928 = vlaneseq
    %v929 = vshrl.u32 %v928, 7
    %v930 = vsub.s32 %v927, %v929
    %v931 = vrot.slane %v924, %v930
    %v933 = vunpack.c.l.s4 1966171168
    %v934 = vunpack.c.0.s8 %v933
    %v935 = vlaneseq
    %v936 = vshrl.u32 %v935, 7
    %v937 = vsub.s32 %v934, %v936
    %v938 = vrot.slane %v931, %v937
    %v939 = vcombine.low %v804, %v821
    %v941 = vunpack.c.l.s4 1966171168
    %v942 = vunpack.c.0.s8 %v941
    %v943 = vlaneseq
    %v944 = vshrl.u32 %v943, 7
    %v945 = vsub.s32 %v942, %v944
    %v946 = vrot.slane %v939, %v945
    %v948 = vunpack.c.l.s4 1966171168
    %v949 = vunpack.c.0.s8 %v948
    %v950 = vlaneseq
    %v951 = vshrl.u32 %v950, 7
    %v952 = vsub.s32 %v949, %v951
    %v953 = vrot.slane %v946, %v952
    %v954 = vcombine.low %v805, %v822
    %v956 = vunpack.c.l.s4 1966171168
    %v957 = vunpack.c.0.s8 %v956
    %v958 = vlaneseq
    %v959 = vshrl.u32 %v958, 7
    %v960 = vsub.s32 %v957, %v959
    %v961 = vrot.slane %v954, %v960
    %v963 = vunpack.c.l.s4 1966171168
    %v964 = vunpack.c.0.s8 %v963
    %v965 = vlaneseq
    %v966 = vshrl.u32 %v965, 7
    %v967 = vsub.s32 %v964, %v966
    %v968 = vrot.slane %v961, %v967
    %v969 = vcombine.low %v806, %v823
    %v971 = vunpack.c.l.s4 1966171168
    %v972 = vunpack.c.0.s8 %v971
    %v973 = vlaneseq
    %v974 = vshrl.u32 %v973, 7
    %v975 = vsub.s32 %v972, %v974
    %v976 = vrot.slane %v969, %v975
    %v978 = vunpack.c.l.s4 1966171168
    %v979 = vunpack.c.0.s8 %v978
    %v980 = vlaneseq
    %v981 = vshrl.u32 %v980, 7
    %v982 = vsub.s32 %v979, %v981
    %v983 = vrot.slane %v976, %v982
    %v984 = vcombine.low %v807, %v824
    %v986 = vunpack.c.l.s4 1966171168
    %v987 = vunpack.c.0.s8 %v986
    %v988 = vlaneseq
    %v989 = vshrl.u32 %v988, 7
    %v990 = vsub.s32 %v987, %v989
    %v991 = vrot.slane %v984, %v990
    %v993 = vunpack.c.l.s4 1966171168
    %v994 = vunpack.c.0.s8 %v993
    %v995 = vlaneseq
    %v996 = vshrl.u32 %v995, 7
    %v997 = vsub.s32 %v994, %v996
    %v998 = vrot.slane %v991, %v997
    %v999 = vcombine.low %v808, %v825
    %v1001 = vunpack.c.l.s4 1966171168
    %v1002 = vunpack.c.0.s8 %v1001
    %v1003 = vlaneseq
    %v1004 = vshrl.u32 %v1003, 7
    %v1005 = vsub.s32 %v1002, %v1004
    %v1006 = vrot.slane %v999, %v1005
    %v1008 = vunpack.c.l.s4 1966171168
    %v1009 = vunpack.c.0.s8 %v1008
    %v1010 = vlaneseq
    %v1011 = vshrl.u32 %v1010, 7
    %v1012 = vsub.s32 %v1009, %v1011
    %v1013 = vrot.slane %v1006, %v1012
    %v1014 = vcombine.low %v809, %v826
    %v1016 = vunpack.c.l.s4 1966171168
    %v1017 = vunpack.c.0.s8 %v1016
    %v1018 = vlaneseq
    %v1019 = vshrl.u32 %v1018, 7
    %v1020 = vsub.s32 %v1017, %v1019
    %v1021 = vrot.slane %v1014, %v1020
    %v1023 = vunpack.c.l.s4 1966171168
    %v1024 = vunpack.c.0.s8 %v1023
    %v1025 = vlaneseq
    %v1026 = vshrl.u32 %v1025, 7
    %v1027 = vsub.s32 %v1024, %v1026
    %v1028 = vrot.slane %v1021, %v1027
    %v1029 = vcombine.low %v810, %v827
    %v1031 = vunpack.c.l.s4 1966171168
    %v1032 = vunpack.c.0.s8 %v1031
    %v1033 = vlaneseq
    %v1034 = vshrl.u32 %v1033, 7
    %v1035 = vsub.s32 %v1032, %v1034
    %v1036 = vrot.slane %v1029, %v1035
    %v1038 = vunpack.c.l.s4 1966171168
    %v1039 = vunpack.c.0.s8 %v1038
    %v1040 = vlaneseq
    %v1041 = vshrl.u32 %v1040, 7
    %v1042 = vsub.s32 %v1039, %v1041
    %v1043 = vrot.slane %v1036, %v1042
    %v1044 = vcombine.low %v811, %v828
    %v1046 = vunpack.c.l.s4 1966171168
    %v1047 = vunpack.c.0.s8 %v1046
    %v1048 = vlaneseq
    %v1049 = vshrl.u32 %v1048, 7
    %v1050 = vsub.s32 %v1047, %v1049
    %v1051 = vrot.slane %v1044, %v1050
    %v1053 = vunpack.c.l.s4 1966171168
    %v1054 = vunpack.c.0.s8 %v1053
    %v1055 = vlaneseq
    %v1056 = vshrl.u32 %v1055, 7
    %v1057 = vsub.s32 %v1054, %v1056
    %v1058 = vrot.slane %v1051, %v1057
    %v1059 = vcombine.low %v812, %v829
    %v1061 = vunpack.c.l.s4 1966171168
    %v1062 = vunpack.c.0.s8 %v1061
    %v1063 = vlaneseq
    %v1064 = vshrl.u32 %v1063, 7
    %v1065 = vsub.s32 %v1062, %v1064
    %v1066 = vrot.slane %v1059, %v1065
    %v1068 = vunpack.c.l.s4 1966171168
    %v1069 = vunpack.c.0.s8 %v1068
    %v1070 = vlaneseq
    %v1071 = vshrl.u32 %v1070, 7
    %v1072 = vsub.s32 %v1069, %v1071
    %v1073 = vrot.slane %v1066, %v1072
    %v1074 = vcombine.low %v813, %v830
    %v1076 = vunpack.c.l.s4 1966171168
    %v1077 = vunpack.c.0.s8 %v1076
    %v1078 = vlaneseq
    %v1079 = vshrl.u32 %v1078, 7
    %v1080 = vsub.s32 %v1077, %v1079
    %v1081 = vrot.slane %v1074, %v1080
    %v1083 = vunpack.c.l.s4 1966171168
    %v1084 = vunpack.c.0.s8 %v1083
    %v1085 = vlaneseq
    %v1086 = vshrl.u32 %v1085, 7
    %v1087 = vsub.s32 %v1084, %v1086
    %v1088 = vrot.slane %v1081, %v1087
    %v1089 = vcombine.low %v814, %v831
    %v1091 = vunpack.c.l.s4 1966171168
    %v1092 = vunpack.c.0.s8 %v1091
    %v1093 = vlaneseq
    %v1094 = vshrl.u32 %v1093, 7
    %v1095 = vsub.s32 %v1092, %v1094
    %v1096 = vrot.slane %v1089, %v1095
    %v1098 = vunpack.c.l.s4 1966171168
    %v1099 = vunpack.c.0.s8 %v1098
    %v1100 = vlaneseq
    %v1101 = vshrl.u32 %v1100, 7
    %v1102 = vsub.s32 %v1099, %v1101
    %v1103 = vrot.slane %v1096, %v1102
    %s1104 = scalar_lea.vmem [#allocation2], 5
    %v1105 = vld [vmem:[%s1104] sm:$0x1]
    %v1106 = vld [vmem:[%s1104 + $0x1] sm:$0x1]
    %v1107 = vld [vmem:[%s1104 + $0x2] sm:$0x1]
    %v1108 = vld [vmem:[%s1104 + $0x3] sm:$0x1]
    %v1109 = vld [vmem:[%s1104 + $0x4] sm:$0x1]
    %v1110 = vld [vmem:[%s1104 + $0x5] sm:$0x1]
    %v1111 = vld [vmem:[%s1104 + $0x6] sm:$0x1]
    %v1112 = vld [vmem:[%s1104 + $0x7] sm:$0x1]
    %v1113 = vld [vmem:[%s1104 + $0x8] sm:$0x1]
    %v1114 = vld [vmem:[%s1104 + $0x9] sm:$0x1]
    %v1115 = vld [vmem:[%s1104 + $0xa] sm:$0x1]
    %v1116 = vld [vmem:[%s1104 + $0xb] sm:$0x1]
    %v1117 = vld [vmem:[%s1104 + $0xc] sm:$0x1]
    %v1118 = vld [vmem:[%s1104 + $0xd] sm:$0x1]
    %v1119 = vld [vmem:[%s1104 + $0xe] sm:$0x1]
    %v1120 = vld [vmem:[%s1104 + $0xf] sm:$0x1]
    %v1121 = vld [vmem:[#allocation10] sm:$0xff]
    %v1122 = vld [vmem:[#allocation10 + $0x8] sm:$0xff]
    %v1123 = vld [vmem:[#allocation10 + $0x10] sm:$0xff]
    %v1124 = vld [vmem:[#allocation10 + $0x18] sm:$0xff]
    %v1125 = vld [vmem:[#allocation10 + $0x20] sm:$0xff]
    %v1126 = vld [vmem:[#allocation10 + $0x28] sm:$0xff]
    %v1127 = vld [vmem:[#allocation10 + $0x30] sm:$0xff]
    %v1128 = vld [vmem:[#allocation10 + $0x38] sm:$0xff]
    %v1129 = vld [vmem:[#allocation10 + $0x40] sm:$0xff]
    %v1130 = vld [vmem:[#allocation10 + $0x48] sm:$0xff]
    %v1131 = vld [vmem:[#allocation10 + $0x50] sm:$0xff]
    %v1132 = vld [vmem:[#allocation10 + $0x58] sm:$0xff]
    %v1133 = vld [vmem:[#allocation10 + $0x60] sm:$0xff]
    %v1134 = vld [vmem:[#allocation10 + $0x68] sm:$0xff]
    %v1135 = vld [vmem:[#allocation10 + $0x70] sm:$0xff]
    %v1136 = vld [vmem:[#allocation10 + $0x78] sm:$0xff]
    %v1137 = vld [vmem:[#allocation10 + $0x80] sm:$0xff]
    %v1138 = vld [vmem:[#allocation10 + $0x88] sm:$0xff]
    %v1139 = vld [vmem:[#allocation10 + $0x90] sm:$0xff]
    %v1140 = vld [vmem:[#allocation10 + $0x98] sm:$0xff]
    %v1141 = vld [vmem:[#allocation10 + $0xa0] sm:$0xff]
    %v1142 = vld [vmem:[#allocation10 + $0xa8] sm:$0xff]
    %v1143 = vld [vmem:[#allocation10 + $0xb0] sm:$0xff]
    %v1144 = vld [vmem:[#allocation10 + $0xb8] sm:$0xff]
    %v1145 = vld [vmem:[#allocation10 + $0xc0] sm:$0xff]
    %v1146 = vld [vmem:[#allocation10 + $0xc8] sm:$0xff]
    %v1147 = vld [vmem:[#allocation10 + $0xd0] sm:$0xff]
    %v1148 = vld [vmem:[#allocation10 + $0xd8] sm:$0xff]
    %v1149 = vld [vmem:[#allocation10 + $0xe0] sm:$0xff]
    %v1150 = vld [vmem:[#allocation10 + $0xe8] sm:$0xff]
    %v1151 = vld [vmem:[#allocation10 + $0xf0] sm:$0xff]
    %v1152 = vld [vmem:[#allocation10 + $0xf8] sm:$0xff]
    %v1153 = vld [vmem:[#allocation10 + $0x100] sm:$0xff]
    %v1154 = vld [vmem:[#allocation10 + $0x108] sm:$0xff]
    %v1155 = vld [vmem:[#allocation10 + $0x110] sm:$0xff]
    %v1156 = vld [vmem:[#allocation10 + $0x118] sm:$0xff]
    %v1157 = vld [vmem:[#allocation10 + $0x120] sm:$0xff]
    %v1158 = vld [vmem:[#allocation10 + $0x128] sm:$0xff]
    %v1159 = vld [vmem:[#allocation10 + $0x130] sm:$0xff]
    %v1160 = vld [vmem:[#allocation10 + $0x138] sm:$0xff]
    %v1161 = vld [vmem:[#allocation10 + $0x140] sm:$0xff]
    %v1162 = vld [vmem:[#allocation10 + $0x148] sm:$0xff]
    %v1163 = vld [vmem:[#allocation10 + $0x150] sm:$0xff]
    %v1164 = vld [vmem:[#allocation10 + $0x158] sm:$0xff]
    %v1165 = vld [vmem:[#allocation10 + $0x160] sm:$0xff]
    %v1166 = vld [vmem:[#allocation10 + $0x168] sm:$0xff]
    %v1167 = vld [vmem:[#allocation10 + $0x170] sm:$0xff]
    %v1168 = vld [vmem:[#allocation10 + $0x178] sm:$0xff]
    %v1169 = vld [vmem:[#allocation10 + $0x180] sm:$0xff]
    %v1170 = vld [vmem:[#allocation10 + $0x188] sm:$0xff]
    %v1171 = vld [vmem:[#allocation10 + $0x190] sm:$0xff]
    %v1172 = vld [vmem:[#allocation10 + $0x198] sm:$0xff]
    %v1173 = vld [vmem:[#allocation10 + $0x1a0] sm:$0xff]
    %v1174 = vld [vmem:[#allocation10 + $0x1a8] sm:$0xff]
    %v1175 = vld [vmem:[#allocation10 + $0x1b0] sm:$0xff]
    %v1176 = vld [vmem:[#allocation10 + $0x1b8] sm:$0xff]
    %v1177 = vld [vmem:[#allocation10 + $0x1c0] sm:$0xff]
    %v1178 = vld [vmem:[#allocation10 + $0x1c8] sm:$0xff]
    %v1179 = vld [vmem:[#allocation10 + $0x1d0] sm:$0xff]
    %v1180 = vld [vmem:[#allocation10 + $0x1d8] sm:$0xff]
    %v1181 = vld [vmem:[#allocation10 + $0x1e0] sm:$0xff]
    %v1182 = vld [vmem:[#allocation10 + $0x1e8] sm:$0xff]
    %v1183 = vld [vmem:[#allocation10 + $0x1f0] sm:$0xff]
    %v1184 = vld [vmem:[#allocation10 + $0x1f8] sm:$0xff]
    %v1185 = vcombine.low %v878, %v893
    %v1186 = vcombine.low %v908, %v923
    %v1187 = vcombine.low %v938, %v953
    %v1188 = vcombine.low %v968, %v983
    %v1190 = vunpack.c.l.s4 1966171168
    %v1191 = vunpack.c.0.s8 %v1190
    %v1192 = vlaneseq
    %v1193 = vshrl.u32 %v1192, 7
    %v1194 = vsub.s32 %v1191, %v1193
    %v1195 = vrot.slane %v1185, %v1194
    %v1197 = vunpack.c.l.s4 1966171168
    %v1198 = vunpack.c.0.s8 %v1197
    %v1199 = vlaneseq
    %v1200 = vshrl.u32 %v1199, 7
    %v1201 = vsub.s32 %v1198, %v1200
    %v1202 = vrot.slane %v1186, %v1201
    %v1204 = vunpack.c.l.s4 1966171168
    %v1205 = vunpack.c.0.s8 %v1204
    %v1206 = vlaneseq
    %v1207 = vshrl.u32 %v1206, 7
    %v1208 = vsub.s32 %v1205, %v1207
    %v1209 = vrot.slane %v1187, %v1208
    %v1211 = vunpack.c.l.s4 1966171168
    %v1212 = vunpack.c.0.s8 %v1211
    %v1213 = vlaneseq
    %v1214 = vshrl.u32 %v1213, 7
    %v1215 = vsub.s32 %v1212, %v1214
    %v1216 = vrot.slane %v1188, %v1215
    %v1217 = vcombine.low %v1195, %v1202
    %v1218 = vcombine.high %v1195, %v1202
    %v1219 = vcombine.low %v1209, %v1216
    %v1220 = vcombine.high %v1209, %v1216
    %v1222 = vunpack.c.l.s4 1966171168
    %v1223 = vunpack.c.0.s8 %v1222
    %v1224 = vlaneseq
    %v1225 = vshrl.u32 %v1224, 7
    %v1226 = vsub.s32 %v1223, %v1225
    %v1227 = vrot.slane %v1217, %v1226
    %v1229 = vunpack.c.l.s4 1966171168
    %v1230 = vunpack.c.0.s8 %v1229
    %v1231 = vlaneseq
    %v1232 = vshrl.u32 %v1231, 7
    %v1233 = vsub.s32 %v1230, %v1232
    %v1234 = vrot.slane %v1218, %v1233
    %v1236 = vunpack.c.l.s4 1966171168
    %v1237 = vunpack.c.0.s8 %v1236
    %v1238 = vlaneseq
    %v1239 = vshrl.u32 %v1238, 7
    %v1240 = vsub.s32 %v1237, %v1239
    %v1241 = vrot.slane %v1219, %v1240
    %v1243 = vunpack.c.l.s4 1966171168
    %v1244 = vunpack.c.0.s8 %v1243
    %v1245 = vlaneseq
    %v1246 = vshrl.u32 %v1245, 7
    %v1247 = vsub.s32 %v1244, %v1246
    %v1248 = vrot.slane %v1220, %v1247
    %v1249 = vcombine.low %v1227, %v1241
    %v1250 = vcombine.low %v1234, %v1248
    %v1251 = vcombine.low %v998, %v1013
    %v1252 = vcombine.low %v1028, %v1043
    %v1253 = vcombine.low %v1058, %v1073
    %v1254 = vcombine.low %v1088, %v1103
    %v1256 = vunpack.c.l.s4 1966171168
    %v1257 = vunpack.c.0.s8 %v1256
    %v1258 = vlaneseq
    %v1259 = vshrl.u32 %v1258, 7
    %v1260 = vsub.s32 %v1257, %v1259
    %v1261 = vrot.slane %v1251, %v1260
    %v1263 = vunpack.c.l.s4 1966171168
    %v1264 = vunpack.c.0.s8 %v1263
    %v1265 = vlaneseq
    %v1266 = vshrl.u32 %v1265, 7
    %v1267 = vsub.s32 %v1264, %v1266
    %v1268 = vrot.slane %v1252, %v1267
    %v1270 = vunpack.c.l.s4 1966171168
    %v1271 = vunpack.c.0.s8 %v1270
    %v1272 = vlaneseq
    %v1273 = vshrl.u32 %v1272, 7
    %v1274 = vsub.s32 %v1271, %v1273
    %v1275 = vrot.slane %v1253, %v1274
    %v1277 = vunpack.c.l.s4 1966171168
    %v1278 = vunpack.c.0.s8 %v1277
    %v1279 = vlaneseq
    %v1280 = vshrl.u32 %v1279, 7
    %v1281 = vsub.s32 %v1278, %v1280
    %v1282 = vrot.slane %v1254, %v1281
    %v1283 = vcombine.low %v1261, %v1268
    %v1284 = vcombine.high %v1261, %v1268
    %v1285 = vcombine.low %v1275, %v1282
    %v1286 = vcombine.high %v1275, %v1282
    %v1288 = vunpack.c.l.s4 1966171168
    %v1289 = vunpack.c.0.s8 %v1288
    %v1290 = vlaneseq
    %v1291 = vshrl.u32 %v1290, 7
    %v1292 = vsub.s32 %v1289, %v1291
    %v1293 = vrot.slane %v1283, %v1292
    %v1295 = vunpack.c.l.s4 1966171168
    %v1296 = vunpack.c.0.s8 %v1295
    %v1297 = vlaneseq
    %v1298 = vshrl.u32 %v1297, 7
    %v1299 = vsub.s32 %v1296, %v1298
    %v1300 = vrot.slane %v1284, %v1299
    %v1302 = vunpack.c.l.s4 1966171168
    %v1303 = vunpack.c.0.s8 %v1302
    %v1304 = vlaneseq
    %v1305 = vshrl.u32 %v1304, 7
    %v1306 = vsub.s32 %v1303, %v1305
    %v1307 = vrot.slane %v1285, %v1306
    %v1309 = vunpack.c.l.s4 1966171168
    %v1310 = vunpack.c.0.s8 %v1309
    %v1311 = vlaneseq
    %v1312 = vshrl.u32 %v1311, 7
    %v1313 = vsub.s32 %v1310, %v1312
    %v1314 = vrot.slane %v1286, %v1313
    %v1315 = vcombine.low %v1293, %v1307
    %v1316 = vcombine.low %v1300, %v1314
    %v1353 = vunpack.c.l.b16 %v1153
    %v1354 = vunpack.c.h.b16 %v1153
    %v1355 = vunpack.c.l.b16 %v1154
    %v1356 = vunpack.c.h.b16 %v1154
    %v1357 = vunpack.c.l.b16 %v1155
    %v1358 = vunpack.c.h.b16 %v1155
    %v1359 = vunpack.c.l.b16 %v1156
    %v1360 = vunpack.c.h.b16 %v1156
    %v1361 = vunpack.c.l.b16 %v1157
    %v1362 = vunpack.c.h.b16 %v1157
    %v1363 = vunpack.c.l.b16 %v1158
    %v1364 = vunpack.c.h.b16 %v1158
    %v1365 = vunpack.c.l.b16 %v1159
    %v1366 = vunpack.c.h.b16 %v1159
    %v1367 = vunpack.c.l.b16 %v1160
    %v1368 = vunpack.c.h.b16 %v1160
    %v1369 = vunpack.c.l.b16 %v1161
    %v1370 = vunpack.c.h.b16 %v1161
    %v1371 = vunpack.c.l.b16 %v1162
    %v1372 = vunpack.c.h.b16 %v1162
    %v1373 = vunpack.c.l.b16 %v1163
    %v1374 = vunpack.c.h.b16 %v1163
    %v1375 = vunpack.c.l.b16 %v1164
    %v1376 = vunpack.c.h.b16 %v1164
    %v1377 = vunpack.c.l.b16 %v1165
    %v1378 = vunpack.c.h.b16 %v1165
    %v1379 = vunpack.c.l.b16 %v1166
    %v1380 = vunpack.c.h.b16 %v1166
    %v1381 = vunpack.c.l.b16 %v1167
    %v1382 = vunpack.c.h.b16 %v1167
    %v1383 = vunpack.c.l.b16 %v1168
    %v1384 = vunpack.c.h.b16 %v1168
    %v1385 = vunpack.c.l.b16 %v1169
    %v1386 = vunpack.c.h.b16 %v1169
    %v1387 = vunpack.c.l.b16 %v1170
    %v1388 = vunpack.c.h.b16 %v1170
    %v1389 = vunpack.c.l.b16 %v1171
    %v1390 = vunpack.c.h.b16 %v1171
    %v1391 = vunpack.c.l.b16 %v1172
    %v1392 = vunpack.c.h.b16 %v1172
    %v1393 = vunpack.c.l.b16 %v1173
    %v1394 = vunpack.c.h.b16 %v1173
    %v1395 = vunpack.c.l.b16 %v1174
    %v1396 = vunpack.c.h.b16 %v1174
    %v1397 = vunpack.c.l.b16 %v1175
    %v1398 = vunpack.c.h.b16 %v1175
    %v1399 = vunpack.c.l.b16 %v1176
    %v1400 = vunpack.c.h.b16 %v1176
    %v1401 = vunpack.c.l.b16 %v1177
    %v1402 = vunpack.c.h.b16 %v1177
    %v1403 = vunpack.c.l.b16 %v1178
    %v1404 = vunpack.c.h.b16 %v1178
    %v1405 = vunpack.c.l.b16 %v1179
    %v1406 = vunpack.c.h.b16 %v1179
    %v1407 = vunpack.c.l.b16 %v1180
    %v1408 = vunpack.c.h.b16 %v1180
    %v1409 = vunpack.c.l.b16 %v1181
    %v1410 = vunpack.c.h.b16 %v1181
    %v1411 = vunpack.c.l.b16 %v1182
    %v1412 = vunpack.c.h.b16 %v1182
    %v1413 = vunpack.c.l.b16 %v1183
    %v1414 = vunpack.c.h.b16 %v1183
    %v1415 = vunpack.c.l.b16 %v1184
    %v1416 = vunpack.c.h.b16 %v1184
    %v1417 = vpack.c.b16 %v1355, %v1353
    %v1418 = vpack.c.b16 %v1356, %v1354
    %v1419 = vpack.c.b16 %v1359, %v1357
    %v1420 = vpack.c.b16 %v1360, %v1358
    %v1421 = vpack.c.b16 %v1363, %v1361
    %v1422 = vpack.c.b16 %v1364, %v1362
    %v1423 = vpack.c.b16 %v1367, %v1365
    %v1424 = vpack.c.b16 %v1368, %v1366
    %v1425 = vpack.c.b16 %v1371, %v1369
    %v1426 = vpack.c.b16 %v1372, %v1370
    %v1427 = vpack.c.b16 %v1375, %v1373
    %v1428 = vpack.c.b16 %v1376, %v1374
    %v1429 = vpack.c.b16 %v1379, %v1377
    %v1430 = vpack.c.b16 %v1380, %v1378
    %v1431 = vpack.c.b16 %v1383, %v1381
    %v1432 = vpack.c.b16 %v1384, %v1382
    %v1433 = vpack.c.b16 %v1387, %v1385
    %v1434 = vpack.c.b16 %v1388, %v1386
    %v1435 = vpack.c.b16 %v1391, %v1389
    %v1436 = vpack.c.b16 %v1392, %v1390
    %v1437 = vpack.c.b16 %v1395, %v1393
    %v1438 = vpack.c.b16 %v1396, %v1394
    %v1439 = vpack.c.b16 %v1399, %v1397
    %v1440 = vpack.c.b16 %v1400, %v1398
    %v1441 = vpack.c.b16 %v1403, %v1401
    %v1442 = vpack.c.b16 %v1404, %v1402
    %v1443 = vpack.c.b16 %v1407, %v1405
    %v1444 = vpack.c.b16 %v1408, %v1406
    %v1445 = vpack.c.b16 %v1411, %v1409
    %v1446 = vpack.c.b16 %v1412, %v1410
    %v1447 = vpack.c.b16 %v1415, %v1413
    %v1448 = vpack.c.b16 %v1416, %v1414
    %1481 = vmatprep.subr.bf16.mxu0 %v1432
    %1482 = vmatpush1.bf16.msra.mxu0 %v1431
    %1483 = vmatprep.subr.bf16.mxu0 %v1430
    %1484 = vmatpush1.bf16.msra.mxu0 %v1429
    %1485 = vmatprep.subr.bf16.mxu0 %v1428
    %1486 = vmatpush1.bf16.msra.mxu0 %v1427
    %1487 = vmatprep.subr.bf16.mxu0 %v1426
    %1488 = vmatpush1.bf16.msra.mxu0 %v1425
    %1489 = vmatprep.subr.bf16.mxu0 %v1424
    %1490 = vmatpush1.bf16.msra.mxu0 %v1423
    %1491 = vmatprep.subr.bf16.mxu0 %v1422
    %1492 = vmatpush1.bf16.msra.mxu0 %v1421
    %1493 = vmatprep.subr.bf16.mxu0 %v1420
    %1494 = vmatpush1.bf16.msra.mxu0 %v1419
    %1495 = vmatprep.subr.bf16.mxu0 %v1418
    %1496 = vmatpush1.bf16.msra.mxu0 %v1417
    %1497 = vmatprep.subr.bf16.mxu0 %v1448
    %1498 = vmatpush2.bf16.msra.mxu0 %v1447
    %1499 = vmatprep.subr.bf16.mxu0 %v1446
    %1500 = vmatpush2.bf16.msra.mxu0 %v1445
    %1501 = vmatprep.subr.bf16.mxu0 %v1444
    %1502 = vmatpush2.bf16.msra.mxu0 %v1443
    %1503 = vmatprep.subr.bf16.mxu0 %v1442
    %1504 = vmatpush2.bf16.msra.mxu0 %v1441
    %1505 = vmatprep.subr.bf16.mxu0 %v1440
    %1506 = vmatpush2.bf16.msra.mxu0 %v1439
    %1507 = vmatprep.subr.bf16.mxu0 %v1438
    %1508 = vmatpush2.bf16.msra.mxu0 %v1437
    %1509 = vmatprep.subr.bf16.mxu0 %v1436
    %1510 = vmatpush2.bf16.msra.mxu0 %v1435
    %1511 = vmatprep.subr.bf16.mxu0 %v1434
    %1512 = vmatpush2.bf16.msra.mxu0 %v1433
    %1513 = vmatprep.mubr.bf16.mxu0 %v1250
    %1514 = vmatmul.mubr.bf16.gmra.mxu0 %v1249
    %v1515 = vpop.f32.mrf.mxu0
    %v1516 = vadd.f32 0.0, %v1515
    %v1517 = vpop.f32.mrf.mxu0
    %v1518 = vadd.f32 0.0, %v1517
    %v1519 = vpop.f32.mrf.mxu0
    %v1520 = vadd.f32 0.0, %v1519
    %v1521 = vpop.f32.mrf.mxu0
    %v1522 = vadd.f32 0.0, %v1521
    %1523 = vmatprep.mubr.bf16.mxu0 %v1316
    %1524 = vmatmul.mubr.bf16.gmra.mxu0 %v1315
    %v1525 = vpop.f32.mrf.mxu0
    %v1526 = vadd.f32 0.0, %v1525
    %v1527 = vpop.f32.mrf.mxu0
    %v1528 = vadd.f32 0.0, %v1527
    %v1529 = vpop.f32.mrf.mxu0
    %v1530 = vadd.f32 0.0, %v1529
    %v1531 = vpop.f32.mrf.mxu0
    %v1532 = vadd.f32 0.0, %v1531
    %1533 = vdwg.mxu0
    %v1534 = vcombine.low %v573, %v588
    %v1535 = vcombine.low %v603, %v618
    %v1536 = vcombine.low %v633, %v648
    %v1537 = vcombine.low %v663, %v678
    %v1539 = vunpack.c.l.s4 1966171168
    %v1540 = vunpack.c.0.s8 %v1539
    %v1541 = vlaneseq
    %v1542 = vshrl.u32 %v1541, 7
    %v1543 = vsub.s32 %v1540, %v1542
    %v1544 = vrot.slane %v1534, %v1543
    %v1546 = vunpack.c.l.s4 1966171168
    %v1547 = vunpack.c.0.s8 %v1546
    %v1548 = vlaneseq
    %v1549 = vshrl.u32 %v1548, 7
    %v1550 = vsub.s32 %v1547, %v1549
    %v1551 = vrot.slane %v1535, %v1550
    %v1553 = vunpack.c.l.s4 1966171168
    %v1554 = vunpack.c.0.s8 %v1553
    %v1555 = vlaneseq
    %v1556 = vshrl.u32 %v1555, 7
    %v1557 = vsub.s32 %v1554, %v1556
    %v1558 = vrot.slane %v1536, %v1557
    %v1560 = vunpack.c.l.s4 1966171168
    %v1561 = vunpack.c.0.s8 %v1560
    %v1562 = vlaneseq
    %v1563 = vshrl.u32 %v1562, 7
    %v1564 = vsub.s32 %v1561, %v1563
    %v1565 = vrot.slane %v1537, %v1564
    %v1566 = vcombine.low %v1544, %v1551
    %v1567 = vcombine.high %v1544, %v1551
    %v1568 = vcombine.low %v1558, %v1565
    %v1569 = vcombine.high %v1558, %v1565
    %v1571 = vunpack.c.l.s4 1966171168
    %v1572 = vunpack.c.0.s8 %v1571
    %v1573 = vlaneseq
    %v1574 = vshrl.u32 %v1573, 7
    %v1575 = vsub.s32 %v1572, %v1574
    %v1576 = vrot.slane %v1566, %v1575
    %v1578 = vunpack.c.l.s4 1966171168
    %v1579 = vunpack.c.0.s8 %v1578
    %v1580 = vlaneseq
    %v1581 = vshrl.u32 %v1580, 7
    %v1582 = vsub.s32 %v1579, %v1581
    %v1583 = vrot.slane %v1567, %v1582
    %v1585 = vunpack.c.l.s4 1966171168
    %v1586 = vunpack.c.0.s8 %v1585
    %v1587 = vlaneseq
    %v1588 = vshrl.u32 %v1587, 7
    %v1589 = vsub.s32 %v1586, %v1588
    %v1590 = vrot.slane %v1568, %v1589
    %v1592 = vunpack.c.l.s4 1966171168
    %v1593 = vunpack.c.0.s8 %v1592
    %v1594 = vlaneseq
    %v1595 = vshrl.u32 %v1594, 7
    %v1596 = vsub.s32 %v1593, %v1595
    %v1597 = vrot.slane %v1569, %v1596
    %v1598 = vcombine.low %v1576, %v1590
    %v1599 = vcombine.low %v1583, %v1597
    %v1600 = vcombine.low %v693, %v708
    %v1601 = vcombine.low %v723, %v738
    %v1602 = vcombine.low %v753, %v768
    %v1603 = vcombine.low %v783, %v798
    %v1605 = vunpack.c.l.s4 1966171168
    %v1606 = vunpack.c.0.s8 %v1605
    %v1607 = vlaneseq
    %v1608 = vshrl.u32 %v1607, 7
    %v1609 = vsub.s32 %v1606, %v1608
    %v1610 = vrot.slane %v1600, %v1609
    %v1612 = vunpack.c.l.s4 1966171168
    %v1613 = vunpack.c.0.s8 %v1612
    %v1614 = vlaneseq
    %v1615 = vshrl.u32 %v1614, 7
    %v1616 = vsub.s32 %v1613, %v1615
    %v1617 = vrot.slane %v1601, %v1616
    %v1619 = vunpack.c.l.s4 1966171168
    %v1620 = vunpack.c.0.s8 %v1619
    %v1621 = vlaneseq
    %v1622 = vshrl.u32 %v1621, 7
    %v1623 = vsub.s32 %v1620, %v1622
    %v1624 = vrot.slane %v1602, %v1623
    %v1626 = vunpack.c.l.s4 1966171168
    %v1627 = vunpack.c.0.s8 %v1626
    %v1628 = vlaneseq
    %v1629 = vshrl.u32 %v1628, 7
    %v1630 = vsub.s32 %v1627, %v1629
    %v1631 = vrot.slane %v1603, %v1630
    %v1632 = vcombine.low %v1610, %v1617
    %v1633 = vcombine.high %v1610, %v1617
    %v1634 = vcombine.low %v1624, %v1631
    %v1635 = vcombine.high %v1624, %v1631
    %v1637 = vunpack.c.l.s4 1966171168
    %v1638 = vunpack.c.0.s8 %v1637
    %v1639 = vlaneseq
    %v1640 = vshrl.u32 %v1639, 7
    %v1641 = vsub.s32 %v1638, %v1640
    %v1642 = vrot.slane %v1632, %v1641
    %v1644 = vunpack.c.l.s4 1966171168
    %v1645 = vunpack.c.0.s8 %v1644
    %v1646 = vlaneseq
    %v1647 = vshrl.u32 %v1646, 7
    %v1648 = vsub.s32 %v1645, %v1647
    %v1649 = vrot.slane %v1633, %v1648
    %v1651 = vunpack.c.l.s4 1966171168
    %v1652 = vunpack.c.0.s8 %v1651
    %v1653 = vlaneseq
    %v1654 = vshrl.u32 %v1653, 7
    %v1655 = vsub.s32 %v1652, %v1654
    %v1656 = vrot.slane %v1634, %v1655
    %v1658 = vunpack.c.l.s4 1966171168
    %v1659 = vunpack.c.0.s8 %v1658
    %v1660 = vlaneseq
    %v1661 = vshrl.u32 %v1660, 7
    %v1662 = vsub.s32 %v1659, %v1661
    %v1663 = vrot.slane %v1635, %v1662
    %v1664 = vcombine.low %v1642, %v1656
    %v1665 = vcombine.low %v1649, %v1663
    %v1702 = vunpack.c.l.b16 %v1121
    %v1703 = vunpack.c.h.b16 %v1121
    %v1704 = vunpack.c.l.b16 %v1122
    %v1705 = vunpack.c.h.b16 %v1122
    %v1706 = vunpack.c.l.b16 %v1123
    %v1707 = vunpack.c.h.b16 %v1123
    %v1708 = vunpack.c.l.b16 %v1124
    %v1709 = vunpack.c.h.b16 %v1124
    %v1710 = vunpack.c.l.b16 %v1125
    %v1711 = vunpack.c.h.b16 %v1125
    %v1712 = vunpack.c.l.b16 %v1126
    %v1713 = vunpack.c.h.b16 %v1126
    %v1714 = vunpack.c.l.b16 %v1127
    %v1715 = vunpack.c.h.b16 %v1127
    %v1716 = vunpack.c.l.b16 %v1128
    %v1717 = vunpack.c.h.b16 %v1128
    %v1718 = vunpack.c.l.b16 %v1129
    %v1719 = vunpack.c.h.b16 %v1129
    %v1720 = vunpack.c.l.b16 %v1130
    %v1721 = vunpack.c.h.b16 %v1130
    %v1722 = vunpack.c.l.b16 %v1131
    %v1723 = vunpack.c.h.b16 %v1131
    %v1724 = vunpack.c.l.b16 %v1132
    %v1725 = vunpack.c.h.b16 %v1132
    %v1726 = vunpack.c.l.b16 %v1133
    %v1727 = vunpack.c.h.b16 %v1133
    %v1728 = vunpack.c.l.b16 %v1134
    %v1729 = vunpack.c.h.b16 %v1134
    %v1730 = vunpack.c.l.b16 %v1135
    %v1731 = vunpack.c.h.b16 %v1135
    %v1732 = vunpack.c.l.b16 %v1136
    %v1733 = vunpack.c.h.b16 %v1136
    %v1734 = vunpack.c.l.b16 %v1137
    %v1735 = vunpack.c.h.b16 %v1137
    %v1736 = vunpack.c.l.b16 %v1138
    %v1737 = vunpack.c.h.b16 %v1138
    %v1738 = vunpack.c.l.b16 %v1139
    %v1739 = vunpack.c.h.b16 %v1139
    %v1740 = vunpack.c.l.b16 %v1140
    %v1741 = vunpack.c.h.b16 %v1140
    %v1742 = vunpack.c.l.b16 %v1141
    %v1743 = vunpack.c.h.b16 %v1141
    %v1744 = vunpack.c.l.b16 %v1142
    %v1745 = vunpack.c.h.b16 %v1142
    %v1746 = vunpack.c.l.b16 %v1143
    %v1747 = vunpack.c.h.b16 %v1143
    %v1748 = vunpack.c.l.b16 %v1144
    %v1749 = vunpack.c.h.b16 %v1144
    %v1750 = vunpack.c.l.b16 %v1145
    %v1751 = vunpack.c.h.b16 %v1145
    %v1752 = vunpack.c.l.b16 %v1146
    %v1753 = vunpack.c.h.b16 %v1146
    %v1754 = vunpack.c.l.b16 %v1147
    %v1755 = vunpack.c.h.b16 %v1147
    %v1756 = vunpack.c.l.b16 %v1148
    %v1757 = vunpack.c.h.b16 %v1148
    %v1758 = vunpack.c.l.b16 %v1149
    %v1759 = vunpack.c.h.b16 %v1149
    %v1760 = vunpack.c.l.b16 %v1150
    %v1761 = vunpack.c.h.b16 %v1150
    %v1762 = vunpack.c.l.b16 %v1151
    %v1763 = vunpack.c.h.b16 %v1151
    %v1764 = vunpack.c.l.b16 %v1152
    %v1765 = vunpack.c.h.b16 %v1152
    %v1766 = vpack.c.b16 %v1704, %v1702
    %v1767 = vpack.c.b16 %v1705, %v1703
    %v1768 = vpack.c.b16 %v1708, %v1706
    %v1769 = vpack.c.b16 %v1709, %v1707
    %v1770 = vpack.c.b16 %v1712, %v1710
    %v1771 = vpack.c.b16 %v1713, %v1711
    %v1772 = vpack.c.b16 %v1716, %v1714
    %v1773 = vpack.c.b16 %v1717, %v1715
    %v1774 = vpack.c.b16 %v1720, %v1718
    %v1775 = vpack.c.b16 %v1721, %v1719
    %v1776 = vpack.c.b16 %v1724, %v1722
    %v1777 = vpack.c.b16 %v1725, %v1723
    %v1778 = vpack.c.b16 %v1728, %v1726
    %v1779 = vpack.c.b16 %v1729, %v1727
    %v1780 = vpack.c.b16 %v1732, %v1730
    %v1781 = vpack.c.b16 %v1733, %v1731
    %v1782 = vpack.c.b16 %v1736, %v1734
    %v1783 = vpack.c.b16 %v1737, %v1735
    %v1784 = vpack.c.b16 %v1740, %v1738
    %v1785 = vpack.c.b16 %v1741, %v1739
    %v1786 = vpack.c.b16 %v1744, %v1742
    %v1787 = vpack.c.b16 %v1745, %v1743
    %v1788 = vpack.c.b16 %v1748, %v1746
    %v1789 = vpack.c.b16 %v1749, %v1747
    %v1790 = vpack.c.b16 %v1752, %v1750
    %v1791 = vpack.c.b16 %v1753, %v1751
    %v1792 = vpack.c.b16 %v1756, %v1754
    %v1793 = vpack.c.b16 %v1757, %v1755
    %v1794 = vpack.c.b16 %v1760, %v1758
    %v1795 = vpack.c.b16 %v1761, %v1759
    %v1796 = vpack.c.b16 %v1764, %v1762
    %v1797 = vpack.c.b16 %v1765, %v1763
    %1830 = vmatprep.subr.bf16.mxu0 %v1781
    %1831 = vmatpush1.bf16.msra.mxu0 %v1780
    %1832 = vmatprep.subr.bf16.mxu0 %v1779
    %1833 = vmatpush1.bf16.msra.mxu0 %v1778
    %1834 = vmatprep.subr.bf16.mxu0 %v1777
    %1835 = vmatpush1.bf16.msra.mxu0 %v1776
    %1836 = vmatprep.subr.bf16.mxu0 %v1775
    %1837 = vmatpush1.bf16.msra.mxu0 %v1774
    %1838 = vmatprep.subr.bf16.mxu0 %v1773
    %1839 = vmatpush1.bf16.msra.mxu0 %v1772
    %1840 = vmatprep.subr.bf16.mxu0 %v1771
    %1841 = vmatpush1.bf16.msra.mxu0 %v1770
    %1842 = vmatprep.subr.bf16.mxu0 %v1769
    %1843 = vmatpush1.bf16.msra.mxu0 %v1768
    %1844 = vmatprep.subr.bf16.mxu0 %v1767
    %1845 = vmatpush1.bf16.msra.mxu0 %v1766
    %1846 = vmatprep.subr.bf16.mxu0 %v1797
    %1847 = vmatpush2.bf16.msra.mxu0 %v1796
    %1848 = vmatprep.subr.bf16.mxu0 %v1795
    %1849 = vmatpush2.bf16.msra.mxu0 %v1794
    %1850 = vmatprep.subr.bf16.mxu0 %v1793
    %1851 = vmatpush2.bf16.msra.mxu0 %v1792
    %1852 = vmatprep.subr.bf16.mxu0 %v1791
    %1853 = vmatpush2.bf16.msra.mxu0 %v1790
    %1854 = vmatprep.subr.bf16.mxu0 %v1789
    %1855 = vmatpush2.bf16.msra.mxu0 %v1788
    %1856 = vmatprep.subr.bf16.mxu0 %v1787
    %1857 = vmatpush2.bf16.msra.mxu0 %v1786
    %1858 = vmatprep.subr.bf16.mxu0 %v1785
    %1859 = vmatpush2.bf16.msra.mxu0 %v1784
    %1860 = vmatprep.subr.bf16.mxu0 %v1783
    %1861 = vmatpush2.bf16.msra.mxu0 %v1782
    %1862 = vmatprep.mubr.bf16.mxu0 %v1599
    %1863 = vmatmul.mubr.bf16.gmra.mxu0 %v1598
    %v1864 = vpop.f32.mrf.mxu0
    %v1865 = vadd.f32 %v1516, %v1864
    %v1866 = vpop.f32.mrf.mxu0
    %v1867 = vadd.f32 %v1518, %v1866
    %v1868 = vpop.f32.mrf.mxu0
    %v1869 = vadd.f32 %v1520, %v1868
    %v1870 = vpop.f32.mrf.mxu0
    %v1871 = vadd.f32 %v1522, %v1870
    %1872 = vmatprep.mubr.bf16.mxu0 %v1665
    %1873 = vmatmul.mubr.bf16.gmra.mxu0 %v1664
    %v1874 = vpop.f32.mrf.mxu0
    %v1875 = vadd.f32 %v1526, %v1874
    %v1876 = vpop.f32.mrf.mxu0
    %v1877 = vadd.f32 %v1528, %v1876
    %v1878 = vpop.f32.mrf.mxu0
    %v1879 = vadd.f32 %v1530, %v1878
    %v1880 = vpop.f32.mrf.mxu0
    %v1881 = vadd.f32 %v1532, %v1880
    %1882 = vdwg.mxu0
    %v1883 = vld [vmem:[#allocation10 + $0x200] sm:$0xff]
    %v1884 = vld [vmem:[#allocation10 + $0x208] sm:$0xff]
    %v1885 = vld [vmem:[#allocation10 + $0x210] sm:$0xff]
    %v1886 = vld [vmem:[#allocation10 + $0x218] sm:$0xff]
    %v1887 = vld [vmem:[#allocation10 + $0x220] sm:$0xff]
    %v1888 = vld [vmem:[#allocation10 + $0x228] sm:$0xff]
    %v1889 = vld [vmem:[#allocation10 + $0x230] sm:$0xff]
    %v1890 = vld [vmem:[#allocation10 + $0x238] sm:$0xff]
    %v1891 = vld [vmem:[#allocation10 + $0x240] sm:$0xff]
    %v1892 = vld [vmem:[#allocation10 + $0x248] sm:$0xff]
    %v1893 = vld [vmem:[#allocation10 + $0x250] sm:$0xff]
    %v1894 = vld [vmem:[#allocation10 + $0x258] sm:$0xff]
    %v1895 = vld [vmem:[#allocation10 + $0x260] sm:$0xff]
    %v1896 = vld [vmem:[#allocation10 + $0x268] sm:$0xff]
    %v1897 = vld [vmem:[#allocation10 + $0x270] sm:$0xff]
    %v1898 = vld [vmem:[#allocation10 + $0x278] sm:$0xff]
    %v1915 = vcombine.low %v1105, %v1106
    %v1916 = vcombine.low %v1107, %v1108
    %v1917 = vcombine.low %v1109, %v1110
    %v1918 = vcombine.low %v1111, %v1112
    %v1920 = vunpack.c.l.s4 1966171168
    %v1921 = vunpack.c.0.s8 %v1920
    %v1922 = vlaneseq
    %v1923 = vshrl.u32 %v1922, 7
    %v1924 = vsub.s32 %v1921, %v1923
    %v1925 = vrot.slane %v1915, %v1924
    %v1927 = vunpack.c.l.s4 1966171168
    %v1928 = vunpack.c.0.s8 %v1927
    %v1929 = vlaneseq
    %v1930 = vshrl.u32 %v1929, 7
    %v1931 = vsub.s32 %v1928, %v1930
    %v1932 = vrot.slane %v1916, %v1931
    %v1934 = vunpack.c.l.s4 1966171168
    %v1935 = vunpack.c.0.s8 %v1934
    %v1936 = vlaneseq
    %v1937 = vshrl.u32 %v1936, 7
    %v1938 = vsub.s32 %v1935, %v1937
    %v1939 = vrot.slane %v1917, %v1938
    %v1941 = vunpack.c.l.s4 1966171168
    %v1942 = vunpack.c.0.s8 %v1941
    %v1943 = vlaneseq
    %v1944 = vshrl.u32 %v1943, 7
    %v1945 = vsub.s32 %v1942, %v1944
    %v1946 = vrot.slane %v1918, %v1945
    %v1947 = vcombine.low %v1925, %v1932
    %v1948 = vcombine.low %v1939, %v1946
    %v1950 = vunpack.c.l.s4 1966171168
    %v1951 = vunpack.c.0.s8 %v1950
    %v1952 = vlaneseq
    %v1953 = vshrl.u32 %v1952, 7
    %v1954 = vsub.s32 %v1951, %v1953
    %v1955 = vrot.slane %v1947, %v1954
    %v1957 = vunpack.c.l.s4 1966171168
    %v1958 = vunpack.c.0.s8 %v1957
    %v1959 = vlaneseq
    %v1960 = vshrl.u32 %v1959, 7
    %v1961 = vsub.s32 %v1958, %v1960
    %v1962 = vrot.slane %v1948, %v1961
    %v1963 = vcombine.low %v1955, %v1962
    %v1964 = vcombine.low %v1113, %v1114
    %v1965 = vcombine.low %v1115, %v1116
    %v1966 = vcombine.low %v1117, %v1118
    %v1967 = vcombine.low %v1119, %v1120
    %v1969 = vunpack.c.l.s4 1966171168
    %v1970 = vunpack.c.0.s8 %v1969
    %v1971 = vlaneseq
    %v1972 = vshrl.u32 %v1971, 7
    %v1973 = vsub.s32 %v1970, %v1972
    %v1974 = vrot.slane %v1964, %v1973
    %v1976 = vunpack.c.l.s4 1966171168
    %v1977 = vunpack.c.0.s8 %v1976
    %v1978 = vlaneseq
    %v1979 = vshrl.u32 %v1978, 7
    %v1980 = vsub.s32 %v1977, %v1979
    %v1981 = vrot.slane %v1965, %v1980
    %v1983 = vunpack.c.l.s4 1966171168
    %v1984 = vunpack.c.0.s8 %v1983
    %v1985 = vlaneseq
    %v1986 = vshrl.u32 %v1985, 7
    %v1987 = vsub.s32 %v1984, %v1986
    %v1988 = vrot.slane %v1966, %v1987
    %v1990 = vunpack.c.l.s4 1966171168
    %v1991 = vunpack.c.0.s8 %v1990
    %v1992 = vlaneseq
    %v1993 = vshrl.u32 %v1992, 7
    %v1994 = vsub.s32 %v1991, %v1993
    %v1995 = vrot.slane %v1967, %v1994
    %v1996 = vcombine.low %v1974, %v1981
    %v1997 = vcombine.low %v1988, %v1995
    %v1999 = vunpack.c.l.s4 1966171168
    %v2000 = vunpack.c.0.s8 %v1999
    %v2001 = vlaneseq
    %v2002 = vshrl.u32 %v2001, 7
    %v2003 = vsub.s32 %v2000, %v2002
    %v2004 = vrot.slane %v1996, %v2003
    %v2006 = vunpack.c.l.s4 1966171168
    %v2007 = vunpack.c.0.s8 %v2006
    %v2008 = vlaneseq
    %v2009 = vshrl.u32 %v2008, 7
    %v2010 = vsub.s32 %v2007, %v2009
    %v2011 = vrot.slane %v1997, %v2010
    %v2012 = vcombine.low %v2004, %v2011
    %v2031 = vunpack.c.l.b16 %v1883
    %v2032 = vunpack.c.h.b16 %v1883
    %v2033 = vunpack.c.l.b16 %v1884
    %v2034 = vunpack.c.h.b16 %v1884
    %v2035 = vunpack.c.l.b16 %v1885
    %v2036 = vunpack.c.h.b16 %v1885
    %v2037 = vunpack.c.l.b16 %v1886
    %v2038 = vunpack.c.h.b16 %v1886
    %v2039 = vunpack.c.l.b16 %v1887
    %v2040 = vunpack.c.h.b16 %v1887
    %v2041 = vunpack.c.l.b16 %v1888
    %v2042 = vunpack.c.h.b16 %v1888
    %v2043 = vunpack.c.l.b16 %v1889
    %v2044 = vunpack.c.h.b16 %v1889
    %v2045 = vunpack.c.l.b16 %v1890
    %v2046 = vunpack.c.h.b16 %v1890
    %v2047 = vunpack.c.l.b16 %v1891
    %v2048 = vunpack.c.h.b16 %v1891
    %v2049 = vunpack.c.l.b16 %v1892
    %v2050 = vunpack.c.h.b16 %v1892
    %v2051 = vunpack.c.l.b16 %v1893
    %v2052 = vunpack.c.h.b16 %v1893
    %v2053 = vunpack.c.l.b16 %v1894
    %v2054 = vunpack.c.h.b16 %v1894
    %v2055 = vunpack.c.l.b16 %v1895
    %v2056 = vunpack.c.h.b16 %v1895
    %v2057 = vunpack.c.l.b16 %v1896
    %v2058 = vunpack.c.h.b16 %v1896
    %v2059 = vunpack.c.l.b16 %v1897
    %v2060 = vunpack.c.h.b16 %v1897
    %v2061 = vunpack.c.l.b16 %v1898
    %v2062 = vunpack.c.h.b16 %v1898
    %v2063 = vpack.c.b16 %v2033, %v2031
    %v2064 = vpack.c.b16 %v2034, %v2032
    %v2065 = vpack.c.b16 %v2037, %v2035
    %v2066 = vpack.c.b16 %v2038, %v2036
    %v2067 = vpack.c.b16 %v2041, %v2039
    %v2068 = vpack.c.b16 %v2042, %v2040
    %v2069 = vpack.c.b16 %v2045, %v2043
    %v2070 = vpack.c.b16 %v2046, %v2044
    %v2071 = vpack.c.b16 %v2049, %v2047
    %v2072 = vpack.c.b16 %v2050, %v2048
    %v2073 = vpack.c.b16 %v2053, %v2051
    %v2074 = vpack.c.b16 %v2054, %v2052
    %v2075 = vpack.c.b16 %v2057, %v2055
    %v2076 = vpack.c.b16 %v2058, %v2056
    %v2077 = vpack.c.b16 %v2061, %v2059
    %v2078 = vpack.c.b16 %v2062, %v2060
    %2095 = vmatprep.subr.bf16.mxu0 %v2078
    %2096 = vmatpush1.bf16.msra.mxu0 %v2077
    %2097 = vmatprep.subr.bf16.mxu0 %v2076
    %2098 = vmatpush1.bf16.msra.mxu0 %v2075
    %2099 = vmatprep.subr.bf16.mxu0 %v2074
    %2100 = vmatpush1.bf16.msra.mxu0 %v2073
    %2101 = vmatprep.subr.bf16.mxu0 %v2072
    %2102 = vmatpush1.bf16.msra.mxu0 %v2071
    %2103 = vmatprep.subr.bf16.mxu0 %v2070
    %2104 = vmatpush1.bf16.msra.mxu0 %v2069
    %2105 = vmatprep.subr.bf16.mxu0 %v2068
    %2106 = vmatpush1.bf16.msra.mxu0 %v2067
    %2107 = vmatprep.subr.bf16.mxu0 %v2066
    %2108 = vmatpush1.bf16.msra.mxu0 %v2065
    %2109 = vmatprep.subr.bf16.mxu0 %v2064
    %2110 = vmatpush1.bf16.msra.mxu0 %v2063
    %2111 = vmatprep.subr.bf16.mxu0 0
    %2112 = vmatpush2.bf16.msra.mxu0 0
    %2113 = vmatprep.subr.bf16.mxu0 0
    %2114 = vmatpush2.bf16.msra.mxu0 0
    %2115 = vmatprep.subr.bf16.mxu0 0
    %2116 = vmatpush2.bf16.msra.mxu0 0
    %2117 = vmatprep.subr.bf16.mxu0 0
    %2118 = vmatpush2.bf16.msra.mxu0 0
    %2119 = vmatprep.subr.bf16.mxu0 0
    %2120 = vmatpush2.bf16.msra.mxu0 0
    %2121 = vmatprep.subr.bf16.mxu0 0
    %2122 = vmatpush2.bf16.msra.mxu0 0
    %2123 = vmatprep.subr.bf16.mxu0 0
    %2124 = vmatpush2.bf16.msra.mxu0 0
    %2125 = vmatprep.subr.bf16.mxu0 0
    %2126 = vmatpush2.bf16.msra.mxu0 0
    %2127 = vmatprep.mubr.bf16.mxu0 0
    %2128 = vmatmul.mubr.bf16.gmra.mxu0 %v1963
    %v2129 = vpop.f32.mrf.mxu0
    %v2130 = vadd.f32 0.0, %v2129
    %v2131 = vpop.f32.mrf.mxu0
    %v2132 = vadd.f32 0.0, %v2131
    %v2133 = vpop.f32.mrf.mxu0
    %v2134 = vadd.f32 0.0, %v2133
    %v2135 = vpop.f32.mrf.mxu0
    %v2136 = vadd.f32 0.0, %v2135
    %2137 = vmatprep.mubr.bf16.mxu0 0
    %2138 = vmatmul.mubr.bf16.gmra.mxu0 %v2012
    %v2139 = vpop.f32.mrf.mxu0
    %v2140 = vadd.f32 0.0, %v2139
    %v2141 = vpop.f32.mrf.mxu0
    %v2142 = vadd.f32 0.0, %v2141
    %v2143 = vpop.f32.mrf.mxu0
    %v2144 = vadd.f32 0.0, %v2143
    %v2145 = vpop.f32.mrf.mxu0
    %v2146 = vadd.f32 0.0, %v2145
    %2147 = vdwg.mxu0
    %v2148 = vadd.f32 %v1865, %v2130
    %v2149 = vadd.f32 %v1867, %v2132
    %v2150 = vadd.f32 %v1869, %v2134
    %v2151 = vadd.f32 %v1871, %v2136
    %v2152 = vadd.f32 %v1875, %v2140
    %v2153 = vadd.f32 %v1877, %v2142
    %v2154 = vadd.f32 %v1879, %v2144
    %v2155 = vadd.f32 %v1881, %v2146
    %v2157 = vlaneseq
    %v2158 = vshrl.u32 %v2157, 7
    %v2159 = vsub.s32 0, %v2158
    %v2160 = vrot.slane %v105, %v2159
    %v2161 = vlaneseq
    %v2162 = vshrl.u32 %v2161, 7
    %v2163 = vsub.s32 1, %v2162
    %v2164 = vrot.slane %v105, %v2163
    %v2167 = vmul.f32 %v2148, %v2160
    %v2168 = vmul.f32 %v2149, %v2164
    %v2169 = vmul.f32 %v2150, %v2160
    %v2170 = vmul.f32 %v2151, %v2164
    %v2171 = vmul.f32 %v2152, %v2160
    %v2172 = vmul.f32 %v2153, %v2164
    %v2173 = vmul.f32 %v2154, %v2160
    %v2174 = vmul.f32 %v2155, %v2164
    %v2176 = vlaneseq
    %v2177 = vshrl.u32 %v2176, 7
    %v2178 = vsub.s32 0, %v2177
    %v2179 = vrot.slane %v106, %v2178
    %v2180 = vlaneseq
    %v2181 = vshrl.u32 %v2180, 7
    %v2182 = vsub.s32 1, %v2181
    %v2183 = vrot.slane %v106, %v2182
    %v2186 = vadd.f32 %v2167, %v2179
    %v2187 = vadd.f32 %v2168, %v2183
    %v2188 = vadd.f32 %v2169, %v2179
    %v2189 = vadd.f32 %v2170, %v2183
    %v2190 = vadd.f32 %v2171, %v2179
    %v2191 = vadd.f32 %v2172, %v2183
    %v2192 = vadd.f32 %v2173, %v2179
    %v2193 = vadd.f32 %v2174, %v2183
    %v2194 = vmax.f32 %v2186, 0.0
    %v2195 = vmax.f32 %v2187, 0.0
    %v2196 = vmax.f32 %v2188, 0.0
    %v2197 = vmax.f32 %v2189, 0.0
    %v2198 = vmax.f32 %v2190, 0.0
    %v2199 = vmax.f32 %v2191, 0.0
    %v2200 = vmax.f32 %v2192, 0.0
    %v2201 = vmax.f32 %v2193, 0.0
    %2202 = vst [vmem:[#allocation3] sm:$0x3] 0
    %v2203 = vpack.c.bf16 %v2196, %v2194
    %v2204 = vpack.c.bf16 %v2197, %v2195
    %v2205 = vpack.c.bf16 %v2200, %v2198
    %v2206 = vpack.c.bf16 %v2201, %v2199
    %v2211 = vcombine.low %v2203, %v2204
    %v2212 = vcombine.high %v2203, %v2204
    %v2214 = vunpack.c.l.s4 1966171168
    %v2215 = vunpack.c.0.s8 %v2214
    %v2216 = vlaneseq
    %v2217 = vshrl.u32 %v2216, 7
    %v2218 = vsub.s32 %v2215, %v2217
    %v2219 = vrot.slane %v2211, %v2218
    %v2221 = vunpack.c.l.s4 1966171168
    %v2222 = vunpack.c.0.s8 %v2221
    %v2223 = vlaneseq
    %v2224 = vshrl.u32 %v2223, 7
    %v2225 = vsub.s32 %v2222, %v2224
    %v2226 = vrot.slane %v2212, %v2225
    %v2227 = vcombine.high %v2219, %v2219
    %v2228 = vcombine.high %v2226, %v2226
    %v2230 = vunpack.c.l.s4 1966171168
    %v2231 = vunpack.c.0.s8 %v2230
    %v2232 = vlaneseq
    %v2233 = vshrl.u32 %v2232, 7
    %v2234 = vsub.s32 %v2231, %v2233
    %v2235 = vrot.slane %v2219, %v2234
    %v2237 = vunpack.c.l.s4 1966171168
    %v2238 = vunpack.c.0.s8 %v2237
    %v2239 = vlaneseq
    %v2240 = vshrl.u32 %v2239, 7
    %v2241 = vsub.s32 %v2238, %v2240
    %v2242 = vrot.slane %v2226, %v2241
    %v2244 = vunpack.c.l.s4 1966171168
    %v2245 = vunpack.c.0.s8 %v2244
    %v2246 = vlaneseq
    %v2247 = vshrl.u32 %v2246, 7
    %v2248 = vsub.s32 %v2245, %v2247
    %v2249 = vrot.slane %v2227, %v2248
    %v2251 = vunpack.c.l.s4 1966171168
    %v2252 = vunpack.c.0.s8 %v2251
    %v2253 = vlaneseq
    %v2254 = vshrl.u32 %v2253, 7
    %v2255 = vsub.s32 %v2252, %v2254
    %v2256 = vrot.slane %v2228, %v2255
    %v2257 = vcombine.high %v2235, %v2235
    %v2258 = vcombine.high %v2242, %v2242
    %v2259 = vcombine.high %v2249, %v2249
    %v2260 = vcombine.high %v2256, %v2256
    %v2261 = vcombine.low %v2205, %v2206
    %v2262 = vcombine.high %v2205, %v2206
    %v2264 = vunpack.c.l.s4 1966171168
    %v2265 = vunpack.c.0.s8 %v2264
    %v2266 = vlaneseq
    %v2267 = vshrl.u32 %v2266, 7
    %v2268 = vsub.s32 %v2265, %v2267
    %v2269 = vrot.slane %v2261, %v2268
    %v2271 = vunpack.c.l.s4 1966171168
    %v2272 = vunpack.c.0.s8 %v2271
    %v2273 = vlaneseq
    %v2274 = vshrl.u32 %v2273, 7
    %v2275 = vsub.s32 %v2272, %v2274
    %v2276 = vrot.slane %v2262, %v2275
    %v2277 = vcombine.high %v2269, %v2269
    %v2278 = vcombine.high %v2276, %v2276
    %v2280 = vunpack.c.l.s4 1966171168
    %v2281 = vunpack.c.0.s8 %v2280
    %v2282 = vlaneseq
    %v2283 = vshrl.u32 %v2282, 7
    %v2284 = vsub.s32 %v2281, %v2283
    %v2285 = vrot.slane %v2269, %v2284
    %v2287 = vunpack.c.l.s4 1966171168
    %v2288 = vunpack.c.0.s8 %v2287
    %v2289 = vlaneseq
    %v2290 = vshrl.u32 %v2289, 7
    %v2291 = vsub.s32 %v2288, %v2290
    %v2292 = vrot.slane %v2276, %v2291
    %v2294 = vunpack.c.l.s4 1966171168
    %v2295 = vunpack.c.0.s8 %v2294
    %v2296 = vlaneseq
    %v2297 = vshrl.u32 %v2296, 7
    %v2298 = vsub.s32 %v2295, %v2297
    %v2299 = vrot.slane %v2277, %v2298
    %v2301 = vunpack.c.l.s4 1966171168
    %v2302 = vunpack.c.0.s8 %v2301
    %v2303 = vlaneseq
    %v2304 = vshrl.u32 %v2303, 7
    %v2305 = vsub.s32 %v2302, %v2304
    %v2306 = vrot.slane %v2278, %v2305
    %v2307 = vcombine.high %v2285, %v2285
    %v2308 = vcombine.high %v2292, %v2292
    %v2309 = vcombine.high %v2299, %v2299
    %v2310 = vcombine.high %v2306, %v2306
    %s2327 = scalar_lea.vmem [#allocation3], 2
    %2328 = vst [vmem:[%s2327] sm:$0x3] %v2235
    %2329 = vst [vmem:[%s2327 + $0x2] sm:$0x3] %v2249
    %2330 = vst [vmem:[%s2327 + $0x4] sm:$0x3] %v2257
    %2331 = vst [vmem:[%s2327 + $0x6] sm:$0x3] %v2259
    %2332 = vst [vmem:[%s2327 + $0x8] sm:$0x3] %v2242
    %2333 = vst [vmem:[%s2327 + $0xa] sm:$0x3] %v2256
    %2334 = vst [vmem:[%s2327 + $0xc] sm:$0x3] %v2258
    %2335 = vst [vmem:[%s2327 + $0xe] sm:$0x3] %v2260
    %2336 = vst [vmem:[%s2327 + $0x10] sm:$0x3] %v2285
    %2337 = vst [vmem:[%s2327 + $0x12] sm:$0x3] %v2299
    %2338 = vst [vmem:[%s2327 + $0x14] sm:$0x3] %v2307
    %2339 = vst [vmem:[%s2327 + $0x16] sm:$0x3] %v2309
    %2340 = vst [vmem:[%s2327 + $0x18] sm:$0x3] %v2292
    %2341 = vst [vmem:[%s2327 + $0x1a] sm:$0x3] %v2306
    %2342 = vst [vmem:[%s2327 + $0x1c] sm:$0x3] %v2308
    %2343 = vst [vmem:[%s2327 + $0x1e] sm:$0x3] %v2310
    %s2344 = scalar_lea.vmem [#allocation3], 34
    %2345 = vst [vmem:[%s2344] sm:$0x3] 0
    %v2346 = vld [vmem:[#allocation3] sm:$0x3]
    %v2347 = vld [vmem:[#allocation3 + $0x2] sm:$0x3]
    %v2348 = vld [vmem:[#allocation3 + $0x4] sm:$0x3]
    %v2349 = vld [vmem:[#allocation3 + $0x6] sm:$0x3]
    %v2350 = vld [vmem:[#allocation3 + $0x8] sm:$0x3]
    %v2351 = vld [vmem:[#allocation3 + $0xa] sm:$0x3]
    %v2352 = vld [vmem:[#allocation3 + $0xc] sm:$0x3]
    %v2353 = vld [vmem:[#allocation3 + $0xe] sm:$0x3]
    %v2354 = vld [vmem:[#allocation3 + $0x10] sm:$0x3]
    %v2355 = vld [vmem:[#allocation3 + $0x12] sm:$0x3]
    %v2356 = vld [vmem:[#allocation3 + $0x14] sm:$0x3]
    %v2357 = vld [vmem:[#allocation3 + $0x16] sm:$0x3]
    %v2358 = vld [vmem:[#allocation3 + $0x18] sm:$0x3]
    %v2359 = vld [vmem:[#allocation3 + $0x1a] sm:$0x3]
    %v2360 = vld [vmem:[#allocation3 + $0x1c] sm:$0x3]
    %v2361 = vld [vmem:[#allocation3 + $0x1e] sm:$0x3]
    %v2362 = vld [vmem:[#allocation12] sm:$0xf]
    %v2363 = vld [vmem:[#allocation12 + $0x4] sm:$0xf]
    %v2364 = vld [vmem:[#allocation12 + $0x8] sm:$0xf]
    %v2365 = vld [vmem:[#allocation12 + $0xc] sm:$0xf]
    %v2366 = vld [vmem:[#allocation12 + $0x10] sm:$0xf]
    %v2367 = vld [vmem:[#allocation12 + $0x14] sm:$0xf]
    %v2368 = vld [vmem:[#allocation12 + $0x18] sm:$0xf]
    %v2369 = vld [vmem:[#allocation12 + $0x1c] sm:$0xf]
    %v2370 = vld [vmem:[#allocation12 + $0x20] sm:$0xf]
    %v2371 = vld [vmem:[#allocation12 + $0x24] sm:$0xf]
    %v2372 = vld [vmem:[#allocation12 + $0x28] sm:$0xf]
    %v2373 = vld [vmem:[#allocation12 + $0x2c] sm:$0xf]
    %v2374 = vld [vmem:[#allocation12 + $0x30] sm:$0xf]
    %v2375 = vld [vmem:[#allocation12 + $0x34] sm:$0xf]
    %v2376 = vld [vmem:[#allocation12 + $0x38] sm:$0xf]
    %v2377 = vld [vmem:[#allocation12 + $0x3c] sm:$0xf]
    %v2378 = vld [vmem:[#allocation12 + $0x40] sm:$0xf]
    %v2379 = vld [vmem:[#allocation12 + $0x44] sm:$0xf]
    %v2380 = vld [vmem:[#allocation12 + $0x48] sm:$0xf]
    %v2381 = vld [vmem:[#allocation12 + $0x4c] sm:$0xf]
    %v2382 = vld [vmem:[#allocation12 + $0x50] sm:$0xf]
    %v2383 = vld [vmem:[#allocation12 + $0x54] sm:$0xf]
    %v2384 = vld [vmem:[#allocation12 + $0x58] sm:$0xf]
    %v2385 = vld [vmem:[#allocation12 + $0x5c] sm:$0xf]
    %v2386 = vld [vmem:[#allocation12 + $0x60] sm:$0xf]
    %v2387 = vld [vmem:[#allocation12 + $0x64] sm:$0xf]
    %v2388 = vld [vmem:[#allocation12 + $0x68] sm:$0xf]
    %v2389 = vld [vmem:[#allocation12 + $0x6c] sm:$0xf]
    %v2390 = vld [vmem:[#allocation12 + $0x70] sm:$0xf]
    %v2391 = vld [vmem:[#allocation12 + $0x74] sm:$0xf]
    %v2392 = vld [vmem:[#allocation12 + $0x78] sm:$0xf]
    %v2393 = vld [vmem:[#allocation12 + $0x7c] sm:$0xf]
    %v2394 = vld [vmem:[%s2327] sm:$0x3]
    %v2395 = vld [vmem:[%s2327 + $0x2] sm:$0x3]
    %v2396 = vld [vmem:[%s2327 + $0x4] sm:$0x3]
    %v2397 = vld [vmem:[%s2327 + $0x6] sm:$0x3]
    %v2398 = vld [vmem:[%s2327 + $0x8] sm:$0x3]
    %v2399 = vld [vmem:[%s2327 + $0xa] sm:$0x3]
    %v2400 = vld [vmem:[%s2327 + $0xc] sm:$0x3]
    %v2401 = vld [vmem:[%s2327 + $0xe] sm:$0x3]
    %v2402 = vld [vmem:[%s2327 + $0x10] sm:$0x3]
    %v2403 = vld [vmem:[%s2327 + $0x12] sm:$0x3]
    %v2404 = vld [vmem:[%s2327 + $0x14] sm:$0x3]
    %v2405 = vld [vmem:[%s2327 + $0x16] sm:$0x3]
    %v2406 = vld [vmem:[%s2327 + $0x18] sm:$0x3]
    %v2407 = vld [vmem:[%s2327 + $0x1a] sm:$0x3]
    %v2408 = vld [vmem:[%s2327 + $0x1c] sm:$0x3]
    %v2409 = vld [vmem:[%s2327 + $0x1e] sm:$0x3]
    %v2410 = vld [vmem:[#allocation12 + $0x80] sm:$0xf]
    %v2411 = vld [vmem:[#allocation12 + $0x84] sm:$0xf]
    %v2412 = vld [vmem:[#allocation12 + $0x88] sm:$0xf]
    %v2413 = vld [vmem:[#allocation12 + $0x8c] sm:$0xf]
    %v2414 = vld [vmem:[#allocation12 + $0x90] sm:$0xf]
    %v2415 = vld [vmem:[#allocation12 + $0x94] sm:$0xf]
    %v2416 = vld [vmem:[#allocation12 + $0x98] sm:$0xf]
    %v2417 = vld [vmem:[#allocation12 + $0x9c] sm:$0xf]
    %v2418 = vld [vmem:[#allocation12 + $0xa0] sm:$0xf]
    %v2419 = vld [vmem:[#allocation12 + $0xa4] sm:$0xf]
    %v2420 = vld [vmem:[#allocation12 + $0xa8] sm:$0xf]
    %v2421 = vld [vmem:[#allocation12 + $0xac] sm:$0xf]
    %v2422 = vld [vmem:[#allocation12 + $0xb0] sm:$0xf]
    %v2423 = vld [vmem:[#allocation12 + $0xb4] sm:$0xf]
    %v2424 = vld [vmem:[#allocation12 + $0xb8] sm:$0xf]
    %v2425 = vld [vmem:[#allocation12 + $0xbc] sm:$0xf]
    %v2426 = vld [vmem:[#allocation12 + $0xc0] sm:$0xf]
    %v2427 = vld [vmem:[#allocation12 + $0xc4] sm:$0xf]
    %v2428 = vld [vmem:[#allocation12 + $0xc8] sm:$0xf]
    %v2429 = vld [vmem:[#allocation12 + $0xcc] sm:$0xf]
    %v2430 = vld [vmem:[#allocation12 + $0xd0] sm:$0xf]
    %v2431 = vld [vmem:[#allocation12 + $0xd4] sm:$0xf]
    %v2432 = vld [vmem:[#allocation12 + $0xd8] sm:$0xf]
    %v2433 = vld [vmem:[#allocation12 + $0xdc] sm:$0xf]
    %v2434 = vld [vmem:[#allocation12 + $0xe0] sm:$0xf]
    %v2435 = vld [vmem:[#allocation12 + $0xe4] sm:$0xf]
    %v2436 = vld [vmem:[#allocation12 + $0xe8] sm:$0xf]
    %v2437 = vld [vmem:[#allocation12 + $0xec] sm:$0xf]
    %v2438 = vld [vmem:[#allocation12 + $0xf0] sm:$0xf]
    %v2439 = vld [vmem:[#allocation12 + $0xf4] sm:$0xf]
    %v2440 = vld [vmem:[#allocation12 + $0xf8] sm:$0xf]
    %v2441 = vld [vmem:[#allocation12 + $0xfc] sm:$0xf]
    %v2458 = vcombine.low %v2394, %v2395
    %v2459 = vcombine.low %v2396, %v2397
    %v2460 = vcombine.low %v2398, %v2399
    %v2461 = vcombine.low %v2400, %v2401
    %v2463 = vunpack.c.l.s4 1966171168
    %v2464 = vunpack.c.0.s8 %v2463
    %v2465 = vlaneseq
    %v2466 = vshrl.u32 %v2465, 7
    %v2467 = vsub.s32 %v2464, %v2466
    %v2468 = vrot.slane %v2458, %v2467
    %v2470 = vunpack.c.l.s4 1966171168
    %v2471 = vunpack.c.0.s8 %v2470
    %v2472 = vlaneseq
    %v2473 = vshrl.u32 %v2472, 7
    %v2474 = vsub.s32 %v2471, %v2473
    %v2475 = vrot.slane %v2459, %v2474
    %v2477 = vunpack.c.l.s4 1966171168
    %v2478 = vunpack.c.0.s8 %v2477
    %v2479 = vlaneseq
    %v2480 = vshrl.u32 %v2479, 7
    %v2481 = vsub.s32 %v2478, %v2480
    %v2482 = vrot.slane %v2460, %v2481
    %v2484 = vunpack.c.l.s4 1966171168
    %v2485 = vunpack.c.0.s8 %v2484
    %v2486 = vlaneseq
    %v2487 = vshrl.u32 %v2486, 7
    %v2488 = vsub.s32 %v2485, %v2487
    %v2489 = vrot.slane %v2461, %v2488
    %v2490 = vcombine.low %v2468, %v2475
    %v2491 = vcombine.high %v2468, %v2475
    %v2492 = vcombine.low %v2482, %v2489
    %v2493 = vcombine.high %v2482, %v2489
    %v2495 = vunpack.c.l.s4 1966171168
    %v2496 = vunpack.c.0.s8 %v2495
    %v2497 = vlaneseq
    %v2498 = vshrl.u32 %v2497, 7
    %v2499 = vsub.s32 %v2496, %v2498
    %v2500 = vrot.slane %v2490, %v2499
    %v2502 = vunpack.c.l.s4 1966171168
    %v2503 = vunpack.c.0.s8 %v2502
    %v2504 = vlaneseq
    %v2505 = vshrl.u32 %v2504, 7
    %v2506 = vsub.s32 %v2503, %v2505
    %v2507 = vrot.slane %v2491, %v2506
    %v2509 = vunpack.c.l.s4 1966171168
    %v2510 = vunpack.c.0.s8 %v2509
    %v2511 = vlaneseq
    %v2512 = vshrl.u32 %v2511, 7
    %v2513 = vsub.s32 %v2510, %v2512
    %v2514 = vrot.slane %v2492, %v2513
    %v2516 = vunpack.c.l.s4 1966171168
    %v2517 = vunpack.c.0.s8 %v2516
    %v2518 = vlaneseq
    %v2519 = vshrl.u32 %v2518, 7
    %v2520 = vsub.s32 %v2517, %v2519
    %v2521 = vrot.slane %v2493, %v2520
    %v2522 = vcombine.low %v2500, %v2514
    %v2523 = vcombine.low %v2507, %v2521
    %v2524 = vcombine.low %v2402, %v2403
    %v2525 = vcombine.low %v2404, %v2405
    %v2526 = vcombine.low %v2406, %v2407
    %v2527 = vcombine.low %v2408, %v2409
    %v2529 = vunpack.c.l.s4 1966171168
    %v2530 = vunpack.c.0.s8 %v2529
    %v2531 = vlaneseq
    %v2532 = vshrl.u32 %v2531, 7
    %v2533 = vsub.s32 %v2530, %v2532
    %v2534 = vrot.slane %v2524, %v2533
    %v2536 = vunpack.c.l.s4 1966171168
    %v2537 = vunpack.c.0.s8 %v2536
    %v2538 = vlaneseq
    %v2539 = vshrl.u32 %v2538, 7
    %v2540 = vsub.s32 %v2537, %v2539
    %v2541 = vrot.slane %v2525, %v2540
    %v2543 = vunpack.c.l.s4 1966171168
    %v2544 = vunpack.c.0.s8 %v2543
    %v2545 = vlaneseq
    %v2546 = vshrl.u32 %v2545, 7
    %v2547 = vsub.s32 %v2544, %v2546
    %v2548 = vrot.slane %v2526, %v2547
    %v2550 = vunpack.c.l.s4 1966171168
    %v2551 = vunpack.c.0.s8 %v2550
    %v2552 = vlaneseq
    %v2553 = vshrl.u32 %v2552, 7
    %v2554 = vsub.s32 %v2551, %v2553
    %v2555 = vrot.slane %v2527, %v2554
    %v2556 = vcombine.low %v2534, %v2541
    %v2557 = vcombine.high %v2534, %v2541
    %v2558 = vcombine.low %v2548, %v2555
    %v2559 = vcombine.high %v2548, %v2555
    %v2561 = vunpack.c.l.s4 1966171168
    %v2562 = vunpack.c.0.s8 %v2561
    %v2563 = vlaneseq
    %v2564 = vshrl.u32 %v2563, 7
    %v2565 = vsub.s32 %v2562, %v2564
    %v2566 = vrot.slane %v2556, %v2565
    %v2568 = vunpack.c.l.s4 1966171168
    %v2569 = vunpack.c.0.s8 %v2568
    %v2570 = vlaneseq
    %v2571 = vshrl.u32 %v2570, 7
    %v2572 = vsub.s32 %v2569, %v2571
    %v2573 = vrot.slane %v2557, %v2572
    %v2575 = vunpack.c.l.s4 1966171168
    %v2576 = vunpack.c.0.s8 %v2575
    %v2577 = vlaneseq
    %v2578 = vshrl.u32 %v2577, 7
    %v2579 = vsub.s32 %v2576, %v2578
    %v2580 = vrot.slane %v2558, %v2579
    %v2582 = vunpack.c.l.s4 1966171168
    %v2583 = vunpack.c.0.s8 %v2582
    %v2584 = vlaneseq
    %v2585 = vshrl.u32 %v2584, 7
    %v2586 = vsub.s32 %v2583, %v2585
    %v2587 = vrot.slane %v2559, %v2586
    %v2588 = vcombine.low %v2566, %v2580
    %v2589 = vcombine.low %v2573, %v2587
    %v2626 = vunpack.c.l.b16 %v2410
    %v2627 = vunpack.c.l.b16 %v2411
    %v2628 = vunpack.c.l.b16 %v2412
    %v2629 = vunpack.c.l.b16 %v2413
    %v2630 = vunpack.c.l.b16 %v2414
    %v2631 = vunpack.c.l.b16 %v2415
    %v2632 = vunpack.c.l.b16 %v2416
    %v2633 = vunpack.c.l.b16 %v2417
    %v2634 = vunpack.c.l.b16 %v2418
    %v2635 = vunpack.c.l.b16 %v2419
    %v2636 = vunpack.c.l.b16 %v2420
    %v2637 = vunpack.c.l.b16 %v2421
    %v2638 = vunpack.c.l.b16 %v2422
    %v2639 = vunpack.c.l.b16 %v2423
    %v2640 = vunpack.c.l.b16 %v2424
    %v2641 = vunpack.c.l.b16 %v2425
    %v2642 = vunpack.c.l.b16 %v2426
    %v2643 = vunpack.c.l.b16 %v2427
    %v2644 = vunpack.c.l.b16 %v2428
    %v2645 = vunpack.c.l.b16 %v2429
    %v2646 = vunpack.c.l.b16 %v2430
    %v2647 = vunpack.c.l.b16 %v2431
    %v2648 = vunpack.c.l.b16 %v2432
    %v2649 = vunpack.c.l.b16 %v2433
    %v2650 = vunpack.c.l.b16 %v2434
    %v2651 = vunpack.c.l.b16 %v2435
    %v2652 = vunpack.c.l.b16 %v2436
    %v2653 = vunpack.c.l.b16 %v2437
    %v2654 = vunpack.c.l.b16 %v2438
    %v2655 = vunpack.c.l.b16 %v2439
    %v2656 = vunpack.c.l.b16 %v2440
    %v2657 = vunpack.c.l.b16 %v2441
    %v2658 = vpack.c.b16 %v2627, %v2626
    %v2659 = vpack.c.b16 %v2629, %v2628
    %v2660 = vpack.c.b16 %v2631, %v2630
    %v2661 = vpack.c.b16 %v2633, %v2632
    %v2662 = vpack.c.b16 %v2635, %v2634
    %v2663 = vpack.c.b16 %v2637, %v2636
    %v2664 = vpack.c.b16 %v2639, %v2638
    %v2665 = vpack.c.b16 %v2641, %v2640
    %v2666 = vpack.c.b16 %v2643, %v2642
    %v2667 = vpack.c.b16 %v2645, %v2644
    %v2668 = vpack.c.b16 %v2647, %v2646
    %v2669 = vpack.c.b16 %v2649, %v2648
    %v2670 = vpack.c.b16 %v2651, %v2650
    %v2671 = vpack.c.b16 %v2653, %v2652
    %v2672 = vpack.c.b16 %v2655, %v2654
    %v2673 = vpack.c.b16 %v2657, %v2656
    %2690 = vmatprep.subr.bf16.mxu0 0
    %2691 = vmatpush1.bf16.msra.mxu0 %v2665
    %2692 = vmatprep.subr.bf16.mxu0 0
    %2693 = vmatpush1.bf16.msra.mxu0 %v2664
    %2694 = vmatprep.subr.bf16.mxu0 0
    %2695 = vmatpush1.bf16.msra.mxu0 %v2663
    %2696 = vmatprep.subr.bf16.mxu0 0
    %2697 = vmatpush1.bf16.msra.mxu0 %v2662
    %2698 = vmatprep.subr.bf16.mxu0 0
    %2699 = vmatpush1.bf16.msra.mxu0 %v2661
    %2700 = vmatprep.subr.bf16.mxu0 0
    %2701 = vmatpush1.bf16.msra.mxu0 %v2660
    %2702 = vmatprep.subr.bf16.mxu0 0
    %2703 = vmatpush1.bf16.msra.mxu0 %v2659
    %2704 = vmatprep.subr.bf16.mxu0 0
    %2705 = vmatpush1.bf16.msra.mxu0 %v2658
    %2706 = vmatprep.subr.bf16.mxu0 0
    %2707 = vmatpush2.bf16.msra.mxu0 %v2673
    %2708 = vmatprep.subr.bf16.mxu0 0
    %2709 = vmatpush2.bf16.msra.mxu0 %v2672
    %2710 = vmatprep.subr.bf16.mxu0 0
    %2711 = vmatpush2.bf16.msra.mxu0 %v2671
    %2712 = vmatprep.subr.bf16.mxu0 0
    %2713 = vmatpush2.bf16.msra.mxu0 %v2670
    %2714 = vmatprep.subr.bf16.mxu0 0
    %2715 = vmatpush2.bf16.msra.mxu0 %v2669
    %2716 = vmatprep.subr.bf16.mxu0 0
    %2717 = vmatpush2.bf16.msra.mxu0 %v2668
    %2718 = vmatprep.subr.bf16.mxu0 0
    %2719 = vmatpush2.bf16.msra.mxu0 %v2667
    %2720 = vmatprep.subr.bf16.mxu0 0
    %2721 = vmatpush2.bf16.msra.mxu0 %v2666
    %2722 = vmatprep.mubr.bf16.mxu0 %v2523
    %2723 = vmatmul.mubr.bf16.gmra.mxu0 %v2522
    %v2724 = vpop.f32.mrf.mxu0
    %v2725 = vadd.f32 0.0, %v2724
    %v2726 = vpop.f32.mrf.mxu0
    %v2727 = vpop.f32.mrf.mxu0
    %v2728 = vadd.f32 0.0, %v2727
    %v2729 = vpop.f32.mrf.mxu0
    %2730 = vmatprep.mubr.bf16.mxu0 %v2589
    %2731 = vmatmul.mubr.bf16.gmra.mxu0 %v2588
    %v2732 = vpop.f32.mrf.mxu0
    %v2733 = vadd.f32 0.0, %v2732
    %v2734 = vpop.f32.mrf.mxu0
    %v2735 = vpop.f32.mrf.mxu0
    %v2736 = vadd.f32 0.0, %v2735
    %v2737 = vpop.f32.mrf.mxu0
    %2738 = vdwg.mxu0
    %v2755 = vcombine.low %v2346, %v2347
    %v2756 = vcombine.low %v2348, %v2349
    %v2757 = vcombine.low %v2350, %v2351
    %v2758 = vcombine.low %v2352, %v2353
    %v2760 = vunpack.c.l.s4 1966171168
    %v2761 = vunpack.c.0.s8 %v2760
    %v2762 = vlaneseq
    %v2763 = vshrl.u32 %v2762, 7
    %v2764 = vsub.s32 %v2761, %v2763
    %v2765 = vrot.slane %v2755, %v2764
    %v2767 = vunpack.c.l.s4 1966171168
    %v2768 = vunpack.c.0.s8 %v2767
    %v2769 = vlaneseq
    %v2770 = vshrl.u32 %v2769, 7
    %v2771 = vsub.s32 %v2768, %v2770
    %v2772 = vrot.slane %v2756, %v2771
    %v2774 = vunpack.c.l.s4 1966171168
    %v2775 = vunpack.c.0.s8 %v2774
    %v2776 = vlaneseq
    %v2777 = vshrl.u32 %v2776, 7
    %v2778 = vsub.s32 %v2775, %v2777
    %v2779 = vrot.slane %v2757, %v2778
    %v2781 = vunpack.c.l.s4 1966171168
    %v2782 = vunpack.c.0.s8 %v2781
    %v2783 = vlaneseq
    %v2784 = vshrl.u32 %v2783, 7
    %v2785 = vsub.s32 %v2782, %v2784
    %v2786 = vrot.slane %v2758, %v2785
    %v2787 = vcombine.low %v2765, %v2772
    %v2788 = vcombine.high %v2765, %v2772
    %v2789 = vcombine.low %v2779, %v2786
    %v2790 = vcombine.high %v2779, %v2786
    %v2792 = vunpack.c.l.s4 1966171168
    %v2793 = vunpack.c.0.s8 %v2792
    %v2794 = vlaneseq
    %v2795 = vshrl.u32 %v2794, 7
    %v2796 = vsub.s32 %v2793, %v2795
    %v2797 = vrot.slane %v2787, %v2796
    %v2799 = vunpack.c.l.s4 1966171168
    %v2800 = vunpack.c.0.s8 %v2799
    %v2801 = vlaneseq
    %v2802 = vshrl.u32 %v2801, 7
    %v2803 = vsub.s32 %v2800, %v2802
    %v2804 = vrot.slane %v2788, %v2803
    %v2806 = vunpack.c.l.s4 1966171168
    %v2807 = vunpack.c.0.s8 %v2806
    %v2808 = vlaneseq
    %v2809 = vshrl.u32 %v2808, 7
    %v2810 = vsub.s32 %v2807, %v2809
    %v2811 = vrot.slane %v2789, %v2810
    %v2813 = vunpack.c.l.s4 1966171168
    %v2814 = vunpack.c.0.s8 %v2813
    %v2815 = vlaneseq
    %v2816 = vshrl.u32 %v2815, 7
    %v2817 = vsub.s32 %v2814, %v2816
    %v2818 = vrot.slane %v2790, %v2817
    %v2819 = vcombine.low %v2797, %v2811
    %v2820 = vcombine.low %v2804, %v2818
    %v2821 = vcombine.low %v2354, %v2355
    %v2822 = vcombine.low %v2356, %v2357
    %v2823 = vcombine.low %v2358, %v2359
    %v2824 = vcombine.low %v2360, %v2361
    %v2826 = vunpack.c.l.s4 1966171168
    %v2827 = vunpack.c.0.s8 %v2826
    %v2828 = vlaneseq
    %v2829 = vshrl.u32 %v2828, 7
    %v2830 = vsub.s32 %v2827, %v2829
    %v2831 = vrot.slane %v2821, %v2830
    %v2833 = vunpack.c.l.s4 1966171168
    %v2834 = vunpack.c.0.s8 %v2833
    %v2835 = vlaneseq
    %v2836 = vshrl.u32 %v2835, 7
    %v2837 = vsub.s32 %v2834, %v2836
    %v2838 = vrot.slane %v2822, %v2837
    %v2840 = vunpack.c.l.s4 1966171168
    %v2841 = vunpack.c.0.s8 %v2840
    %v2842 = vlaneseq
    %v2843 = vshrl.u32 %v2842, 7
    %v2844 = vsub.s32 %v2841, %v2843
    %v2845 = vrot.slane %v2823, %v2844
    %v2847 = vunpack.c.l.s4 1966171168
    %v2848 = vunpack.c.0.s8 %v2847
    %v2849 = vlaneseq
    %v2850 = vshrl.u32 %v2849, 7
    %v2851 = vsub.s32 %v2848, %v2850
    %v2852 = vrot.slane %v2824, %v2851
    %v2853 = vcombine.low %v2831, %v2838
    %v2854 = vcombine.high %v2831, %v2838
    %v2855 = vcombine.low %v2845, %v2852
    %v2856 = vcombine.high %v2845, %v2852
    %v2858 = vunpack.c.l.s4 1966171168
    %v2859 = vunpack.c.0.s8 %v2858
    %v2860 = vlaneseq
    %v2861 = vshrl.u32 %v2860, 7
    %v2862 = vsub.s32 %v2859, %v2861
    %v2863 = vrot.slane %v2853, %v2862
    %v2865 = vunpack.c.l.s4 1966171168
    %v2866 = vunpack.c.0.s8 %v2865
    %v2867 = vlaneseq
    %v2868 = vshrl.u32 %v2867, 7
    %v2869 = vsub.s32 %v2866, %v2868
    %v2870 = vrot.slane %v2854, %v2869
    %v2872 = vunpack.c.l.s4 1966171168
    %v2873 = vunpack.c.0.s8 %v2872
    %v2874 = vlaneseq
    %v2875 = vshrl.u32 %v2874, 7
    %v2876 = vsub.s32 %v2873, %v2875
    %v2877 = vrot.slane %v2855, %v2876
    %v2879 = vunpack.c.l.s4 1966171168
    %v2880 = vunpack.c.0.s8 %v2879
    %v2881 = vlaneseq
    %v2882 = vshrl.u32 %v2881, 7
    %v2883 = vsub.s32 %v2880, %v2882
    %v2884 = vrot.slane %v2856, %v2883
    %v2885 = vcombine.low %v2863, %v2877
    %v2886 = vcombine.low %v2870, %v2884
    %v2923 = vunpack.c.l.b16 %v2362
    %v2924 = vunpack.c.l.b16 %v2363
    %v2925 = vunpack.c.l.b16 %v2364
    %v2926 = vunpack.c.l.b16 %v2365
    %v2927 = vunpack.c.l.b16 %v2366
    %v2928 = vunpack.c.l.b16 %v2367
    %v2929 = vunpack.c.l.b16 %v2368
    %v2930 = vunpack.c.l.b16 %v2369
    %v2931 = vunpack.c.l.b16 %v2370
    %v2932 = vunpack.c.l.b16 %v2371
    %v2933 = vunpack.c.l.b16 %v2372
    %v2934 = vunpack.c.l.b16 %v2373
    %v2935 = vunpack.c.l.b16 %v2374
    %v2936 = vunpack.c.l.b16 %v2375
    %v2937 = vunpack.c.l.b16 %v2376
    %v2938 = vunpack.c.l.b16 %v2377
    %v2939 = vunpack.c.l.b16 %v2378
    %v2940 = vunpack.c.l.b16 %v2379
    %v2941 = vunpack.c.l.b16 %v2380
    %v2942 = vunpack.c.l.b16 %v2381
    %v2943 = vunpack.c.l.b16 %v2382
    %v2944 = vunpack.c.l.b16 %v2383
    %v2945 = vunpack.c.l.b16 %v2384
    %v2946 = vunpack.c.l.b16 %v2385
    %v2947 = vunpack.c.l.b16 %v2386
    %v2948 = vunpack.c.l.b16 %v2387
    %v2949 = vunpack.c.l.b16 %v2388
    %v2950 = vunpack.c.l.b16 %v2389
    %v2951 = vunpack.c.l.b16 %v2390
    %v2952 = vunpack.c.l.b16 %v2391
    %v2953 = vunpack.c.l.b16 %v2392
    %v2954 = vunpack.c.l.b16 %v2393
    %v2955 = vpack.c.b16 %v2924, %v2923
    %v2956 = vpack.c.b16 %v2926, %v2925
    %v2957 = vpack.c.b16 %v2928, %v2927
    %v2958 = vpack.c.b16 %v2930, %v2929
    %v2959 = vpack.c.b16 %v2932, %v2931
    %v2960 = vpack.c.b16 %v2934, %v2933
    %v2961 = vpack.c.b16 %v2936, %v2935
    %v2962 = vpack.c.b16 %v2938, %v2937
    %v2963 = vpack.c.b16 %v2940, %v2939
    %v2964 = vpack.c.b16 %v2942, %v2941
    %v2965 = vpack.c.b16 %v2944, %v2943
    %v2966 = vpack.c.b16 %v2946, %v2945
    %v2967 = vpack.c.b16 %v2948, %v2947
    %v2968 = vpack.c.b16 %v2950, %v2949
    %v2969 = vpack.c.b16 %v2952, %v2951
    %v2970 = vpack.c.b16 %v2954, %v2953
    %2987 = vmatprep.subr.bf16.mxu0 0
    %2988 = vmatpush1.bf16.msra.mxu0 %v2962
    %2989 = vmatprep.subr.bf16.mxu0 0
    %2990 = vmatpush1.bf16.msra.mxu0 %v2961
    %2991 = vmatprep.subr.bf16.mxu0 0
    %2992 = vmatpush1.bf16.msra.mxu0 %v2960
    %2993 = vmatprep.subr.bf16.mxu0 0
    %2994 = vmatpush1.bf16.msra.mxu0 %v2959
    %2995 = vmatprep.subr.bf16.mxu0 0
    %2996 = vmatpush1.bf16.msra.mxu0 %v2958
    %2997 = vmatprep.subr.bf16.mxu0 0
    %2998 = vmatpush1.bf16.msra.mxu0 %v2957
    %2999 = vmatprep.subr.bf16.mxu0 0
    %3000 = vmatpush1.bf16.msra.mxu0 %v2956
    %3001 = vmatprep.subr.bf16.mxu0 0
    %3002 = vmatpush1.bf16.msra.mxu0 %v2955
    %3003 = vmatprep.subr.bf16.mxu0 0
    %3004 = vmatpush2.bf16.msra.mxu0 %v2970
    %3005 = vmatprep.subr.bf16.mxu0 0
    %3006 = vmatpush2.bf16.msra.mxu0 %v2969
    %3007 = vmatprep.subr.bf16.mxu0 0
    %3008 = vmatpush2.bf16.msra.mxu0 %v2968
    %3009 = vmatprep.subr.bf16.mxu0 0
    %3010 = vmatpush2.bf16.msra.mxu0 %v2967
    %3011 = vmatprep.subr.bf16.mxu0 0
    %3012 = vmatpush2.bf16.msra.mxu0 %v2966
    %3013 = vmatprep.subr.bf16.mxu0 0
    %3014 = vmatpush2.bf16.msra.mxu0 %v2965
    %3015 = vmatprep.subr.bf16.mxu0 0
    %3016 = vmatpush2.bf16.msra.mxu0 %v2964
    %3017 = vmatprep.subr.bf16.mxu0 0
    %3018 = vmatpush2.bf16.msra.mxu0 %v2963
    %3019 = vmatprep.mubr.bf16.mxu0 %v2820
    %3020 = vmatmul.mubr.bf16.gmra.mxu0 %v2819
    %v3021 = vpop.f32.mrf.mxu0
    %v3022 = vadd.f32 %v2725, %v3021
    %v3023 = vpop.f32.mrf.mxu0
    %v3024 = vpop.f32.mrf.mxu0
    %v3025 = vadd.f32 %v2728, %v3024
    %v3026 = vpop.f32.mrf.mxu0
    %3027 = vmatprep.mubr.bf16.mxu0 %v2886
    %3028 = vmatmul.mubr.bf16.gmra.mxu0 %v2885
    %v3029 = vpop.f32.mrf.mxu0
    %v3030 = vadd.f32 %v2733, %v3029
    %v3031 = vpop.f32.mrf.mxu0
    %v3032 = vpop.f32.mrf.mxu0
    %v3033 = vadd.f32 %v2736, %v3032
    %v3034 = vpop.f32.mrf.mxu0
    %3035 = vdwg.mxu0
    %s3036 = scalar_lea.vmem [#allocation3], 4
    %v3037 = vld [vmem:[%s3036] sm:$0x3]
    %v3038 = vld [vmem:[%s3036 + $0x2] sm:$0x3]
    %v3039 = vld [vmem:[%s3036 + $0x4] sm:$0x3]
    %v3040 = vld [vmem:[%s3036 + $0x6] sm:$0x3]
    %v3041 = vld [vmem:[%s3036 + $0x8] sm:$0x3]
    %v3042 = vld [vmem:[%s3036 + $0xa] sm:$0x3]
    %v3043 = vld [vmem:[%s3036 + $0xc] sm:$0x3]
    %v3044 = vld [vmem:[%s3036 + $0xe] sm:$0x3]
    %v3045 = vld [vmem:[%s3036 + $0x10] sm:$0x3]
    %v3046 = vld [vmem:[%s3036 + $0x12] sm:$0x3]
    %v3047 = vld [vmem:[%s3036 + $0x14] sm:$0x3]
    %v3048 = vld [vmem:[%s3036 + $0x16] sm:$0x3]
    %v3049 = vld [vmem:[%s3036 + $0x18] sm:$0x3]
    %v3050 = vld [vmem:[%s3036 + $0x1a] sm:$0x3]
    %v3051 = vld [vmem:[%s3036 + $0x1c] sm:$0x3]
    %v3052 = vld [vmem:[%s3036 + $0x1e] sm:$0x3]
    %v3053 = vld [vmem:[#allocation12 + $0x100] sm:$0xf]
    %v3054 = vld [vmem:[#allocation12 + $0x104] sm:$0xf]
    %v3055 = vld [vmem:[#allocation12 + $0x108] sm:$0xf]
    %v3056 = vld [vmem:[#allocation12 + $0x10c] sm:$0xf]
    %v3057 = vld [vmem:[#allocation12 + $0x110] sm:$0xf]
    %v3058 = vld [vmem:[#allocation12 + $0x114] sm:$0xf]
    %v3059 = vld [vmem:[#allocation12 + $0x118] sm:$0xf]
    %v3060 = vld [vmem:[#allocation12 + $0x11c] sm:$0xf]
    %v3061 = vld [vmem:[#allocation12 + $0x120] sm:$0xf]
    %v3062 = vld [vmem:[#allocation12 + $0x124] sm:$0xf]
    %v3063 = vld [vmem:[#allocation12 + $0x128] sm:$0xf]
    %v3064 = vld [vmem:[#allocation12 + $0x12c] sm:$0xf]
    %v3065 = vld [vmem:[#allocation12 + $0x130] sm:$0xf]
    %v3066 = vld [vmem:[#allocation12 + $0x134] sm:$0xf]
    %v3067 = vld [vmem:[#allocation12 + $0x138] sm:$0xf]
    %v3068 = vld [vmem:[#allocation12 + $0x13c] sm:$0xf]
    %v3069 = vld [vmem:[#allocation12 + $0x140] sm:$0xf]
    %v3070 = vld [vmem:[#allocation12 + $0x144] sm:$0xf]
    %v3071 = vld [vmem:[#allocation12 + $0x148] sm:$0xf]
    %v3072 = vld [vmem:[#allocation12 + $0x14c] sm:$0xf]
    %v3073 = vld [vmem:[#allocation12 + $0x150] sm:$0xf]
    %v3074 = vld [vmem:[#allocation12 + $0x154] sm:$0xf]
    %v3075 = vld [vmem:[#allocation12 + $0x158] sm:$0xf]
    %v3076 = vld [vmem:[#allocation12 + $0x15c] sm:$0xf]
    %v3077 = vld [vmem:[#allocation12 + $0x160] sm:$0xf]
    %v3078 = vld [vmem:[#allocation12 + $0x164] sm:$0xf]
    %v3079 = vld [vmem:[#allocation12 + $0x168] sm:$0xf]
    %v3080 = vld [vmem:[#allocation12 + $0x16c] sm:$0xf]
    %v3081 = vld [vmem:[#allocation12 + $0x170] sm:$0xf]
    %v3082 = vld [vmem:[#allocation12 + $0x174] sm:$0xf]
    %v3083 = vld [vmem:[#allocation12 + $0x178] sm:$0xf]
    %v3084 = vld [vmem:[#allocation12 + $0x17c] sm:$0xf]
    %v3101 = vcombine.low %v3037, %v3038
    %v3102 = vcombine.low %v3039, %v3040
    %v3103 = vcombine.low %v3041, %v3042
    %v3104 = vcombine.low %v3043, %v3044
    %v3106 = vunpack.c.l.s4 1966171168
    %v3107 = vunpack.c.0.s8 %v3106
    %v3108 = vlaneseq
    %v3109 = vshrl.u32 %v3108, 7
    %v3110 = vsub.s32 %v3107, %v3109
    %v3111 = vrot.slane %v3101, %v3110
    %v3113 = vunpack.c.l.s4 1966171168
    %v3114 = vunpack.c.0.s8 %v3113
    %v3115 = vlaneseq
    %v3116 = vshrl.u32 %v3115, 7
    %v3117 = vsub.s32 %v3114, %v3116
    %v3118 = vrot.slane %v3102, %v3117
    %v3120 = vunpack.c.l.s4 1966171168
    %v3121 = vunpack.c.0.s8 %v3120
    %v3122 = vlaneseq
    %v3123 = vshrl.u32 %v3122, 7
    %v3124 = vsub.s32 %v3121, %v3123
    %v3125 = vrot.slane %v3103, %v3124
    %v3127 = vunpack.c.l.s4 1966171168
    %v3128 = vunpack.c.0.s8 %v3127
    %v3129 = vlaneseq
    %v3130 = vshrl.u32 %v3129, 7
    %v3131 = vsub.s32 %v3128, %v3130
    %v3132 = vrot.slane %v3104, %v3131
    %v3133 = vcombine.low %v3111, %v3118
    %v3134 = vcombine.high %v3111, %v3118
    %v3135 = vcombine.low %v3125, %v3132
    %v3136 = vcombine.high %v3125, %v3132
    %v3138 = vunpack.c.l.s4 1966171168
    %v3139 = vunpack.c.0.s8 %v3138
    %v3140 = vlaneseq
    %v3141 = vshrl.u32 %v3140, 7
    %v3142 = vsub.s32 %v3139, %v3141
    %v3143 = vrot.slane %v3133, %v3142
    %v3145 = vunpack.c.l.s4 1966171168
    %v3146 = vunpack.c.0.s8 %v3145
    %v3147 = vlaneseq
    %v3148 = vshrl.u32 %v3147, 7
    %v3149 = vsub.s32 %v3146, %v3148
    %v3150 = vrot.slane %v3134, %v3149
    %v3152 = vunpack.c.l.s4 1966171168
    %v3153 = vunpack.c.0.s8 %v3152
    %v3154 = vlaneseq
    %v3155 = vshrl.u32 %v3154, 7
    %v3156 = vsub.s32 %v3153, %v3155
    %v3157 = vrot.slane %v3135, %v3156
    %v3159 = vunpack.c.l.s4 1966171168
    %v3160 = vunpack.c.0.s8 %v3159
    %v3161 = vlaneseq
    %v3162 = vshrl.u32 %v3161, 7
    %v3163 = vsub.s32 %v3160, %v3162
    %v3164 = vrot.slane %v3136, %v3163
    %v3165 = vcombine.low %v3143, %v3157
    %v3166 = vcombine.low %v3150, %v3164
    %v3167 = vcombine.low %v3045, %v3046
    %v3168 = vcombine.low %v3047, %v3048
    %v3169 = vcombine.low %v3049, %v3050
    %v3170 = vcombine.low %v3051, %v3052
    %v3172 = vunpack.c.l.s4 1966171168
    %v3173 = vunpack.c.0.s8 %v3172
    %v3174 = vlaneseq
    %v3175 = vshrl.u32 %v3174, 7
    %v3176 = vsub.s32 %v3173, %v3175
    %v3177 = vrot.slane %v3167, %v3176
    %v3179 = vunpack.c.l.s4 1966171168
    %v3180 = vunpack.c.0.s8 %v3179
    %v3181 = vlaneseq
    %v3182 = vshrl.u32 %v3181, 7
    %v3183 = vsub.s32 %v3180, %v3182
    %v3184 = vrot.slane %v3168, %v3183
    %v3186 = vunpack.c.l.s4 1966171168
    %v3187 = vunpack.c.0.s8 %v3186
    %v3188 = vlaneseq
    %v3189 = vshrl.u32 %v3188, 7
    %v3190 = vsub.s32 %v3187, %v3189
    %v3191 = vrot.slane %v3169, %v3190
    %v3193 = vunpack.c.l.s4 1966171168
    %v3194 = vunpack.c.0.s8 %v3193
    %v3195 = vlaneseq
    %v3196 = vshrl.u32 %v3195, 7
    %v3197 = vsub.s32 %v3194, %v3196
    %v3198 = vrot.slane %v3170, %v3197
    %v3199 = vcombine.low %v3177, %v3184
    %v3200 = vcombine.high %v3177, %v3184
    %v3201 = vcombine.low %v3191, %v3198
    %v3202 = vcombine.high %v3191, %v3198
    %v3204 = vunpack.c.l.s4 1966171168
    %v3205 = vunpack.c.0.s8 %v3204
    %v3206 = vlaneseq
    %v3207 = vshrl.u32 %v3206, 7
    %v3208 = vsub.s32 %v3205, %v3207
    %v3209 = vrot.slane %v3199, %v3208
    %v3211 = vunpack.c.l.s4 1966171168
    %v3212 = vunpack.c.0.s8 %v3211
    %v3213 = vlaneseq
    %v3214 = vshrl.u32 %v3213, 7
    %v3215 = vsub.s32 %v3212, %v3214
    %v3216 = vrot.slane %v3200, %v3215
    %v3218 = vunpack.c.l.s4 1966171168
    %v3219 = vunpack.c.0.s8 %v3218
    %v3220 = vlaneseq
    %v3221 = vshrl.u32 %v3220, 7
    %v3222 = vsub.s32 %v3219, %v3221
    %v3223 = vrot.slane %v3201, %v3222
    %v3225 = vunpack.c.l.s4 1966171168
    %v3226 = vunpack.c.0.s8 %v3225
    %v3227 = vlaneseq
    %v3228 = vshrl.u32 %v3227, 7
    %v3229 = vsub.s32 %v3226, %v3228
    %v3230 = vrot.slane %v3202, %v3229
    %v3231 = vcombine.low %v3209, %v3223
    %v3232 = vcombine.low %v3216, %v3230
    %v3269 = vunpack.c.l.b16 %v3053
    %v3270 = vunpack.c.l.b16 %v3054
    %v3271 = vunpack.c.l.b16 %v3055
    %v3272 = vunpack.c.l.b16 %v3056
    %v3273 = vunpack.c.l.b16 %v3057
    %v3274 = vunpack.c.l.b16 %v3058
    %v3275 = vunpack.c.l.b16 %v3059
    %v3276 = vunpack.c.l.b16 %v3060
    %v3277 = vunpack.c.l.b16 %v3061
    %v3278 = vunpack.c.l.b16 %v3062
    %v3279 = vunpack.c.l.b16 %v3063
    %v3280 = vunpack.c.l.b16 %v3064
    %v3281 = vunpack.c.l.b16 %v3065
    %v3282 = vunpack.c.l.b16 %v3066
    %v3283 = vunpack.c.l.b16 %v3067
    %v3284 = vunpack.c.l.b16 %v3068
    %v3285 = vunpack.c.l.b16 %v3069
    %v3286 = vunpack.c.l.b16 %v3070
    %v3287 = vunpack.c.l.b16 %v3071
    %v3288 = vunpack.c.l.b16 %v3072
    %v3289 = vunpack.c.l.b16 %v3073
    %v3290 = vunpack.c.l.b16 %v3074
    %v3291 = vunpack.c.l.b16 %v3075
    %v3292 = vunpack.c.l.b16 %v3076
    %v3293 = vunpack.c.l.b16 %v3077
    %v3294 = vunpack.c.l.b16 %v3078
    %v3295 = vunpack.c.l.b16 %v3079
    %v3296 = vunpack.c.l.b16 %v3080
    %v3297 = vunpack.c.l.b16 %v3081
    %v3298 = vunpack.c.l.b16 %v3082
    %v3299 = vunpack.c.l.b16 %v3083
    %v3300 = vunpack.c.l.b16 %v3084
    %v3301 = vpack.c.b16 %v3270, %v3269
    %v3302 = vpack.c.b16 %v3272, %v3271
    %v3303 = vpack.c.b16 %v3274, %v3273
    %v3304 = vpack.c.b16 %v3276, %v3275
    %v3305 = vpack.c.b16 %v3278, %v3277
    %v3306 = vpack.c.b16 %v3280, %v3279
    %v3307 = vpack.c.b16 %v3282, %v3281
    %v3308 = vpack.c.b16 %v3284, %v3283
    %v3309 = vpack.c.b16 %v3286, %v3285
    %v3310 = vpack.c.b16 %v3288, %v3287
    %v3311 = vpack.c.b16 %v3290, %v3289
    %v3312 = vpack.c.b16 %v3292, %v3291
    %v3313 = vpack.c.b16 %v3294, %v3293
    %v3314 = vpack.c.b16 %v3296, %v3295
    %v3315 = vpack.c.b16 %v3298, %v3297
    %v3316 = vpack.c.b16 %v3300, %v3299
    %3333 = vmatprep.subr.bf16.mxu0 0
    %3334 = vmatpush1.bf16.msra.mxu0 %v3308
    %3335 = vmatprep.subr.bf16.mxu0 0
    %3336 = vmatpush1.bf16.msra.mxu0 %v3307
    %3337 = vmatprep.subr.bf16.mxu0 0
    %3338 = vmatpush1.bf16.msra.mxu0 %v3306
    %3339 = vmatprep.subr.bf16.mxu0 0
    %3340 = vmatpush1.bf16.msra.mxu0 %v3305
    %3341 = vmatprep.subr.bf16.mxu0 0
    %3342 = vmatpush1.bf16.msra.mxu0 %v3304
    %3343 = vmatprep.subr.bf16.mxu0 0
    %3344 = vmatpush1.bf16.msra.mxu0 %v3303
    %3345 = vmatprep.subr.bf16.mxu0 0
    %3346 = vmatpush1.bf16.msra.mxu0 %v3302
    %3347 = vmatprep.subr.bf16.mxu0 0
    %3348 = vmatpush1.bf16.msra.mxu0 %v3301
    %3349 = vmatprep.subr.bf16.mxu0 0
    %3350 = vmatpush2.bf16.msra.mxu0 %v3316
    %3351 = vmatprep.subr.bf16.mxu0 0
    %3352 = vmatpush2.bf16.msra.mxu0 %v3315
    %3353 = vmatprep.subr.bf16.mxu0 0
    %3354 = vmatpush2.bf16.msra.mxu0 %v3314
    %3355 = vmatprep.subr.bf16.mxu0 0
    %3356 = vmatpush2.bf16.msra.mxu0 %v3313
    %3357 = vmatprep.subr.bf16.mxu0 0
    %3358 = vmatpush2.bf16.msra.mxu0 %v3312
    %3359 = vmatprep.subr.bf16.mxu0 0
    %3360 = vmatpush2.bf16.msra.mxu0 %v3311
    %3361 = vmatprep.subr.bf16.mxu0 0
    %3362 = vmatpush2.bf16.msra.mxu0 %v3310
    %3363 = vmatprep.subr.bf16.mxu0 0
    %3364 = vmatpush2.bf16.msra.mxu0 %v3309
    %3365 = vmatprep.mubr.bf16.mxu0 %v3166
    %3366 = vmatmul.mubr.bf16.gmra.mxu0 %v3165
    %v3367 = vpop.f32.mrf.mxu0
    %v3368 = vadd.f32 0.0, %v3367
    %v3369 = vpop.f32.mrf.mxu0
    %v3370 = vpop.f32.mrf.mxu0
    %v3371 = vadd.f32 0.0, %v3370
    %v3372 = vpop.f32.mrf.mxu0
    %3373 = vmatprep.mubr.bf16.mxu0 %v3232
    %3374 = vmatmul.mubr.bf16.gmra.mxu0 %v3231
    %v3375 = vpop.f32.mrf.mxu0
    %v3376 = vadd.f32 0.0, %v3375
    %v3377 = vpop.f32.mrf.mxu0
    %v3378 = vpop.f32.mrf.mxu0
    %v3379 = vadd.f32 0.0, %v3378
    %v3380 = vpop.f32.mrf.mxu0
    %3381 = vdwg.mxu0
    %v3382 = vadd.f32 %v3022, %v3368
    %v3383 = vadd.f32 %v3025, %v3371
    %v3384 = vadd.f32 %v3030, %v3376
    %v3385 = vadd.f32 %v3033, %v3379
    %v3387 = vlaneseq
    %v3388 = vshrl.u32 %v3387, 7
    %v3389 = vsub.s32 0, %v3388
    %v3390 = vrot.slane %v107, %v3389
    %v3392 = vmul.f32 %v3382, %v3390
    %v3393 = vmul.f32 %v3383, %v3390
    %v3394 = vmul.f32 %v3384, %v3390
    %v3395 = vmul.f32 %v3385, %v3390
    %v3397 = vlaneseq
    %v3398 = vshrl.u32 %v3397, 7
    %v3399 = vsub.s32 0, %v3398
    %v3400 = vrot.slane %v108, %v3399
    %v3402 = vadd.f32 %v3392, %v3400
    %v3403 = vadd.f32 %v3393, %v3400
    %v3404 = vadd.f32 %v3394, %v3400
    %v3405 = vadd.f32 %v3395, %v3400
    %v3406 = vmax.f32 %v3402, 0.0
    %v3407 = vmax.f32 %v3403, 0.0
    %v3408 = vmax.f32 %v3404, 0.0
    %v3409 = vmax.f32 %v3405, 0.0
    %v3414 = vcombine.high %v3406, %v3406
    %v3416 = vunpack.c.l.s4 1983009808
    %v3417 = vunpack.c.0.s8 %v3416
    %v3418 = vlaneseq
    %v3419 = vshrl.u32 %v3418, 7
    %v3420 = vsub.s32 %v3417, %v3419
    %v3421 = vrot.slane %v3406, %v3420
    %v3423 = vunpack.c.l.s4 1983009808
    %v3424 = vunpack.c.0.s8 %v3423
    %v3425 = vlaneseq
    %v3426 = vshrl.u32 %v3425, 7
    %v3427 = vsub.s32 %v3424, %v3426
    %v3428 = vrot.slane %v3414, %v3427
    %v3429 = vcombine.high %v3421, %v3421
    %v3430 = vcombine.high %v3428, %v3428
    %v3431 = vcombine.high %v3407, %v3407
    %v3433 = vunpack.c.l.s4 1983009808
    %v3434 = vunpack.c.0.s8 %v3433
    %v3435 = vlaneseq
    %v3436 = vshrl.u32 %v3435, 7
    %v3437 = vsub.s32 %v3434, %v3436
    %v3438 = vrot.slane %v3407, %v3437
    %v3440 = vunpack.c.l.s4 1983009808
    %v3441 = vunpack.c.0.s8 %v3440
    %v3442 = vlaneseq
    %v3443 = vshrl.u32 %v3442, 7
    %v3444 = vsub.s32 %v3441, %v3443
    %v3445 = vrot.slane %v3431, %v3444
    %v3446 = vcombine.high %v3438, %v3438
    %v3447 = vcombine.high %v3445, %v3445
    %v3448 = vcombine.high %v3408, %v3408
    %v3450 = vunpack.c.l.s4 1983009808
    %v3451 = vunpack.c.0.s8 %v3450
    %v3452 = vlaneseq
    %v3453 = vshrl.u32 %v3452, 7
    %v3454 = vsub.s32 %v3451, %v3453
    %v3455 = vrot.slane %v3408, %v3454
    %v3457 = vunpack.c.l.s4 1983009808
    %v3458 = vunpack.c.0.s8 %v3457
    %v3459 = vlaneseq
    %v3460 = vshrl.u32 %v3459, 7
    %v3461 = vsub.s32 %v3458, %v3460
    %v3462 = vrot.slane %v3448, %v3461
    %v3463 = vcombine.high %v3455, %v3455
    %v3464 = vcombine.high %v3462, %v3462
    %v3465 = vcombine.high %v3409, %v3409
    %v3467 = vunpack.c.l.s4 1983009808
    %v3468 = vunpack.c.0.s8 %v3467
    %v3469 = vlaneseq
    %v3470 = vshrl.u32 %v3469, 7
    %v3471 = vsub.s32 %v3468, %v3470
    %v3472 = vrot.slane %v3409, %v3471
    %v3474 = vunpack.c.l.s4 1983009808
    %v3475 = vunpack.c.0.s8 %v3474
    %v3476 = vlaneseq
    %v3477 = vshrl.u32 %v3476, 7
    %v3478 = vsub.s32 %v3475, %v3477
    %v3479 = vrot.slane %v3465, %v3478
    %v3480 = vcombine.high %v3472, %v3472
    %v3481 = vcombine.high %v3479, %v3479
    %vm3498 = vcmask 1041408
    %v3499 = vsel %vm3498, %v3421, 0.0
    %v3500 = vsel %vm3498, %v3429, 0.0
    %v3501 = vadd.f32 %v3499, %v3500
    %v3502 = vsel %vm3498, %v3428, 0.0
    %v3503 = vadd.f32 %v3501, %v3502
    %v3504 = vsel %vm3498, %v3430, 0.0
    %v3505 = vadd.f32 %v3503, %v3504
    %v3506 = vsel %vm3498, %v3438, 0.0
    %v3507 = vadd.f32 %v3505, %v3506
    %v3508 = vsel %vm3498, %v3446, 0.0
    %v3509 = vadd.f32 %v3507, %v3508
    %v3510 = vsel %vm3498, %v3445, 0.0
    %v3511 = vadd.f32 %v3509, %v3510
    %v3512 = vsel %vm3498, %v3447, 0.0
    %v3513 = vadd.f32 %v3511, %v3512
    %v3514 = vsel %vm3498, %v3455, 0.0
    %v3515 = vadd.f32 %v3513, %v3514
    %v3516 = vsel %vm3498, %v3463, 0.0
    %v3517 = vadd.f32 %v3515, %v3516
    %v3518 = vsel %vm3498, %v3462, 0.0
    %v3519 = vadd.f32 %v3517, %v3518
    %v3520 = vsel %vm3498, %v3464, 0.0
    %v3521 = vadd.f32 %v3519, %v3520
    %v3522 = vsel %vm3498, %v3472, 0.0
    %v3523 = vadd.f32 %v3521, %v3522
    %v3524 = vsel %vm3498, %v3480, 0.0
    %v3525 = vadd.f32 %v3523, %v3524
    %v3526 = vsel %vm3498, %v3479, 0.0
    %v3527 = vadd.f32 %v3525, %v3526
    %v3528 = vsel %vm3498, %v3481, 0.0
    %v3529 = vadd.f32 %v3527, %v3528
    %v3530 = vadd.f32 %v3529, 0.0
    %v3531 = vmul.f32 %v3530, 0.0625
    %3532 = vst [vmem:[#allocation13] sm:$0x3] %v3531
    // Predicated region
    $region62: #{tpu_custom_call.1} parent=1 // pred_check
      _
    $region63: #{tpu_custom_call.1} parent=1 // pred_check_branch
      %3534 = sbr.rel (0) target = $region65
    $region64: #{tpu_custom_call.1} parent=1 // pred_region
      %s3536 = ssub.s32 32, 32
      %3537 = vsyncadd [#allocation6], %s3536
      %s3539 = sshll.u32 [#allocation13], 4
      %s3540 = int_to_ptr.vmem [resolvable:$true] %s3539
      %3542 = dma.vmem_to_hbm [thread:$0]  %s3540, 32, %s10, [#allocation6]
    $region65: #{tpu_custom_call.1} parent=1 // pred_fallthru
      _
    // Predicated region
    $region66: #{tpu_custom_call.1} parent=1 // pred_check
      _
    $region67: #{tpu_custom_call.1} parent=1 // pred_check_branch
      %3544 = sbr.rel (0) target = $region69
    $region68: #{tpu_custom_call.1} parent=1 // pred_region
      %3545 = dma.done [#allocation6], 32
    $region69: #{tpu_custom_call.1} parent=1 // pred_fallthru
      _
    %3546 = vsyncpa [#allocation5], 1
    %3547 = vsyncpa [#allocation8], 1
    %3548 = vsyncpa [#allocation11], 1
    %3549 = vsyncpa [#allocation6], 1

</llo_original>
